<compile_context>
chip_gen: v6e
topology: v6e:2x2x1
jax: 0.10.0
libtpu: 0.0.40
codegen_flags: <defaults>
</compile_context>

<pallas_src>
import jax
import jax.numpy as jnp
from jax import lax
from jax.experimental import pallas as pl
from jax.experimental.pallas import tpu as pltpu

LANE = 128


def _round_up(x, m):
    return ((x + m - 1) // m) * m


def _pick_tile_h(H, W, Cp, Wp, budget_bytes=8 << 20, target_m=256):
    """Row-strip height: MXU-friendly M = tile_h*W (>=256 if possible), bounded VMEM."""
    # Rough per-row f32 footprint: in/out strips (double buffered) + conv2 operand copies,
    # accumulator and intermediates over Wp channels.
    per_row = W * (Cp * 4 * 4 + Wp * 4 * 6)
    divisors = [d for d in range(1, H + 1) if H % d == 0]
    fitting = [d for d in divisors if d * per_row <= budget_bytes] or [1]
    good = [d for d in fitting if d * W >= target_m]
    multi = [d for d in good if H // d >= 2]   # keep >=2 strips for pipelining / 2 TCs
    if multi:
        return multi[-1]
    if good:
        return good[0]
    return fitting[-1]
    # TODO(synk): ragged last strip (H not divisible by tile_h) not implemented.


def bottleneck_kernel(x_ref, halo_ref, lmask_ref, rmask_ref,
                      w1_ref, w2_ref, w3_ref,
                      s1_ref, b1_ref, s2_ref, b2_ref, s3_ref, b3_ref, o_ref):
    # x_ref    : (1, TH, W, Cp)      strip of the channel-padded input (also the residual)
    # halo_ref : (1, 1, 2, W, Cp)    row above / row below the strip
    # lmask/rmask : ((TH+2)*W, 1)    precomputed column-edge masks for conv2's W padding
    # w1_ref   : (Cp, Wp)   w2_ref: (9, Wp, Wp) [tap = ky*3 + kx]   w3_ref: (Wp, Cp)
    # sN/bN    : (1, ch)    folded BatchNorm scale / shift
    # o_ref    : (1, TH, W, Cp)
    _, TH, W, Cp = x_ref.shape
    Wp = w1_ref.shape[1]
    mm_dtype = w1_ref.dtype
    f32 = jnp.float32
    M = TH * W

    s = pl.program_id(1)
    num_s = pl.num_programs(1)

    x2d = x_ref[...].reshape(M, Cp)               # f32; identity residual
    halo2d = halo_ref[...].reshape(2 * W, Cp)

    # --- conv1 (1x1) + BN1 + ReLU, on the strip and its two halo rows ---
    def conv1_bn_relu(v):
        h = jnp.dot(v.astype(mm_dtype), w1_ref[...], preferred_element_type=f32)
        return jnp.maximum(h * s1_ref[...] + b1_ref[...], 0.0)

    h_mid = conv1_bn_relu(x2d)                    # (M, Wp)
    h_halo = conv1_bn_relu(halo2d)                # (2W, Wp)

    # conv2 zero-pads in H: halo rows outside the image must be exact zeros
    # (conv1+BN+ReLU of a zero row is NOT zero, so mask the outputs).
    h_top = h_halo[:W] * (s > 0).astype(f32)
    h_bot = h_halo[W:] * (s < num_s - 1).astype(f32)

    # Halo-extended conv1 output, row-major flattened: ((TH+2)*W, Wp).
    h_ext = jnp.concatenate([h_top, h_mid, h_bot], axis=0)

    # Column-shifted copies built ONCE (hoisted out of the tap loop). The (M_ext, 1)
    # masks zero the row-boundary wrap positions, reproducing conv2's zero padding in W.
    zrow = jnp.zeros((1, Wp), f32)
    h_left = jnp.concatenate([zrow, h_ext[:-1]], axis=0) * lmask_ref[...]
    h_right = jnp.concatenate([h_ext[1:], zrow], axis=0) * rmask_ref[...]

    hc = h_ext.astype(mm_dtype)                   # cast once, reused by 3 taps each
    hl = h_left.astype(mm_dtype)
    hr = h_right.astype(mm_dtype)

    # --- conv2 (3x3, stride 1, pad 1): 9 MXU matmuls on row-flattened operands ---
    acc = jnp.zeros((M, Wp), f32)
    for ky in range(3):
        base = ky * W
        acc += jnp.dot(hl[base:base + M], w2_ref[ky * 3 + 0], preferred_element_type=f32)
        acc += jnp.dot(hc[base:base + M], w2_ref[ky * 3 + 1], preferred_element_type=f32)
        acc += jnp.dot(hr[base:base + M], w2_ref[ky * 3 + 2], preferred_element_type=f32)

    h2 = jnp.maximum(acc * s2_ref[...] + b2_ref[...], 0.0)

    # --- conv3 (1x1) + BN3, residual add (identity), ReLU ---
    h3 = jnp.dot(h2.astype(mm_dtype), w3_ref[...], preferred_element_type=f32)
    out = jnp.maximum(h3 * s3_ref[...] + b3_ref[...] + x2d, 0.0)
    o_ref[...] = out.reshape(1, TH, W, Cp)


def bottleneck_forward(x_nchw, w1, w2, w3, s1, b1, s2, b2, s3, b3,
                       *, tile_h=None, matmul_dtype=jnp.bfloat16):
    """Bottleneck forward (stride=1, groups=1, dilation=1, downsample=None).

    x_nchw : (N, Cin, H, W) float32
    w1     : (Cin, width)           1x1 conv weight (matmul layout)
    w2     : (3, 3, width, width)   3x3 conv weight, (kh, kw, in, out)
    w3     : (width, Cout)          1x1 conv weight
    s*, b* : folded BatchNorm scale / shift per conv, shape (C,) or (1, C)
    Returns (N, Cout, H, W) float32.
    """
    N, Cin, H, W = x_nchw.shape
    width = w1.shape[1]
    Cout = w3.shape[1]
    assert Cin == Cout, "identity residual (downsample=None) needs inplanes == planes*4"
    assert w2.shape[:2] == (3, 3)

    Cp = _round_up(Cin, LANE)       # padded in/out channels (Cin == Cout)
    Wp = _round_up(width, LANE)     # padded bottleneck width
    f32 = jnp.float32
    mm_dtype = jnp.dtype(matmul_dtype)

    if tile_h is None:
        tile_h = _pick_tile_h(H, W, Cp, Wp)
    assert H % tile_h == 0, "tile_h must divide H"
    S = H // tile_h
    M_ext = (tile_h + 2) * W

    # NCHW -> NHWC, channels zero-padded to a lane multiple.
    # TODO(synk): when chaining blocks, keep the whole net in (ideally bf16) NHWC
    # channel-padded layout so these transpose/pad HBM passes are paid once, not per block.
    x = jnp.transpose(x_nchw, (0, 2, 3, 1)).astype(f32)
    x = jnp.pad(x, ((0, 0), (0, 0), (0, 0), (0, Cp - Cin)))

    # Per-strip halo rows (row above / below each strip; zeros at the image border),
    # built from strided slices of x — no full padded copy of the activation.
    zrow = jnp.zeros((N, 1, W, Cp), f32)
    top = jnp.concatenate([zrow, x[:, tile_h - 1:H - tile_h:tile_h]], axis=1)  # (N,S,W,Cp)
    bot = jnp.concatenate([x[:, tile_h::tile_h], zrow], axis=1)                # (N,S,W,Cp)
    halo = jnp.stack([top, bot], axis=2)                                       # (N,S,2,W,Cp)

    # Precomputed (M_ext, 1) column-edge masks for conv2's zero padding in W.
    col = jnp.arange(M_ext, dtype=jnp.int32) % W
    lmask = (col != 0).astype(f32).reshape(M_ext, 1)
    rmask = (col != W - 1).astype(f32).reshape(M_ext, 1)

    # Pad weights / folded-BN params to lane-aligned sizes; cast matmul operands (bf16
    # by default: MXU runs at its bf16 rate and weight DMA / VMEM are halved).
    def pad2(a, r, c):
        a = jnp.asarray(a, f32)
        return jnp.pad(a, ((0, r - a.shape[0]), (0, c - a.shape[1])))

    w1p = pad2(w1, Cp, Wp).astype(mm_dtype)
    w3p = pad2(w3, Wp, Cp).astype(mm_dtype)
    w2p = jnp.pad(jnp.asarray(w2, f32),
                  ((0, 0), (0, 0), (0, Wp - width), (0, Wp - width)))
    w2p = w2p.reshape(9, Wp, Wp).astype(mm_dtype)

    def padvec(v, c):
        v = jnp.asarray(v, f32).reshape(1, -1)
        return jnp.pad(v, ((0, 0), (0, c - v.shape[1])))

    s1p, b1p = padvec(s1, Wp), padvec(b1, Wp)
    s2p, b2p = padvec(s2, Wp), padvec(b2, Wp)
    s3p, b3p = padvec(s3, Cp), padvec(b3, Cp)

    # Explicit VMEM budget: weights at real ResNet widths are many MiB, so size the
    # scoped limit from the estimated footprint (cap well under v7x's 64 MiB physical).
    weight_bytes = (Cp * Wp + 9 * Wp * Wp + Wp * Cp) * mm_dtype.itemsize
    small_bytes = (4 * Wp + 2 * Cp + 2 * M_ext) * 4
    strip_bytes = tile_h * W * Cp * 4
    halo_bytes = 2 * W * Cp * 4
    temps_bytes = (3 * M_ext * Wp) * (4 + mm_dtype.itemsize) \
        + 3 * tile_h * W * Wp * 4 + tile_h * W * Cp * 4
    est = 2 * (2 * strip_bytes + halo_bytes) + 2 * (weight_bytes + small_bytes) + temps_bytes
    vmem_limit = int(min(48 << 20, max(32 << 20, int(est * 1.5))))

    def run(single_buffer_weights):
        def const_spec(shape):
            nd = len(shape)
            kwargs = {}
            if single_buffer_weights:
                # Constant-index blocks never change across the grid: a single VMEM
                # buffer is enough (halves weight-resident VMEM, important on v7x).
                kwargs["pipeline_mode"] = pl.Buffered(1)
            return pl.BlockSpec(shape, lambda n, s, _nd=nd: (0,) * _nd, **kwargs)

        return pl.pallas_call(
            bottleneck_kernel,
            out_shape=jax.ShapeDtypeStruct((N, H, W, Cp), f32),
            grid=(N, S),
            in_specs=[
                pl.BlockSpec((1, tile_h, W, Cp), lambda n, s: (n, s, 0, 0)),
                pl.BlockSpec((1, 1, 2, W, Cp), lambda n, s: (n, s, 0, 0, 0)),
                const_spec((M_ext, 1)),
                const_spec((M_ext, 1)),
                const_spec((Cp, Wp)),
                const_spec((9, Wp, Wp)),
                const_spec((Wp, Cp)),
                const_spec((1, Wp)), const_spec((1, Wp)),
                const_spec((1, Wp)), const_spec((1, Wp)),
                const_spec((1, Cp)), const_spec((1, Cp)),
            ],
            out_specs=pl.BlockSpec((1, tile_h, W, Cp), lambda n, s: (n, s, 0, 0)),
            compiler_params=pltpu.CompilerParams(
                dimension_semantics=("parallel", "parallel"),
                vmem_limit_bytes=vmem_limit),
        )(x, halo, lmask, rmask, w1p, w2p, w3p, s1p, b1p, s2p, b2p, s3p, b3p)

    try:
        out = run(True)
    except Exception:
        # pipeline_mode / pl.Buffered not supported on this JAX / execution path:
        # fall back to default double-buffered constant blocks.
        out = run(False)

    out = out[..., :Cout]
    return jnp.transpose(out, (0, 3, 1, 2))       # back to NCHW


# ---------------- pure-JAX reference (NCHW, PyTorch-shaped weights) ----------------
def reference_forward(x, w1_oihw, w2_oihw, w3_oihw, bn1, bn2, bn3, eps=1e-5):
    prec = lax.Precision.HIGHEST

    def conv(x, w, pad):
        return lax.conv_general_dilated(
            x, w, window_strides=(1, 1), padding=pad,
            dimension_numbers=('NCHW', 'OIHW', 'NCHW'), precision=prec)

    def bn(x, p):
        g, b, m, v = p
        sc = g / jnp.sqrt(v + eps)
        return x * sc[None, :, None, None] + (b - m * sc)[None, :, None, None]

    out = jnp.maximum(bn(conv(x, w1_oihw, 'VALID'), bn1), 0.0)
    out = jnp.maximum(bn(conv(out, w2_oihw, [(1, 1), (1, 1)]), bn2), 0.0)
    out = bn(conv(out, w3_oihw, 'VALID'), bn3)
    return jnp.maximum(out + x, 0.0)


if __name__ == "__main__":
    key = jax.random.PRNGKey(0)
    N, inplanes, planes, H, W = 2, 16, 4, 16, 16
    width = planes * 1          # base_width=64, groups=1 -> width = planes
    Cout = planes * 4           # expansion=4; Cout == inplanes -> identity residual

    ks = jax.random.split(key, 8)
    w1_oihw = jax.random.normal(ks[0], (width, inplanes, 1, 1), jnp.float32) * 0.1
    w2_oihw = jax.random.normal(ks[1], (width, width, 3, 3), jnp.float32) * 0.1
    w3_oihw = jax.random.normal(ks[2], (Cout, width, 1, 1), jnp.float32) * 0.1

    def bn_params(k, c):
        k1, k2, k3, k4 = jax.random.split(k, 4)
        gamma = 1.0 + 0.1 * jax.random.normal(k1, (c,), jnp.float32)
        beta = 0.1 * jax.random.normal(k2, (c,), jnp.float32)
        mean = 0.1 * jax.random.normal(k3, (c,), jnp.float32)
        var = jnp.abs(jax.random.normal(k4, (c,), jnp.float32)) + 0.5
        return gamma, beta, mean, var

    bn1 = bn_params(ks[3], width)
    bn2 = bn_params(ks[4], width)
    bn3 = bn_params(ks[5], Cout)
    x = jax.random.normal(ks[6], (N, inplanes, H, W), jnp.float32)

    # Fold BN (eval mode) into scale/shift for the kernel.
    def fold(p, eps=1e-5):
        g, b, m, v = p
        sc = g / jnp.sqrt(v + eps)
        return sc, b - m * sc

    s1, b1 = fold(bn1)
    s2, b2 = fold(bn2)
    s3, b3 = fold(bn3)

    # Convert PyTorch OIHW weights to the kernel's matmul layouts.
    w1 = jnp.transpose(w1_oihw[:, :, 0, 0], (1, 0))    # (Cin, width)
    w2 = jnp.transpose(w2_oihw, (2, 3, 1, 0))          # (kh, kw, in, out)
    w3 = jnp.transpose(w3_oihw[:, :, 0, 0], (1, 0))    # (width, Cout)

    ref = reference_forward(x, w1_oihw, w2_oihw, w3_oihw, bn1, bn2, bn3)

    # f32 MXU operands, multi-strip grid (exercises the halo path): strict check.
    out_f32 = bottleneck_forward(x, w1, w2, w3, s1, b1, s2, b2, s3, b3,
                                 tile_h=4, matmul_dtype=jnp.float32)
    out_f32 = jax.block_until_ready(out_f32)
    assert out_f32.shape == (N, Cout, H, W)
    assert jnp.allclose(out_f32, ref, atol=5e-4, rtol=5e-4), \
        float(jnp.max(jnp.abs(out_f32 - ref)))

    # Default path: bf16 MXU operands (f32 accumulation), auto tile_h. Looser tolerance.
    out_bf16 = bottleneck_forward(x, w1, w2, w3, s1, b1, s2, b2, s3, b3)
    out_bf16 = jax.block_until_ready(out_bf16)
    assert out_bf16.shape == (N, Cout, H, W)
    assert jnp.allclose(out_bf16, ref, atol=5e-2, rtol=5e-2), \
        float(jnp.max(jnp.abs(out_bf16 - ref)))

    print("KERNEL_OK")
</pallas_src>

<mosaic_0001>
module attributes {stable_mosaic.version = 11 : i64} {
  func.func @bottleneck_kernel(%arg0: i32, %arg1: i32, %arg2: memref<1x4x16x128xf32, #tpu.memory_space<vmem>>, %arg3: memref<1x1x2x16x128xf32, #tpu.memory_space<vmem>>, %arg4: memref<96x1xf32, #tpu.memory_space<vmem>>, %arg5: memref<96x1xf32, #tpu.memory_space<vmem>>, %arg6: memref<128x128xf32, #tpu.memory_space<vmem>>, %arg7: memref<9x128x128xf32, #tpu.memory_space<vmem>>, %arg8: memref<128x128xf32, #tpu.memory_space<vmem>>, %arg9: memref<1x128xf32, #tpu.memory_space<vmem>>, %arg10: memref<1x128xf32, #tpu.memory_space<vmem>>, %arg11: memref<1x128xf32, #tpu.memory_space<vmem>>, %arg12: memref<1x128xf32, #tpu.memory_space<vmem>>, %arg13: memref<1x128xf32, #tpu.memory_space<vmem>>, %arg14: memref<1x128xf32, #tpu.memory_space<vmem>>, %arg15: memref<1x4x16x128xf32, #tpu.memory_space<vmem>>) attributes {dimension_semantics = [#tpu.dimension_semantics<parallel>, #tpu.dimension_semantics<parallel>], iteration_bounds = array<i64: 2, 4>, scalar_prefetch = 0 : i64, scratch_operands = 0 : i64, tpu.core_type = #tpu.core_type<tc>, window_params = [{transform_indices = @transform_0, window_bounds = array<i64: 1, 4, 16, 128>}, {transform_indices = @transform_1, window_bounds = array<i64: 1, 1, 2, 16, 128>}, {pipeline_mode = #tpu.pipeline_mode<synchronous>, transform_indices = @transform_2, window_bounds = array<i64: 96, 1>}, {pipeline_mode = #tpu.pipeline_mode<synchronous>, transform_indices = @transform_3, window_bounds = array<i64: 96, 1>}, {pipeline_mode = #tpu.pipeline_mode<synchronous>, transform_indices = @transform_4, window_bounds = array<i64: 128, 128>}, {pipeline_mode = #tpu.pipeline_mode<synchronous>, transform_indices = @transform_5, window_bounds = array<i64: 9, 128, 128>}, {pipeline_mode = #tpu.pipeline_mode<synchronous>, transform_indices = @transform_6, window_bounds = array<i64: 128, 128>}, {pipeline_mode = #tpu.pipeline_mode<synchronous>, transform_indices = @transform_7, window_bounds = array<i64: 1, 128>}, {pipeline_mode = #tpu.pipeline_mode<synchronous>, transform_indices = @transform_8, window_bounds = array<i64: 1, 128>}, {pipeline_mode = #tpu.pipeline_mode<synchronous>, transform_indices = @transform_9, window_bounds = array<i64: 1, 128>}, {pipeline_mode = #tpu.pipeline_mode<synchronous>, transform_indices = @transform_10, window_bounds = array<i64: 1, 128>}, {pipeline_mode = #tpu.pipeline_mode<synchronous>, transform_indices = @transform_11, window_bounds = array<i64: 1, 128>}, {pipeline_mode = #tpu.pipeline_mode<synchronous>, transform_indices = @transform_12, window_bounds = array<i64: 1, 128>}, {transform_indices = @transform_13, window_bounds = array<i64: 1, 4, 16, 128>}]} {
    %c0 = arith.constant 0 : index
    %c0_0 = arith.constant 0 : index
    %c0_1 = arith.constant 0 : index
    %c0_2 = arith.constant 0 : index
    %0 = vector.load %arg2[%c0, %c0_0, %c0_1, %c0_2] : memref<1x4x16x128xf32, #tpu.memory_space<vmem>>, vector<1x4x16x128xf32>
    %1 = vector.shape_cast %0 : vector<1x4x16x128xf32> to vector<64x128xf32>
    %c0_3 = arith.constant 0 : index
    %c0_4 = arith.constant 0 : index
    %c0_5 = arith.constant 0 : index
    %c0_6 = arith.constant 0 : index
    %c0_7 = arith.constant 0 : index
    %2 = vector.load %arg3[%c0_3, %c0_4, %c0_5, %c0_6, %c0_7] : memref<1x1x2x16x128xf32, #tpu.memory_space<vmem>>, vector<1x1x2x16x128xf32>
    %3 = vector.shape_cast %2 : vector<1x1x2x16x128xf32> to vector<32x128xf32>
    %c0_8 = arith.constant 0 : index
    %c0_9 = arith.constant 0 : index
    %4 = vector.load %arg6[%c0_8, %c0_9] : memref<128x128xf32, #tpu.memory_space<vmem>>, vector<128x128xf32>
    %cst = arith.constant dense<0.000000e+00> : vector<64x128xf32>
    %5 = tpu.matmul %1, %4, %cst {dimension_numbers = #tpu.dot_dimension_numbers<[1], [0], [0], [1], [0, 0, 1, 1], [], []>} : vector<64x128xf32>, vector<128x128xf32>, vector<64x128xf32> -> vector<64x128xf32>
    %c0_10 = arith.constant 0 : index
    %c0_11 = arith.constant 0 : index
    %6 = vector.load %arg9[%c0_10, %c0_11] : memref<1x128xf32, #tpu.memory_space<vmem>>, vector<1x128xf32>
    %7 = vector.broadcast %6 : vector<1x128xf32> to vector<64x128xf32>
    %8 = arith.mulf %5, %7 : vector<64x128xf32>
    %c0_12 = arith.constant 0 : index
    %c0_13 = arith.constant 0 : index
    %9 = vector.load %arg10[%c0_12, %c0_13] : memref<1x128xf32, #tpu.memory_space<vmem>>, vector<1x128xf32>
    %10 = vector.broadcast %9 : vector<1x128xf32> to vector<64x128xf32>
    %11 = arith.addf %8, %10 : vector<64x128xf32>
    %cst_14 = arith.constant 0.000000e+00 : f32
    %12 = vector.broadcast %cst_14 : f32 to vector<64x128xf32>
    %13 = arith.maximumf %11, %12 : vector<64x128xf32>
    %c0_15 = arith.constant 0 : index
    %c0_16 = arith.constant 0 : index
    %14 = vector.load %arg6[%c0_15, %c0_16] : memref<128x128xf32, #tpu.memory_space<vmem>>, vector<128x128xf32>
    %cst_17 = arith.constant dense<0.000000e+00> : vector<32x128xf32>
    %15 = tpu.matmul %3, %14, %cst_17 {dimension_numbers = #tpu.dot_dimension_numbers<[1], [0], [0], [1], [0, 0, 1, 1], [], []>} : vector<32x128xf32>, vector<128x128xf32>, vector<32x128xf32> -> vector<32x128xf32>
    %c0_18 = arith.constant 0 : index
    %c0_19 = arith.constant 0 : index
    %16 = vector.load %arg9[%c0_18, %c0_19] : memref<1x128xf32, #tpu.memory_space<vmem>>, vector<1x128xf32>
    %17 = vector.broadcast %16 : vector<1x128xf32> to vector<32x128xf32>
    %18 = arith.mulf %15, %17 : vector<32x128xf32>
    %c0_20 = arith.constant 0 : index
    %c0_21 = arith.constant 0 : index
    %19 = vector.load %arg10[%c0_20, %c0_21] : memref<1x128xf32, #tpu.memory_space<vmem>>, vector<1x128xf32>
    %20 = vector.broadcast %19 : vector<1x128xf32> to vector<32x128xf32>
    %21 = arith.addf %18, %20 : vector<32x128xf32>
    %cst_22 = arith.constant 0.000000e+00 : f32
    %22 = vector.broadcast %cst_22 : f32 to vector<32x128xf32>
    %23 = arith.maximumf %21, %22 : vector<32x128xf32>
    %24 = vector.extract_strided_slice %23 {offsets = [0, 0], sizes = [16, 128], strides = [1, 1]} : vector<32x128xf32> to vector<16x128xf32>
    %c0_i32 = arith.constant 0 : i32
    %25 = arith.cmpi sgt, %arg1, %c0_i32 : i32
    %26 = arith.extui %25 : i1 to i32
    %27 = arith.sitofp %26 : i32 to f32
    %28 = vector.broadcast %27 : f32 to vector<16x128xf32>
    %29 = arith.mulf %24, %28 : vector<16x128xf32>
    %30 = vector.extract_strided_slice %23 {offsets = [16, 0], sizes = [16, 128], strides = [1, 1]} : vector<32x128xf32> to vector<16x128xf32>
    %c3_i32 = arith.constant 3 : i32
    %31 = arith.cmpi slt, %arg1, %c3_i32 : i32
    %32 = arith.extui %31 : i1 to i32
    %33 = arith.sitofp %32 : i32 to f32
    %34 = vector.broadcast %33 : f32 to vector<16x128xf32>
    %35 = arith.mulf %30, %34 : vector<16x128xf32>
    %36 = tpu.concatenate %29, %13, %35 in 0 : vector<16x128xf32>, vector<64x128xf32>, vector<16x128xf32> -> vector<96x128xf32>
    %cst_23 = arith.constant 0.000000e+00 : f32
    %37 = vector.broadcast %cst_23 : f32 to vector<1x128xf32>
    %38 = vector.extract_strided_slice %36 {offsets = [0, 0], sizes = [95, 128], strides = [1, 1]} : vector<96x128xf32> to vector<95x128xf32>
    %39 = tpu.concatenate %37, %38 in 0 : vector<1x128xf32>, vector<95x128xf32> -> vector<96x128xf32>
    %c0_24 = arith.constant 0 : index
    %c0_25 = arith.constant 0 : index
    %40 = vector.load %arg4[%c0_24, %c0_25] : memref<96x1xf32, #tpu.memory_space<vmem>>, vector<96x1xf32>
    %41 = vector.broadcast %40 : vector<96x1xf32> to vector<96x128xf32>
    %42 = arith.mulf %39, %41 : vector<96x128xf32>
    %43 = vector.extract_strided_slice %36 {offsets = [1, 0], sizes = [95, 128], strides = [1, 1]} : vector<96x128xf32> to vector<95x128xf32>
    %44 = tpu.concatenate %43, %37 in 0 : vector<95x128xf32>, vector<1x128xf32> -> vector<96x128xf32>
    %c0_26 = arith.constant 0 : index
    %c0_27 = arith.constant 0 : index
    %45 = vector.load %arg5[%c0_26, %c0_27] : memref<96x1xf32, #tpu.memory_space<vmem>>, vector<96x1xf32>
    %46 = vector.broadcast %45 : vector<96x1xf32> to vector<96x128xf32>
    %47 = arith.mulf %44, %46 : vector<96x128xf32>
    %cst_28 = arith.constant 0.000000e+00 : f32
    %48 = vector.broadcast %cst_28 : f32 to vector<64x128xf32>
    %49 = vector.extract_strided_slice %42 {offsets = [0, 0], sizes = [64, 128], strides = [1, 1]} : vector<96x128xf32> to vector<64x128xf32>
    %c0_29 = arith.constant 0 : index
    %c0_30 = arith.constant 0 : index
    %c0_31 = arith.constant 0 : index
    %50 = vector.load %arg7[%c0_29, %c0_30, %c0_31] : memref<9x128x128xf32, #tpu.memory_space<vmem>>, vector<1x128x128xf32>
    %51 = vector.shape_cast %50 : vector<1x128x128xf32> to vector<128x128xf32>
    %cst_32 = arith.constant dense<0.000000e+00> : vector<64x128xf32>
    %52 = tpu.matmul %49, %51, %cst_32 {dimension_numbers = #tpu.dot_dimension_numbers<[1], [0], [0], [1], [0, 0, 1, 1], [], []>} : vector<64x128xf32>, vector<128x128xf32>, vector<64x128xf32> -> vector<64x128xf32>
    %53 = arith.addf %48, %52 : vector<64x128xf32>
    %54 = vector.extract_strided_slice %36 {offsets = [0, 0], sizes = [64, 128], strides = [1, 1]} : vector<96x128xf32> to vector<64x128xf32>
    %c1 = arith.constant 1 : index
    %c0_33 = arith.constant 0 : index
    %c0_34 = arith.constant 0 : index
    %55 = vector.load %arg7[%c1, %c0_33, %c0_34] : memref<9x128x128xf32, #tpu.memory_space<vmem>>, vector<1x128x128xf32>
    %56 = vector.shape_cast %55 : vector<1x128x128xf32> to vector<128x128xf32>
    %cst_35 = arith.constant dense<0.000000e+00> : vector<64x128xf32>
    %57 = tpu.matmul %54, %56, %cst_35 {dimension_numbers = #tpu.dot_dimension_numbers<[1], [0], [0], [1], [0, 0, 1, 1], [], []>} : vector<64x128xf32>, vector<128x128xf32>, vector<64x128xf32> -> vector<64x128xf32>
    %58 = arith.addf %53, %57 : vector<64x128xf32>
    %59 = vector.extract_strided_slice %47 {offsets = [0, 0], sizes = [64, 128], strides = [1, 1]} : vector<96x128xf32> to vector<64x128xf32>
    %c2 = arith.constant 2 : index
    %c0_36 = arith.constant 0 : index
    %c0_37 = arith.constant 0 : index
    %60 = vector.load %arg7[%c2, %c0_36, %c0_37] : memref<9x128x128xf32, #tpu.memory_space<vmem>>, vector<1x128x128xf32>
    %61 = vector.shape_cast %60 : vector<1x128x128xf32> to vector<128x128xf32>
    %cst_38 = arith.constant dense<0.000000e+00> : vector<64x128xf32>
    %62 = tpu.matmul %59, %61, %cst_38 {dimension_numbers = #tpu.dot_dimension_numbers<[1], [0], [0], [1], [0, 0, 1, 1], [], []>} : vector<64x128xf32>, vector<128x128xf32>, vector<64x128xf32> -> vector<64x128xf32>
    %63 = arith.addf %58, %62 : vector<64x128xf32>
    %64 = vector.extract_strided_slice %42 {offsets = [16, 0], sizes = [64, 128], strides = [1, 1]} : vector<96x128xf32> to vector<64x128xf32>
    %c3 = arith.constant 3 : index
    %c0_39 = arith.constant 0 : index
    %c0_40 = arith.constant 0 : index
    %65 = vector.load %arg7[%c3, %c0_39, %c0_40] : memref<9x128x128xf32, #tpu.memory_space<vmem>>, vector<1x128x128xf32>
    %66 = vector.shape_cast %65 : vector<1x128x128xf32> to vector<128x128xf32>
    %cst_41 = arith.constant dense<0.000000e+00> : vector<64x128xf32>
    %67 = tpu.matmul %64, %66, %cst_41 {dimension_numbers = #tpu.dot_dimension_numbers<[1], [0], [0], [1], [0, 0, 1, 1], [], []>} : vector<64x128xf32>, vector<128x128xf32>, vector<64x128xf32> -> vector<64x128xf32>
    %68 = arith.addf %63, %67 : vector<64x128xf32>
    %69 = vector.extract_strided_slice %36 {offsets = [16, 0], sizes = [64, 128], strides = [1, 1]} : vector<96x128xf32> to vector<64x128xf32>
    %c4 = arith.constant 4 : index
    %c0_42 = arith.constant 0 : index
    %c0_43 = arith.constant 0 : index
    %70 = vector.load %arg7[%c4, %c0_42, %c0_43] : memref<9x128x128xf32, #tpu.memory_space<vmem>>, vector<1x128x128xf32>
    %71 = vector.shape_cast %70 : vector<1x128x128xf32> to vector<128x128xf32>
    %cst_44 = arith.constant dense<0.000000e+00> : vector<64x128xf32>
    %72 = tpu.matmul %69, %71, %cst_44 {dimension_numbers = #tpu.dot_dimension_numbers<[1], [0], [0], [1], [0, 0, 1, 1], [], []>} : vector<64x128xf32>, vector<128x128xf32>, vector<64x128xf32> -> vector<64x128xf32>
    %73 = arith.addf %68, %72 : vector<64x128xf32>
    %74 = vector.extract_strided_slice %47 {offsets = [16, 0], sizes = [64, 128], strides = [1, 1]} : vector<96x128xf32> to vector<64x128xf32>
    %c5 = arith.constant 5 : index
    %c0_45 = arith.constant 0 : index
    %c0_46 = arith.constant 0 : index
    %75 = vector.load %arg7[%c5, %c0_45, %c0_46] : memref<9x128x128xf32, #tpu.memory_space<vmem>>, vector<1x128x128xf32>
    %76 = vector.shape_cast %75 : vector<1x128x128xf32> to vector<128x128xf32>
    %cst_47 = arith.constant dense<0.000000e+00> : vector<64x128xf32>
    %77 = tpu.matmul %74, %76, %cst_47 {dimension_numbers = #tpu.dot_dimension_numbers<[1], [0], [0], [1], [0, 0, 1, 1], [], []>} : vector<64x128xf32>, vector<128x128xf32>, vector<64x128xf32> -> vector<64x128xf32>
    %78 = arith.addf %73, %77 : vector<64x128xf32>
    %79 = vector.extract_strided_slice %42 {offsets = [32, 0], sizes = [64, 128], strides = [1, 1]} : vector<96x128xf32> to vector<64x128xf32>
    %c6 = arith.constant 6 : index
    %c0_48 = arith.constant 0 : index
    %c0_49 = arith.constant 0 : index
    %80 = vector.load %arg7[%c6, %c0_48, %c0_49] : memref<9x128x128xf32, #tpu.memory_space<vmem>>, vector<1x128x128xf32>
    %81 = vector.shape_cast %80 : vector<1x128x128xf32> to vector<128x128xf32>
    %cst_50 = arith.constant dense<0.000000e+00> : vector<64x128xf32>
    %82 = tpu.matmul %79, %81, %cst_50 {dimension_numbers = #tpu.dot_dimension_numbers<[1], [0], [0], [1], [0, 0, 1, 1], [], []>} : vector<64x128xf32>, vector<128x128xf32>, vector<64x128xf32> -> vector<64x128xf32>
    %83 = arith.addf %78, %82 : vector<64x128xf32>
    %84 = vector.extract_strided_slice %36 {offsets = [32, 0], sizes = [64, 128], strides = [1, 1]} : vector<96x128xf32> to vector<64x128xf32>
    %c7 = arith.constant 7 : index
    %c0_51 = arith.constant 0 : index
    %c0_52 = arith.constant 0 : index
    %85 = vector.load %arg7[%c7, %c0_51, %c0_52] : memref<9x128x128xf32, #tpu.memory_space<vmem>>, vector<1x128x128xf32>
    %86 = vector.shape_cast %85 : vector<1x128x128xf32> to vector<128x128xf32>
    %cst_53 = arith.constant dense<0.000000e+00> : vector<64x128xf32>
    %87 = tpu.matmul %84, %86, %cst_53 {dimension_numbers = #tpu.dot_dimension_numbers<[1], [0], [0], [1], [0, 0, 1, 1], [], []>} : vector<64x128xf32>, vector<128x128xf32>, vector<64x128xf32> -> vector<64x128xf32>
    %88 = arith.addf %83, %87 : vector<64x128xf32>
    %89 = vector.extract_strided_slice %47 {offsets = [32, 0], sizes = [64, 128], strides = [1, 1]} : vector<96x128xf32> to vector<64x128xf32>
    %c8 = arith.constant 8 : index
    %c0_54 = arith.constant 0 : index
    %c0_55 = arith.constant 0 : index
    %90 = vector.load %arg7[%c8, %c0_54, %c0_55] : memref<9x128x128xf32, #tpu.memory_space<vmem>>, vector<1x128x128xf32>
    %91 = vector.shape_cast %90 : vector<1x128x128xf32> to vector<128x128xf32>
    %cst_56 = arith.constant dense<0.000000e+00> : vector<64x128xf32>
    %92 = tpu.matmul %89, %91, %cst_56 {dimension_numbers = #tpu.dot_dimension_numbers<[1], [0], [0], [1], [0, 0, 1, 1], [], []>} : vector<64x128xf32>, vector<128x128xf32>, vector<64x128xf32> -> vector<64x128xf32>
    %93 = arith.addf %88, %92 : vector<64x128xf32>
    %c0_57 = arith.constant 0 : index
    %c0_58 = arith.constant 0 : index
    %94 = vector.load %arg11[%c0_57, %c0_58] : memref<1x128xf32, #tpu.memory_space<vmem>>, vector<1x128xf32>
    %95 = vector.broadcast %94 : vector<1x128xf32> to vector<64x128xf32>
    %96 = arith.mulf %93, %95 : vector<64x128xf32>
    %c0_59 = arith.constant 0 : index
    %c0_60 = arith.constant 0 : index
    %97 = vector.load %arg12[%c0_59, %c0_60] : memref<1x128xf32, #tpu.memory_space<vmem>>, vector<1x128xf32>
    %98 = vector.broadcast %97 : vector<1x128xf32> to vector<64x128xf32>
    %99 = arith.addf %96, %98 : vector<64x128xf32>
    %cst_61 = arith.constant 0.000000e+00 : f32
    %100 = vector.broadcast %cst_61 : f32 to vector<64x128xf32>
    %101 = arith.maximumf %99, %100 : vector<64x128xf32>
    %c0_62 = arith.constant 0 : index
    %c0_63 = arith.constant 0 : index
    %102 = vector.load %arg8[%c0_62, %c0_63] : memref<128x128xf32, #tpu.memory_space<vmem>>, vector<128x128xf32>
    %cst_64 = arith.constant dense<0.000000e+00> : vector<64x128xf32>
    %103 = tpu.matmul %101, %102, %cst_64 {dimension_numbers = #tpu.dot_dimension_numbers<[1], [0], [0], [1], [0, 0, 1, 1], [], []>} : vector<64x128xf32>, vector<128x128xf32>, vector<64x128xf32> -> vector<64x128xf32>
    %c0_65 = arith.constant 0 : index
    %c0_66 = arith.constant 0 : index
    %104 = vector.load %arg13[%c0_65, %c0_66] : memref<1x128xf32, #tpu.memory_space<vmem>>, vector<1x128xf32>
    %105 = vector.broadcast %104 : vector<1x128xf32> to vector<64x128xf32>
    %106 = arith.mulf %103, %105 : vector<64x128xf32>
    %c0_67 = arith.constant 0 : index
    %c0_68 = arith.constant 0 : index
    %107 = vector.load %arg14[%c0_67, %c0_68] : memref<1x128xf32, #tpu.memory_space<vmem>>, vector<1x128xf32>
    %108 = vector.broadcast %107 : vector<1x128xf32> to vector<64x128xf32>
    %109 = arith.addf %106, %108 : vector<64x128xf32>
    %110 = arith.addf %109, %1 : vector<64x128xf32>
    %cst_69 = arith.constant 0.000000e+00 : f32
    %111 = vector.broadcast %cst_69 : f32 to vector<64x128xf32>
    %112 = arith.maximumf %110, %111 : vector<64x128xf32>
    %113 = vector.shape_cast %112 : vector<64x128xf32> to vector<1x4x16x128xf32>
    %c0_70 = arith.constant 0 : index
    %c0_71 = arith.constant 0 : index
    %c0_72 = arith.constant 0 : index
    %c0_73 = arith.constant 0 : index
    %114 = vector.load %arg15[%c0_70, %c0_71, %c0_72, %c0_73] : memref<1x4x16x128xf32, #tpu.memory_space<vmem>>, vector<1x4x16x128xf32>
    tpu.vector_store %arg15[%c0_70, %c0_71, %c0_72, %c0_73], %113 {strides = array<i32>} : memref<1x4x16x128xf32, #tpu.memory_space<vmem>>, vector<1x4x16x128xf32>,
    return
  }
  func.func @transform_0(%arg0: i32, %arg1: i32) -> (i32, i32, i32, i32) {
    %c0_i32 = arith.constant 0 : i32
    %c0_i32_0 = arith.constant 0 : i32
    %c0_i32_1 = arith.constant 0 : i32
    return %arg0, %arg1, %c0_i32, %c0_i32_0 : i32, i32, i32, i32
  }
  func.func @transform_1(%arg0: i32, %arg1: i32) -> (i32, i32, i32, i32, i32) {
    %c0_i32 = arith.constant 0 : i32
    %c0_i32_0 = arith.constant 0 : i32
    %c0_i32_1 = arith.constant 0 : i32
    %c0_i32_2 = arith.constant 0 : i32
    return %arg0, %arg1, %c0_i32, %c0_i32_0, %c0_i32_1 : i32, i32, i32, i32, i32
  }
  func.func @transform_2(%arg0: i32, %arg1: i32) -> (i32, i32) {
    %c0_i32 = arith.constant 0 : i32
    %c0_i32_0 = arith.constant 0 : i32
    %c0_i32_1 = arith.constant 0 : i32
    return %c0_i32, %c0_i32_0 : i32, i32
  }
  func.func @transform_3(%arg0: i32, %arg1: i32) -> (i32, i32) {
    %c0_i32 = arith.constant 0 : i32
    %c0_i32_0 = arith.constant 0 : i32
    %c0_i32_1 = arith.constant 0 : i32
    return %c0_i32, %c0_i32_0 : i32, i32
  }
  func.func @transform_4(%arg0: i32, %arg1: i32) -> (i32, i32) {
    %c0_i32 = arith.constant 0 : i32
    %c0_i32_0 = arith.constant 0 : i32
    %c0_i32_1 = arith.constant 0 : i32
    return %c0_i32, %c0_i32_0 : i32, i32
  }
  func.func @transform_5(%arg0: i32, %arg1: i32) -> (i32, i32, i32) {
    %c0_i32 = arith.constant 0 : i32
    %c0_i32_0 = arith.constant 0 : i32
    %c0_i32_1 = arith.constant 0 : i32
    %c0_i32_2 = arith.constant 0 : i32
    return %c0_i32, %c0_i32_0, %c0_i32_1 : i32, i32, i32
  }
  func.func @transform_6(%arg0: i32, %arg1: i32) -> (i32, i32) {
    %c0_i32 = arith.constant 0 : i32
    %c0_i32_0 = arith.constant 0 : i32
    %c0_i32_1 = arith.constant 0 : i32
    return %c0_i32, %c0_i32_0 : i32, i32
  }
  func.func @transform_7(%arg0: i32, %arg1: i32) -> (i32, i32) {
    %c0_i32 = arith.constant 0 : i32
    %c0_i32_0 = arith.constant 0 : i32
    %c0_i32_1 = arith.constant 0 : i32
    return %c0_i32, %c0_i32_0 : i32, i32
  }
  func.func @transform_8(%arg0: i32, %arg1: i32) -> (i32, i32) {
    %c0_i32 = arith.constant 0 : i32
    %c0_i32_0 = arith.constant 0 : i32
    %c0_i32_1 = arith.constant 0 : i32
    return %c0_i32, %c0_i32_0 : i32, i32
  }
  func.func @transform_9(%arg0: i32, %arg1: i32) -> (i32, i32) {
    %c0_i32 = arith.constant 0 : i32
    %c0_i32_0 = arith.constant 0 : i32
    %c0_i32_1 = arith.constant 0 : i32
    return %c0_i32, %c0_i32_0 : i32, i32
  }
  func.func @transform_10(%arg0: i32, %arg1: i32) -> (i32, i32) {
    %c0_i32 = arith.constant 0 : i32
    %c0_i32_0 = arith.constant 0 : i32
    %c0_i32_1 = arith.constant 0 : i32
    return %c0_i32, %c0_i32_0 : i32, i32
  }
  func.func @transform_11(%arg0: i32, %arg1: i32) -> (i32, i32) {
    %c0_i32 = arith.constant 0 : i32
    %c0_i32_0 = arith.constant 0 : i32
    %c0_i32_1 = arith.constant 0 : i32
    return %c0_i32, %c0_i32_0 : i32, i32
  }
  func.func @transform_12(%arg0: i32, %arg1: i32) -> (i32, i32) {
    %c0_i32 = arith.constant 0 : i32
    %c0_i32_0 = arith.constant 0 : i32
    %c0_i32_1 = arith.constant 0 : i32
    return %c0_i32, %c0_i32_0 : i32, i32
  }
  func.func @transform_13(%arg0: i32, %arg1: i32) -> (i32, i32, i32, i32) {
    %c0_i32 = arith.constant 0 : i32
    %c0_i32_0 = arith.constant 0 : i32
    %c0_i32_1 = arith.constant 0 : i32
    return %arg0, %arg1, %c0_i32, %c0_i32_0 : i32, i32, i32, i32
  }
}

module attributes {stable_mosaic.version = 11 : i64} {
  func.func @bottleneck_kernel(%arg0: i32, %arg1: i32, %arg2: memref<1x4x16x128xf32, #tpu.memory_space<vmem>>, %arg3: memref<1x1x2x16x128xf32, #tpu.memory_space<vmem>>, %arg4: memref<96x1xf32, #tpu.memory_space<vmem>>, %arg5: memref<96x1xf32, #tpu.memory_space<vmem>>, %arg6: memref<128x128xf32, #tpu.memory_space<vmem>>, %arg7: memref<9x128x128xf32, #tpu.memory_space<vmem>>, %arg8: memref<128x128xf32, #tpu.memory_space<vmem>>, %arg9: memref<1x128xf32, #tpu.memory_space<vmem>>, %arg10: memref<1x128xf32, #tpu.memory_space<vmem>>, %arg11: memref<1x128xf32, #tpu.memory_space<vmem>>, %arg12: memref<1x128xf32, #tpu.memory_space<vmem>>, %arg13: memref<1x128xf32, #tpu.memory_space<vmem>>, %arg14: memref<1x128xf32, #tpu.memory_space<vmem>>, %arg15: memref<1x4x16x128xf32, #tpu.memory_space<vmem>>) attributes {dimension_semantics = [#tpu.dimension_semantics<parallel>, #tpu.dimension_semantics<parallel>], iteration_bounds = array<i64: 2, 4>, scalar_prefetch = 0 : i64, scratch_operands = 0 : i64, tpu.core_type = #tpu.core_type<tc>, window_params = [{transform_indices = @transform_0, window_bounds = array<i64: 1, 4, 16, 128>}, {transform_indices = @transform_1, window_bounds = array<i64: 1, 1, 2, 16, 128>}, {pipeline_mode = #tpu.pipeline_mode<synchronous>, transform_indices = @transform_2, window_bounds = array<i64: 96, 1>}, {pipeline_mode = #tpu.pipeline_mode<synchronous>, transform_indices = @transform_3, window_bounds = array<i64: 96, 1>}, {pipeline_mode = #tpu.pipeline_mode<synchronous>, transform_indices = @transform_4, window_bounds = array<i64: 128, 128>}, {pipeline_mode = #tpu.pipeline_mode<synchronous>, transform_indices = @transform_5, window_bounds = array<i64: 9, 128, 128>}, {pipeline_mode = #tpu.pipeline_mode<synchronous>, transform_indices = @transform_6, window_bounds = array<i64: 128, 128>}, {pipeline_mode = #tpu.pipeline_mode<synchronous>, transform_indices = @transform_7, window_bounds = array<i64: 1, 128>}, {pipeline_mode = #tpu.pipeline_mode<synchronous>, transform_indices = @transform_8, window_bounds = array<i64: 1, 128>}, {pipeline_mode = #tpu.pipeline_mode<synchronous>, transform_indices = @transform_9, window_bounds = array<i64: 1, 128>}, {pipeline_mode = #tpu.pipeline_mode<synchronous>, transform_indices = @transform_10, window_bounds = array<i64: 1, 128>}, {pipeline_mode = #tpu.pipeline_mode<synchronous>, transform_indices = @transform_11, window_bounds = array<i64: 1, 128>}, {pipeline_mode = #tpu.pipeline_mode<synchronous>, transform_indices = @transform_12, window_bounds = array<i64: 1, 128>}, {transform_indices = @transform_13, window_bounds = array<i64: 1, 4, 16, 128>}]} {
    %c0 = arith.constant 0 : index
    %c0_0 = arith.constant 0 : index
    %c0_1 = arith.constant 0 : index
    %c0_2 = arith.constant 0 : index
    %0 = vector.load %arg2[%c0, %c0_0, %c0_1, %c0_2] : memref<1x4x16x128xf32, #tpu.memory_space<vmem>>, vector<1x4x16x128xf32>
    %1 = vector.shape_cast %0 : vector<1x4x16x128xf32> to vector<64x128xf32>
    %c0_3 = arith.constant 0 : index
    %c0_4 = arith.constant 0 : index
    %c0_5 = arith.constant 0 : index
    %c0_6 = arith.constant 0 : index
    %c0_7 = arith.constant 0 : index
    %2 = vector.load %arg3[%c0_3, %c0_4, %c0_5, %c0_6, %c0_7] : memref<1x1x2x16x128xf32, #tpu.memory_space<vmem>>, vector<1x1x2x16x128xf32>
    %3 = vector.shape_cast %2 : vector<1x1x2x16x128xf32> to vector<32x128xf32>
    %c0_8 = arith.constant 0 : index
    %c0_9 = arith.constant 0 : index
    %4 = vector.load %arg6[%c0_8, %c0_9] : memref<128x128xf32, #tpu.memory_space<vmem>>, vector<128x128xf32>
    %cst = arith.constant dense<0.000000e+00> : vector<64x128xf32>
    %5 = tpu.matmul %1, %4, %cst {dimension_numbers = #tpu.dot_dimension_numbers<[1], [0], [0], [1], [0, 0, 1, 1], [], []>} : vector<64x128xf32>, vector<128x128xf32>, vector<64x128xf32> -> vector<64x128xf32>
    %c0_10 = arith.constant 0 : index
    %c0_11 = arith.constant 0 : index
    %6 = vector.load %arg9[%c0_10, %c0_11] : memref<1x128xf32, #tpu.memory_space<vmem>>, vector<1x128xf32>
    %7 = vector.broadcast %6 : vector<1x128xf32> to vector<64x128xf32>
    %8 = arith.mulf %5, %7 : vector<64x128xf32>
    %c0_12 = arith.constant 0 : index
    %c0_13 = arith.constant 0 : index
    %9 = vector.load %arg10[%c0_12, %c0_13] : memref<1x128xf32, #tpu.memory_space<vmem>>, vector<1x128xf32>
    %10 = vector.broadcast %9 : vector<1x128xf32> to vector<64x128xf32>
    %11 = arith.addf %8, %10 : vector<64x128xf32>
    %cst_14 = arith.constant 0.000000e+00 : f32
    %12 = vector.broadcast %cst_14 : f32 to vector<64x128xf32>
    %13 = arith.maximumf %11, %12 : vector<64x128xf32>
    %c0_15 = arith.constant 0 : index
    %c0_16 = arith.constant 0 : index
    %14 = vector.load %arg6[%c0_15, %c0_16] : memref<128x128xf32, #tpu.memory_space<vmem>>, vector<128x128xf32>
    %cst_17 = arith.constant dense<0.000000e+00> : vector<32x128xf32>
    %15 = tpu.matmul %3, %14, %cst_17 {dimension_numbers = #tpu.dot_dimension_numbers<[1], [0], [0], [1], [0, 0, 1, 1], [], []>} : vector<32x128xf32>, vector<128x128xf32>, vector<32x128xf32> -> vector<32x128xf32>
    %c0_18 = arith.constant 0 : index
    %c0_19 = arith.constant 0 : index
    %16 = vector.load %arg9[%c0_18, %c0_19] : memref<1x128xf32, #tpu.memory_space<vmem>>, vector<1x128xf32>
    %17 = vector.broadcast %16 : vector<1x128xf32> to vector<32x128xf32>
    %18 = arith.mulf %15, %17 : vector<32x128xf32>
    %c0_20 = arith.constant 0 : index
    %c0_21 = arith.constant 0 : index
    %19 = vector.load %arg10[%c0_20, %c0_21] : memref<1x128xf32, #tpu.memory_space<vmem>>, vector<1x128xf32>
    %20 = vector.broadcast %19 : vector<1x128xf32> to vector<32x128xf32>
    %21 = arith.addf %18, %20 : vector<32x128xf32>
    %cst_22 = arith.constant 0.000000e+00 : f32
    %22 = vector.broadcast %cst_22 : f32 to vector<32x128xf32>
    %23 = arith.maximumf %21, %22 : vector<32x128xf32>
    %24 = vector.extract_strided_slice %23 {offsets = [0, 0], sizes = [16, 128], strides = [1, 1]} : vector<32x128xf32> to vector<16x128xf32>
    %c0_i32 = arith.constant 0 : i32
    %25 = arith.cmpi sgt, %arg1, %c0_i32 : i32
    %26 = arith.extui %25 : i1 to i32
    %27 = arith.sitofp %26 : i32 to f32
    %28 = vector.broadcast %27 : f32 to vector<16x128xf32>
    %29 = arith.mulf %24, %28 : vector<16x128xf32>
    %30 = vector.extract_strided_slice %23 {offsets = [16, 0], sizes = [16, 128], strides = [1, 1]} : vector<32x128xf32> to vector<16x128xf32>
    %c3_i32 = arith.constant 3 : i32
    %31 = arith.cmpi slt, %arg1, %c3_i32 : i32
    %32 = arith.extui %31 : i1 to i32
    %33 = arith.sitofp %32 : i32 to f32
    %34 = vector.broadcast %33 : f32 to vector<16x128xf32>
    %35 = arith.mulf %30, %34 : vector<16x128xf32>
    %36 = tpu.concatenate %29, %13, %35 in 0 : vector<16x128xf32>, vector<64x128xf32>, vector<16x128xf32> -> vector<96x128xf32>
    %cst_23 = arith.constant 0.000000e+00 : f32
    %37 = vector.broadcast %cst_23 : f32 to vector<1x128xf32>
    %38 = vector.extract_strided_slice %36 {offsets = [0, 0], sizes = [95, 128], strides = [1, 1]} : vector<96x128xf32> to vector<95x128xf32>
    %39 = tpu.concatenate %37, %38 in 0 : vector<1x128xf32>, vector<95x128xf32> -> vector<96x128xf32>
    %c0_24 = arith.constant 0 : index
    %c0_25 = arith.constant 0 : index
    %40 = vector.load %arg4[%c0_24, %c0_25] : memref<96x1xf32, #tpu.memory_space<vmem>>, vector<96x1xf32>
    %41 = vector.broadcast %40 : vector<96x1xf32> to vector<96x128xf32>
    %42 = arith.mulf %39, %41 : vector<96x128xf32>
    %43 = vector.extract_strided_slice %36 {offsets = [1, 0], sizes = [95, 128], strides = [1, 1]} : vector<96x128xf32> to vector<95x128xf32>
    %44 = tpu.concatenate %43, %37 in 0 : vector<95x128xf32>, vector<1x128xf32> -> vector<96x128xf32>
    %c0_26 = arith.constant 0 : index
    %c0_27 = arith.constant 0 : index
    %45 = vector.load %arg5[%c0_26, %c0_27] : memref<96x1xf32, #tpu.memory_space<vmem>>, vector<96x1xf32>
    %46 = vector.broadcast %45 : vector<96x1xf32> to vector<96x128xf32>
    %47 = arith.mulf %44, %46 : vector<96x128xf32>
    %cst_28 = arith.constant 0.000000e+00 : f32
    %48 = vector.broadcast %cst_28 : f32 to vector<64x128xf32>
    %49 = vector.extract_strided_slice %42 {offsets = [0, 0], sizes = [64, 128], strides = [1, 1]} : vector<96x128xf32> to vector<64x128xf32>
    %c0_29 = arith.constant 0 : index
    %c0_30 = arith.constant 0 : index
    %c0_31 = arith.constant 0 : index
    %50 = vector.load %arg7[%c0_29, %c0_30, %c0_31] : memref<9x128x128xf32, #tpu.memory_space<vmem>>, vector<1x128x128xf32>
    %51 = vector.shape_cast %50 : vector<1x128x128xf32> to vector<128x128xf32>
    %cst_32 = arith.constant dense<0.000000e+00> : vector<64x128xf32>
    %52 = tpu.matmul %49, %51, %cst_32 {dimension_numbers = #tpu.dot_dimension_numbers<[1], [0], [0], [1], [0, 0, 1, 1], [], []>} : vector<64x128xf32>, vector<128x128xf32>, vector<64x128xf32> -> vector<64x128xf32>
    %53 = arith.addf %48, %52 : vector<64x128xf32>
    %54 = vector.extract_strided_slice %36 {offsets = [0, 0], sizes = [64, 128], strides = [1, 1]} : vector<96x128xf32> to vector<64x128xf32>
    %c1 = arith.constant 1 : index
    %c0_33 = arith.constant 0 : index
    %c0_34 = arith.constant 0 : index
    %55 = vector.load %arg7[%c1, %c0_33, %c0_34] : memref<9x128x128xf32, #tpu.memory_space<vmem>>, vector<1x128x128xf32>
    %56 = vector.shape_cast %55 : vector<1x128x128xf32> to vector<128x128xf32>
    %cst_35 = arith.constant dense<0.000000e+00> : vector<64x128xf32>
    %57 = tpu.matmul %54, %56, %cst_35 {dimension_numbers = #tpu.dot_dimension_numbers<[1], [0], [0], [1], [0, 0, 1, 1], [], []>} : vector<64x128xf32>, vector<128x128xf32>, vector<64x128xf32> -> vector<64x128xf32>
    %58 = arith.addf %53, %57 : vector<64x128xf32>
    %59 = vector.extract_strided_slice %47 {offsets = [0, 0], sizes = [64, 128], strides = [1, 1]} : vector<96x128xf32> to vector<64x128xf32>
    %c2 = arith.constant 2 : index
    %c0_36 = arith.constant 0 : index
    %c0_37 = arith.constant 0 : index
    %60 = vector.load %arg7[%c2, %c0_36, %c0_37] : memref<9x128x128xf32, #tpu.memory_space<vmem>>, vector<1x128x128xf32>
    %61 = vector.shape_cast %60 : vector<1x128x128xf32> to vector<128x128xf32>
    %cst_38 = arith.constant dense<0.000000e+00> : vector<64x128xf32>
    %62 = tpu.matmul %59, %61, %cst_38 {dimension_numbers = #tpu.dot_dimension_numbers<[1], [0], [0], [1], [0, 0, 1, 1], [], []>} : vector<64x128xf32>, vector<128x128xf32>, vector<64x128xf32> -> vector<64x128xf32>
    %63 = arith.addf %58, %62 : vector<64x128xf32>
    %64 = vector.extract_strided_slice %42 {offsets = [16, 0], sizes = [64, 128], strides = [1, 1]} : vector<96x128xf32> to vector<64x128xf32>
    %c3 = arith.constant 3 : index
    %c0_39 = arith.constant 0 : index
    %c0_40 = arith.constant 0 : index
    %65 = vector.load %arg7[%c3, %c0_39, %c0_40] : memref<9x128x128xf32, #tpu.memory_space<vmem>>, vector<1x128x128xf32>
    %66 = vector.shape_cast %65 : vector<1x128x128xf32> to vector<128x128xf32>
    %cst_41 = arith.constant dense<0.000000e+00> : vector<64x128xf32>
    %67 = tpu.matmul %64, %66, %cst_41 {dimension_numbers = #tpu.dot_dimension_numbers<[1], [0], [0], [1], [0, 0, 1, 1], [], []>} : vector<64x128xf32>, vector<128x128xf32>, vector<64x128xf32> -> vector<64x128xf32>
    %68 = arith.addf %63, %67 : vector<64x128xf32>
    %69 = vector.extract_strided_slice %36 {offsets = [16, 0], sizes = [64, 128], strides = [1, 1]} : vector<96x128xf32> to vector<64x128xf32>
    %c4 = arith.constant 4 : index
    %c0_42 = arith.constant 0 : index
    %c0_43 = arith.constant 0 : index
    %70 = vector.load %arg7[%c4, %c0_42, %c0_43] : memref<9x128x128xf32, #tpu.memory_space<vmem>>, vector<1x128x128xf32>
    %71 = vector.shape_cast %70 : vector<1x128x128xf32> to vector<128x128xf32>
    %cst_44 = arith.constant dense<0.000000e+00> : vector<64x128xf32>
    %72 = tpu.matmul %69, %71, %cst_44 {dimension_numbers = #tpu.dot_dimension_numbers<[1], [0], [0], [1], [0, 0, 1, 1], [], []>} : vector<64x128xf32>, vector<128x128xf32>, vector<64x128xf32> -> vector<64x128xf32>
    %73 = arith.addf %68, %72 : vector<64x128xf32>
    %74 = vector.extract_strided_slice %47 {offsets = [16, 0], sizes = [64, 128], strides = [1, 1]} : vector<96x128xf32> to vector<64x128xf32>
    %c5 = arith.constant 5 : index
    %c0_45 = arith.constant 0 : index
    %c0_46 = arith.constant 0 : index
    %75 = vector.load %arg7[%c5, %c0_45, %c0_46] : memref<9x128x128xf32, #tpu.memory_space<vmem>>, vector<1x128x128xf32>
    %76 = vector.shape_cast %75 : vector<1x128x128xf32> to vector<128x128xf32>
    %cst_47 = arith.constant dense<0.000000e+00> : vector<64x128xf32>
    %77 = tpu.matmul %74, %76, %cst_47 {dimension_numbers = #tpu.dot_dimension_numbers<[1], [0], [0], [1], [0, 0, 1, 1], [], []>} : vector<64x128xf32>, vector<128x128xf32>, vector<64x128xf32> -> vector<64x128xf32>
    %78 = arith.addf %73, %77 : vector<64x128xf32>
    %79 = vector.extract_strided_slice %42 {offsets = [32, 0], sizes = [64, 128], strides = [1, 1]} : vector<96x128xf32> to vector<64x128xf32>
    %c6 = arith.constant 6 : index
    %c0_48 = arith.constant 0 : index
    %c0_49 = arith.constant 0 : index
    %80 = vector.load %arg7[%c6, %c0_48, %c0_49] : memref<9x128x128xf32, #tpu.memory_space<vmem>>, vector<1x128x128xf32>
    %81 = vector.shape_cast %80 : vector<1x128x128xf32> to vector<128x128xf32>
    %cst_50 = arith.constant dense<0.000000e+00> : vector<64x128xf32>
    %82 = tpu.matmul %79, %81, %cst_50 {dimension_numbers = #tpu.dot_dimension_numbers<[1], [0], [0], [1], [0, 0, 1, 1], [], []>} : vector<64x128xf32>, vector<128x128xf32>, vector<64x128xf32> -> vector<64x128xf32>
    %83 = arith.addf %78, %82 : vector<64x128xf32>
    %84 = vector.extract_strided_slice %36 {offsets = [32, 0], sizes = [64, 128], strides = [1, 1]} : vector<96x128xf32> to vector<64x128xf32>
    %c7 = arith.constant 7 : index
    %c0_51 = arith.constant 0 : index
    %c0_52 = arith.constant 0 : index
    %85 = vector.load %arg7[%c7, %c0_51, %c0_52] : memref<9x128x128xf32, #tpu.memory_space<vmem>>, vector<1x128x128xf32>
    %86 = vector.shape_cast %85 : vector<1x128x128xf32> to vector<128x128xf32>
    %cst_53 = arith.constant dense<0.000000e+00> : vector<64x128xf32>
    %87 = tpu.matmul %84, %86, %cst_53 {dimension_numbers = #tpu.dot_dimension_numbers<[1], [0], [0], [1], [0, 0, 1, 1], [], []>} : vector<64x128xf32>, vector<128x128xf32>, vector<64x128xf32> -> vector<64x128xf32>
    %88 = arith.addf %83, %87 : vector<64x128xf32>
    %89 = vector.extract_strided_slice %47 {offsets = [32, 0], sizes = [64, 128], strides = [1, 1]} : vector<96x128xf32> to vector<64x128xf32>
    %c8 = arith.constant 8 : index
    %c0_54 = arith.constant 0 : index
    %c0_55 = arith.constant 0 : index
    %90 = vector.load %arg7[%c8, %c0_54, %c0_55] : memref<9x128x128xf32, #tpu.memory_space<vmem>>, vector<1x128x128xf32>
    %91 = vector.shape_cast %90 : vector<1x128x128xf32> to vector<128x128xf32>
    %cst_56 = arith.constant dense<0.000000e+00> : vector<64x128xf32>
    %92 = tpu.matmul %89, %91, %cst_56 {dimension_numbers = #tpu.dot_dimension_numbers<[1], [0], [0], [1], [0, 0, 1, 1], [], []>} : vector<64x128xf32>, vector<128x128xf32>, vector<64x128xf32> -> vector<64x128xf32>
    %93 = arith.addf %88, %92 : vector<64x128xf32>
    %c0_57 = arith.constant 0 : index
    %c0_58 = arith.constant 0 : index
    %94 = vector.load %arg11[%c0_57, %c0_58] : memref<1x128xf32, #tpu.memory_space<vmem>>, vector<1x128xf32>
    %95 = vector.broadcast %94 : vector<1x128xf32> to vector<64x128xf32>
    %96 = arith.mulf %93, %95 : vector<64x128xf32>
    %c0_59 = arith.constant 0 : index
    %c0_60 = arith.constant 0 : index
    %97 = vector.load %arg12[%c0_59, %c0_60] : memref<1x128xf32, #tpu.memory_space<vmem>>, vector<1x128xf32>
    %98 = vector.broadcast %97 : vector<1x128xf32> to vector<64x128xf32>
    %99 = arith.addf %96, %98 : vector<64x128xf32>
    %cst_61 = arith.constant 0.000000e+00 : f32
    %100 = vector.broadcast %cst_61 : f32 to vector<64x128xf32>
    %101 = arith.maximumf %99, %100 : vector<64x128xf32>
    %c0_62 = arith.constant 0 : index
    %c0_63 = arith.constant 0 : index
    %102 = vector.load %arg8[%c0_62, %c0_63] : memref<128x128xf32, #tpu.memory_space<vmem>>, vector<128x128xf32>
    %cst_64 = arith.constant dense<0.000000e+00> : vector<64x128xf32>
    %103 = tpu.matmul %101, %102, %cst_64 {dimension_numbers = #tpu.dot_dimension_numbers<[1], [0], [0], [1], [0, 0, 1, 1], [], []>} : vector<64x128xf32>, vector<128x128xf32>, vector<64x128xf32> -> vector<64x128xf32>
    %c0_65 = arith.constant 0 : index
    %c0_66 = arith.constant 0 : index
    %104 = vector.load %arg13[%c0_65, %c0_66] : memref<1x128xf32, #tpu.memory_space<vmem>>, vector<1x128xf32>
    %105 = vector.broadcast %104 : vector<1x128xf32> to vector<64x128xf32>
    %106 = arith.mulf %103, %105 : vector<64x128xf32>
    %c0_67 = arith.constant 0 : index
    %c0_68 = arith.constant 0 : index
    %107 = vector.load %arg14[%c0_67, %c0_68] : memref<1x128xf32, #tpu.memory_space<vmem>>, vector<1x128xf32>
    %108 = vector.broadcast %107 : vector<1x128xf32> to vector<64x128xf32>
    %109 = arith.addf %106, %108 : vector<64x128xf32>
    %110 = arith.addf %109, %1 : vector<64x128xf32>
    %cst_69 = arith.constant 0.000000e+00 : f32
    %111 = vector.broadcast %cst_69 : f32 to vector<64x128xf32>
    %112 = arith.maximumf %110, %111 : vector<64x128xf32>
    %113 = vector.shape_cast %112 : vector<64x128xf32> to vector<1x4x16x128xf32>
    %c0_70 = arith.constant 0 : index
    %c0_71 = arith.constant 0 : index
    %c0_72 = arith.constant 0 : index
    %c0_73 = arith.constant 0 : index
    %114 = vector.load %arg15[%c0_70, %c0_71, %c0_72, %c0_73] : memref<1x4x16x128xf32, #tpu.memory_space<vmem>>, vector<1x4x16x128xf32>
    tpu.vector_store %arg15[%c0_70, %c0_71, %c0_72, %c0_73], %113 {strides = array<i32>} : memref<1x4x16x128xf32, #tpu.memory_space<vmem>>, vector<1x4x16x128xf32>,
    return
  }
  func.func @transform_0(%arg0: i32, %arg1: i32) -> (i32, i32, i32, i32) {
    %c0_i32 = arith.constant 0 : i32
    %c0_i32_0 = arith.constant 0 : i32
    %c0_i32_1 = arith.constant 0 : i32
    return %arg0, %arg1, %c0_i32, %c0_i32_0 : i32, i32, i32, i32
  }
  func.func @transform_1(%arg0: i32, %arg1: i32) -> (i32, i32, i32, i32, i32) {
    %c0_i32 = arith.constant 0 : i32
    %c0_i32_0 = arith.constant 0 : i32
    %c0_i32_1 = arith.constant 0 : i32
    %c0_i32_2 = arith.constant 0 : i32
    return %arg0, %arg1, %c0_i32, %c0_i32_0, %c0_i32_1 : i32, i32, i32, i32, i32
  }
  func.func @transform_2(%arg0: i32, %arg1: i32) -> (i32, i32) {
    %c0_i32 = arith.constant 0 : i32
    %c0_i32_0 = arith.constant 0 : i32
    %c0_i32_1 = arith.constant 0 : i32
    return %c0_i32, %c0_i32_0 : i32, i32
  }
  func.func @transform_3(%arg0: i32, %arg1: i32) -> (i32, i32) {
    %c0_i32 = arith.constant 0 : i32
    %c0_i32_0 = arith.constant 0 : i32
    %c0_i32_1 = arith.constant 0 : i32
    return %c0_i32, %c0_i32_0 : i32, i32
  }
  func.func @transform_4(%arg0: i32, %arg1: i32) -> (i32, i32) {
    %c0_i32 = arith.constant 0 : i32
    %c0_i32_0 = arith.constant 0 : i32
    %c0_i32_1 = arith.constant 0 : i32
    return %c0_i32, %c0_i32_0 : i32, i32
  }
  func.func @transform_5(%arg0: i32, %arg1: i32) -> (i32, i32, i32) {
    %c0_i32 = arith.constant 0 : i32
    %c0_i32_0 = arith.constant 0 : i32
    %c0_i32_1 = arith.constant 0 : i32
    %c0_i32_2 = arith.constant 0 : i32
    return %c0_i32, %c0_i32_0, %c0_i32_1 : i32, i32, i32
  }
  func.func @transform_6(%arg0: i32, %arg1: i32) -> (i32, i32) {
    %c0_i32 = arith.constant 0 : i32
    %c0_i32_0 = arith.constant 0 : i32
    %c0_i32_1 = arith.constant 0 : i32
    return %c0_i32, %c0_i32_0 : i32, i32
  }
  func.func @transform_7(%arg0: i32, %arg1: i32) -> (i32, i32) {
    %c0_i32 = arith.constant 0 : i32
    %c0_i32_0 = arith.constant 0 : i32
    %c0_i32_1 = arith.constant 0 : i32
    return %c0_i32, %c0_i32_0 : i32, i32
  }
  func.func @transform_8(%arg0: i32, %arg1: i32) -> (i32, i32) {
    %c0_i32 = arith.constant 0 : i32
    %c0_i32_0 = arith.constant 0 : i32
    %c0_i32_1 = arith.constant 0 : i32
    return %c0_i32, %c0_i32_0 : i32, i32
  }
  func.func @transform_9(%arg0: i32, %arg1: i32) -> (i32, i32) {
    %c0_i32 = arith.constant 0 : i32
    %c0_i32_0 = arith.constant 0 : i32
    %c0_i32_1 = arith.constant 0 : i32
    return %c0_i32, %c0_i32_0 : i32, i32
  }
  func.func @transform_10(%arg0: i32, %arg1: i32) -> (i32, i32) {
    %c0_i32 = arith.constant 0 : i32
    %c0_i32_0 = arith.constant 0 : i32
    %c0_i32_1 = arith.constant 0 : i32
    return %c0_i32, %c0_i32_0 : i32, i32
  }
  func.func @transform_11(%arg0: i32, %arg1: i32) -> (i32, i32) {
    %c0_i32 = arith.constant 0 : i32
    %c0_i32_0 = arith.constant 0 : i32
    %c0_i32_1 = arith.constant 0 : i32
    return %c0_i32, %c0_i32_0 : i32, i32
  }
  func.func @transform_12(%arg0: i32, %arg1: i32) -> (i32, i32) {
    %c0_i32 = arith.constant 0 : i32
    %c0_i32_0 = arith.constant 0 : i32
    %c0_i32_1 = arith.constant 0 : i32
    return %c0_i32, %c0_i32_0 : i32, i32
  }
  func.func @transform_13(%arg0: i32, %arg1: i32) -> (i32, i32, i32, i32) {
    %c0_i32 = arith.constant 0 : i32
    %c0_i32_0 = arith.constant 0 : i32
    %c0_i32_1 = arith.constant 0 : i32
    return %arg0, %arg1, %c0_i32, %c0_i32_0 : i32, i32, i32, i32
  }
}

</mosaic_0001>

<llo_original>
// kernel: tpu_custom_call.1
$region0: #{tpu_custom_call.1}
  #allocation0 [shape = 'u32[]', space=smem, size = 0x4, offset = 0x4, fixed_abs, tag = 'smem constant byte address 0x4 - core index']
  #allocation1 [shape = 'u32[144,128]{1,0:T(1,128)}', space=vmem, size = 0x12000, scoped, tag = 'internal scratch']
  %s0 = inlined_call_operand.hbm [shape: f32[2,16,16,128], index: 0, kind: input, shape index: {}]
  %s1 = inlined_call_operand.hbm [shape: f32[2,4,2,16,128], index: 1, kind: input, shape index: {}]
  %s2 = inlined_call_operand.vmem [shape: f32[96,1], index: 2, kind: input, shape index: {}]
  %s3 = inlined_call_operand.vmem [shape: f32[96,1], index: 3, kind: input, shape index: {}]
  %s4 = inlined_call_operand.vmem [shape: f32[128,128], index: 4, kind: input, shape index: {}]
  %s5 = inlined_call_operand.hbm [shape: f32[9,128,128], index: 5, kind: input, shape index: {}]
  %s6 = inlined_call_operand.hbm [shape: f32[128,128], index: 6, kind: input, shape index: {}]
  %s7 = inlined_call_operand.vmem [shape: f32[1,128], index: 7, kind: input, shape index: {}]
  %s8 = inlined_call_operand.vmem [shape: f32[1,128], index: 8, kind: input, shape index: {}]
  %s9 = inlined_call_operand.vmem [shape: f32[1,128], index: 9, kind: input, shape index: {}]
  %s10 = inlined_call_operand.vmem [shape: f32[1,128], index: 10, kind: input, shape index: {}]
  %s11 = inlined_call_operand.vmem [shape: f32[1,128], index: 11, kind: input, shape index: {}]
  %s12 = inlined_call_operand.vmem [shape: f32[1,128], index: 12, kind: input, shape index: {}]
  %s13 = inlined_call_operand.hbm [shape: f32[2,16,16,128], index: 13, kind: output, shape index: {}]
  %s14 = sld [smem:[#allocation0]]
  $region101: #{tpu_custom_call.1} parent=0
    _
  %s16 = ssub.s32 1, %s14
  %s17 = scalar_select 0, %s16, %s14
  $region1: #{tpu_custom_call.1} parent=0
    #allocation2 [shape = 'u8[65536]{0}', space=vmem, size = 0x10000, scoped, tag = 'input window, operand 0']
    #allocation3 [shape = 's32[2]{0}', space=sflag, size = 0x8, scoped, tag = 'scoped memory for tpu_custom_call.1']
    #allocation4 [shape = 's32[2]{0}', space=sflag, size = 0x8, scoped, tag = 'scoped memory for tpu_custom_call.1']
    #allocation5 [shape = 'u8[32768]{0}', space=vmem, size = 0x8000, scoped, tag = 'input window, operand 1']
    #allocation6 [shape = 's32[2]{0}', space=sflag, size = 0x8, scoped, tag = 'scoped memory for tpu_custom_call.1']
    #allocation7 [shape = 'u8[589824]{0}', space=vmem, size = 0x90000, scoped, tag = 'input window, operand 5, single buffered']
    #allocation8 [shape = 'u8[65536]{0}', space=vmem, size = 0x10000, scoped, tag = 'input window, operand 6, single buffered']
    #allocation9 [shape = 's32[1]{0}', space=sflag, size = 0x4, scoped, tag = 'scoped memory for tpu_custom_call.1']
    #allocation10 [shape = 'u8[65536]{0}', space=vmem, size = 0x10000, scoped, tag = 'output window, operand 0']
    %18 = vsyncpa [#allocation3], 0
    %s19 = scalar_lea.sflag [#allocation3], 1
    %20 = vsyncpa %s19, 0
    %21 = vsyncpa [#allocation6], 0
    %s22 = scalar_lea.sflag [#allocation6], 1
    %23 = vsyncpa %s22, 0
    %24 = vsyncpa [#allocation9], 0
    %25 = vsyncpa [#allocation4], 0
    %s26 = scalar_lea.sflag [#allocation4], 1
    %27 = vsyncpa %s26, 0
    loop: start=0, step=1, limit=10
    $region2: #{tpu_custom_call.1} parent=1 // loop_pre_header
      _
    $region3: #{tpu_custom_call.1} parent=1 // loop_header
      %s29 = sphi 0, %s33
      %p30 = scmp.ge.s32.totalorder %s29, 10
      %s36 = sphi 0, %s48
      %s37 = sphi 0, %s44
      %s38 = sphi 0, %s36
      %s39 = sphi 0, %s37
      %s40 = sphi 0, %s38
      %s41 = sphi 0, %s39
      %s53 = sphi 0, %s55
      %s56 = sphi 0, %s53
      %s57 = sphi 0, %s56
      %s73 = sphi 0, %s57
      %s81 = sphi 0, %s83
      %s84 = sphi 0, %s81
      %s85 = sphi 0, %s84
      %s101 = sphi 0, %s85
      %s105 = sphi 0, %s105
      %s107 = sphi 0, %s105
      %s108 = sphi 0, %s107
      %s122 = sphi 0, %s108
      %s126 = sphi 0, %s126
      %s128 = sphi 0, %s126
      %s129 = sphi 0, %s128
      %s143 = sphi 0, %s129
      %s147 = sphi 0, %s147
      %s149 = sphi 0, %s147
      %s150 = sphi 0, %s149
      %s164 = sphi 0, %s150
      %s168 = sphi 0, %s168
      %s170 = sphi 0, %s168
      %s171 = sphi 0, %s170
      %s185 = sphi 0, %s171
      %s189 = sphi 0, %s189
      %s191 = sphi 0, %s189
      %s192 = sphi 0, %s191
      %s206 = sphi 0, %s192
      %s210 = sphi 0, %s210
      %s212 = sphi 0, %s210
      %s213 = sphi 0, %s212
      %s227 = sphi 0, %s213
      %s231 = sphi 0, %s231
      %s233 = sphi 0, %s231
      %s234 = sphi 0, %s233
      %s248 = sphi 0, %s234
      %s252 = sphi 0, %s252
      %s254 = sphi 0, %s252
      %s255 = sphi 0, %s254
      %s269 = sphi 0, %s255
      %s273 = sphi 0, %s273
      %s275 = sphi 0, %s273
      %s276 = sphi 0, %s275
      %s290 = sphi 0, %s276
      %s294 = sphi 0, %s294
      %s296 = sphi 0, %s294
      %s297 = sphi 0, %s296
      %s311 = sphi 0, %s297
      %s315 = sphi 0, %s315
      %s317 = sphi 0, %s315
      %s318 = sphi 0, %s317
      %s332 = sphi 0, %s318
      %s340 = sphi 0, %s342
      %s343 = sphi 0, %s340
      %s344 = sphi 0, %s343
      %s360 = sphi 0, %s344
    $region4: #{tpu_custom_call.1} parent=1 // loop_header_branch
      %32 = sbr.rel (%p30) target = $region8
    $region5: #{tpu_custom_call.1} parent=1 // loop_body
      %s34 = ssub.s32 %s29, 1
      %s35 = ssub.s32 %s29, 2
      %s42 = sadd.s32 1, %s37
      %p43 = scmp.ge.s32.totalorder %s42, 4
      %s44 = scalar_select %p43, 0, %s42
      %s45 = sadd.s32 1, %s36
      %s46 = scalar_select %p43, %s45, %s36
      %p47 = scmp.ge.s32.totalorder %s46, 2
      %s48 = scalar_select %p47, 0, %s46
      %s49 = ssub.s32 %s36, %s48
      %s50 = ssub.s32 %s37, %s44
      %s51 = sor.u32 %s49, %s50
      %p52 = scmp.eq.s32.totalorder %s51, 0
      %s54 = sadd.s32 %s53, 1
      %s55 = scalar_select %p52, %s53, %s54
      %p58 = pneg %p52
      %p59 = scmp.eq.s32.totalorder %s29, 7
      %p60 = por %p58, %p59
      %p61 = scmp.ne.s32.totalorder %s53, %s56
      %p62 = scmp.eq.s32.totalorder %s29, 0
      %p63 = por %p61, %p62
      %p64 = scmp.ne.s32.totalorder %s53, %s56
      %p65 = scmp.eq.s32.totalorder %s34, 7
      %p66 = por %p64, %p65
      %p67 = scmp.ne.s32.totalorder %s56, %s57
      %p68 = scmp.eq.s32.totalorder %s34, 0
      %p69 = por %p67, %p68
      %p70 = scmp.ne.s32.totalorder %s56, %s57
      %p71 = scmp.eq.s32.totalorder %s35, 7
      %p72 = por %p70, %p71
      %p74 = scmp.ne.s32.totalorder %s57, %s73
      %p75 = scmp.eq.s32.totalorder %s35, 0
      %p76 = por %p74, %p75
      %s77 = ssub.s32 %s36, %s48
      %s78 = ssub.s32 %s37, %s44
      %s79 = sor.u32 %s77, %s78
      %p80 = scmp.eq.s32.totalorder %s79, 0
      %s82 = sadd.s32 %s81, 1
      %s83 = scalar_select %p80, %s81, %s82
      %p86 = pneg %p80
      %p87 = scmp.eq.s32.totalorder %s29, 7
      %p88 = por %p86, %p87
      %p89 = scmp.ne.s32.totalorder %s81, %s84
      %p90 = scmp.eq.s32.totalorder %s29, 0
      %p91 = por %p89, %p90
      %p92 = scmp.ne.s32.totalorder %s81, %s84
      %p93 = scmp.eq.s32.totalorder %s34, 7
      %p94 = por %p92, %p93
      %p95 = scmp.ne.s32.totalorder %s84, %s85
      %p96 = scmp.eq.s32.totalorder %s34, 0
      %p97 = por %p95, %p96
      %p98 = scmp.ne.s32.totalorder %s84, %s85
      %p99 = scmp.eq.s32.totalorder %s35, 7
      %p100 = por %p98, %p99
      %p102 = scmp.ne.s32.totalorder %s85, %s101
      %p103 = scmp.eq.s32.totalorder %s35, 0
      %p104 = por %p102, %p103
      %s106 = sadd.s32 %s105, 1
      %p109 = scmp.eq.s32.totalorder %s29, 7
      %p110 = scmp.ne.s32.totalorder %s105, %s107
      %p111 = scmp.eq.s32.totalorder %s29, 0
      %p112 = por %p110, %p111
      %p113 = scmp.ne.s32.totalorder %s105, %s107
      %p114 = scmp.eq.s32.totalorder %s34, 7
      %p115 = por %p113, %p114
      %p116 = scmp.ne.s32.totalorder %s107, %s108
      %p117 = scmp.eq.s32.totalorder %s34, 0
      %p118 = por %p116, %p117
      %p119 = scmp.ne.s32.totalorder %s107, %s108
      %p120 = scmp.eq.s32.totalorder %s35, 7
      %p121 = por %p119, %p120
      %p123 = scmp.ne.s32.totalorder %s108, %s122
      %p124 = scmp.eq.s32.totalorder %s35, 0
      %p125 = por %p123, %p124
      %s127 = sadd.s32 %s126, 1
      %p130 = scmp.eq.s32.totalorder %s29, 7
      %p131 = scmp.ne.s32.totalorder %s126, %s128
      %p132 = scmp.eq.s32.totalorder %s29, 0
      %p133 = por %p131, %p132
      %p134 = scmp.ne.s32.totalorder %s126, %s128
      %p135 = scmp.eq.s32.totalorder %s34, 7
      %p136 = por %p134, %p135
      %p137 = scmp.ne.s32.totalorder %s128, %s129
      %p138 = scmp.eq.s32.totalorder %s34, 0
      %p139 = por %p137, %p138
      %p140 = scmp.ne.s32.totalorder %s128, %s129
      %p141 = scmp.eq.s32.totalorder %s35, 7
      %p142 = por %p140, %p141
      %p144 = scmp.ne.s32.totalorder %s129, %s143
      %p145 = scmp.eq.s32.totalorder %s35, 0
      %p146 = por %p144, %p145
      %s148 = sadd.s32 %s147, 1
      %p151 = scmp.eq.s32.totalorder %s29, 7
      %p152 = scmp.ne.s32.totalorder %s147, %s149
      %p153 = scmp.eq.s32.totalorder %s29, 0
      %p154 = por %p152, %p153
      %p155 = scmp.ne.s32.totalorder %s147, %s149
      %p156 = scmp.eq.s32.totalorder %s34, 7
      %p157 = por %p155, %p156
      %p158 = scmp.ne.s32.totalorder %s149, %s150
      %p159 = scmp.eq.s32.totalorder %s34, 0
      %p160 = por %p158, %p159
      %p161 = scmp.ne.s32.totalorder %s149, %s150
      %p162 = scmp.eq.s32.totalorder %s35, 7
      %p163 = por %p161, %p162
      %p165 = scmp.ne.s32.totalorder %s150, %s164
      %p166 = scmp.eq.s32.totalorder %s35, 0
      %p167 = por %p165, %p166
      %s169 = sadd.s32 %s168, 1
      %p172 = scmp.eq.s32.totalorder %s29, 7
      %p173 = scmp.ne.s32.totalorder %s168, %s170
      %p174 = scmp.eq.s32.totalorder %s29, 0
      %p175 = por %p173, %p174
      %p176 = scmp.ne.s32.totalorder %s168, %s170
      %p177 = scmp.eq.s32.totalorder %s34, 7
      %p178 = por %p176, %p177
      %p179 = scmp.ne.s32.totalorder %s170, %s171
      %p180 = scmp.eq.s32.totalorder %s34, 0
      %p181 = por %p179, %p180
      %p182 = scmp.ne.s32.totalorder %s170, %s171
      %p183 = scmp.eq.s32.totalorder %s35, 7
      %p184 = por %p182, %p183
      %p186 = scmp.ne.s32.totalorder %s171, %s185
      %p187 = scmp.eq.s32.totalorder %s35, 0
      %p188 = por %p186, %p187
      %s190 = sadd.s32 %s189, 1
      %p193 = scmp.eq.s32.totalorder %s29, 7
      %p194 = scmp.ne.s32.totalorder %s189, %s191
      %p195 = scmp.eq.s32.totalorder %s29, 0
      %p196 = por %p194, %p195
      %p197 = scmp.ne.s32.totalorder %s189, %s191
      %p198 = scmp.eq.s32.totalorder %s34, 7
      %p199 = por %p197, %p198
      %p200 = scmp.ne.s32.totalorder %s191, %s192
      %p201 = scmp.eq.s32.totalorder %s34, 0
      %p202 = por %p200, %p201
      %p203 = scmp.ne.s32.totalorder %s191, %s192
      %p204 = scmp.eq.s32.totalorder %s35, 7
      %p205 = por %p203, %p204
      %p207 = scmp.ne.s32.totalorder %s192, %s206
      %p208 = scmp.eq.s32.totalorder %s35, 0
      %p209 = por %p207, %p208
      %s211 = sadd.s32 %s210, 1
      %p214 = scmp.eq.s32.totalorder %s29, 7
      %p215 = scmp.ne.s32.totalorder %s210, %s212
      %p216 = scmp.eq.s32.totalorder %s29, 0
      %p217 = por %p215, %p216
      %p218 = scmp.ne.s32.totalorder %s210, %s212
      %p219 = scmp.eq.s32.totalorder %s34, 7
      %p220 = por %p218, %p219
      %p221 = scmp.ne.s32.totalorder %s212, %s213
      %p222 = scmp.eq.s32.totalorder %s34, 0
      %p223 = por %p221, %p222
      %p224 = scmp.ne.s32.totalorder %s212, %s213
      %p225 = scmp.eq.s32.totalorder %s35, 7
      %p226 = por %p224, %p225
      %p228 = scmp.ne.s32.totalorder %s213, %s227
      %p229 = scmp.eq.s32.totalorder %s35, 0
      %p230 = por %p228, %p229
      %s232 = sadd.s32 %s231, 1
      %p235 = scmp.eq.s32.totalorder %s29, 7
      %p236 = scmp.ne.s32.totalorder %s231, %s233
      %p237 = scmp.eq.s32.totalorder %s29, 0
      %p238 = por %p236, %p237
      %p239 = scmp.ne.s32.totalorder %s231, %s233
      %p240 = scmp.eq.s32.totalorder %s34, 7
      %p241 = por %p239, %p240
      %p242 = scmp.ne.s32.totalorder %s233, %s234
      %p243 = scmp.eq.s32.totalorder %s34, 0
      %p244 = por %p242, %p243
      %p245 = scmp.ne.s32.totalorder %s233, %s234
      %p246 = scmp.eq.s32.totalorder %s35, 7
      %p247 = por %p245, %p246
      %p249 = scmp.ne.s32.totalorder %s234, %s248
      %p250 = scmp.eq.s32.totalorder %s35, 0
      %p251 = por %p249, %p250
      %s253 = sadd.s32 %s252, 1
      %p256 = scmp.eq.s32.totalorder %s29, 7
      %p257 = scmp.ne.s32.totalorder %s252, %s254
      %p258 = scmp.eq.s32.totalorder %s29, 0
      %p259 = por %p257, %p258
      %p260 = scmp.ne.s32.totalorder %s252, %s254
      %p261 = scmp.eq.s32.totalorder %s34, 7
      %p262 = por %p260, %p261
      %p263 = scmp.ne.s32.totalorder %s254, %s255
      %p264 = scmp.eq.s32.totalorder %s34, 0
      %p265 = por %p263, %p264
      %p266 = scmp.ne.s32.totalorder %s254, %s255
      %p267 = scmp.eq.s32.totalorder %s35, 7
      %p268 = por %p266, %p267
      %p270 = scmp.ne.s32.totalorder %s255, %s269
      %p271 = scmp.eq.s32.totalorder %s35, 0
      %p272 = por %p270, %p271
      %s274 = sadd.s32 %s273, 1
      %p277 = scmp.eq.s32.totalorder %s29, 7
      %p278 = scmp.ne.s32.totalorder %s273, %s275
      %p279 = scmp.eq.s32.totalorder %s29, 0
      %p280 = por %p278, %p279
      %p281 = scmp.ne.s32.totalorder %s273, %s275
      %p282 = scmp.eq.s32.totalorder %s34, 7
      %p283 = por %p281, %p282
      %p284 = scmp.ne.s32.totalorder %s275, %s276
      %p285 = scmp.eq.s32.totalorder %s34, 0
      %p286 = por %p284, %p285
      %p287 = scmp.ne.s32.totalorder %s275, %s276
      %p288 = scmp.eq.s32.totalorder %s35, 7
      %p289 = por %p287, %p288
      %p291 = scmp.ne.s32.totalorder %s276, %s290
      %p292 = scmp.eq.s32.totalorder %s35, 0
      %p293 = por %p291, %p292
      %s295 = sadd.s32 %s294, 1
      %p298 = scmp.eq.s32.totalorder %s29, 7
      %p299 = scmp.ne.s32.totalorder %s294, %s296
      %p300 = scmp.eq.s32.totalorder %s29, 0
      %p301 = por %p299, %p300
      %p302 = scmp.ne.s32.totalorder %s294, %s296
      %p303 = scmp.eq.s32.totalorder %s34, 7
      %p304 = por %p302, %p303
      %p305 = scmp.ne.s32.totalorder %s296, %s297
      %p306 = scmp.eq.s32.totalorder %s34, 0
      %p307 = por %p305, %p306
      %p308 = scmp.ne.s32.totalorder %s296, %s297
      %p309 = scmp.eq.s32.totalorder %s35, 7
      %p310 = por %p308, %p309
      %p312 = scmp.ne.s32.totalorder %s297, %s311
      %p313 = scmp.eq.s32.totalorder %s35, 0
      %p314 = por %p312, %p313
      %s316 = sadd.s32 %s315, 1
      %p319 = scmp.eq.s32.totalorder %s29, 7
      %p320 = scmp.ne.s32.totalorder %s315, %s317
      %p321 = scmp.eq.s32.totalorder %s29, 0
      %p322 = por %p320, %p321
      %p323 = scmp.ne.s32.totalorder %s315, %s317
      %p324 = scmp.eq.s32.totalorder %s34, 7
      %p325 = por %p323, %p324
      %p326 = scmp.ne.s32.totalorder %s317, %s318
      %p327 = scmp.eq.s32.totalorder %s34, 0
      %p328 = por %p326, %p327
      %p329 = scmp.ne.s32.totalorder %s317, %s318
      %p330 = scmp.eq.s32.totalorder %s35, 7
      %p331 = por %p329, %p330
      %p333 = scmp.ne.s32.totalorder %s318, %s332
      %p334 = scmp.eq.s32.totalorder %s35, 0
      %p335 = por %p333, %p334
      %s336 = ssub.s32 %s36, %s48
      %s337 = ssub.s32 %s37, %s44
      %s338 = sor.u32 %s336, %s337
      %p339 = scmp.eq.s32.totalorder %s338, 0
      %s341 = sadd.s32 %s340, 1
      %s342 = scalar_select %p339, %s340, %s341
      %p345 = pneg %p339
      %p346 = scmp.eq.s32.totalorder %s29, 7
      %p347 = por %p345, %p346
      %p348 = scmp.ne.s32.totalorder %s340, %s343
      %p349 = scmp.eq.s32.totalorder %s29, 0
      %p350 = por %p348, %p349
      %p351 = scmp.ne.s32.totalorder %s340, %s343
      %p352 = scmp.eq.s32.totalorder %s34, 7
      %p353 = por %p351, %p352
      %p354 = scmp.ne.s32.totalorder %s343, %s344
      %p355 = scmp.eq.s32.totalorder %s34, 0
      %p356 = por %p354, %p355
      %p357 = scmp.ne.s32.totalorder %s343, %s344
      %p358 = scmp.eq.s32.totalorder %s35, 7
      %p359 = por %p357, %p358
      %p361 = scmp.ne.s32.totalorder %s344, %s360
      %p362 = scmp.eq.s32.totalorder %s35, 0
      %p363 = por %p361, %p362
      %p364 = scmp.le.s32.totalorder 1, %s29
      %p365 = scmp.lt.s32.totalorder %s29, 9
      %p366 = pnand %p364, %p365
      %p367 = pneg %p366
      // Predicated region
      $region9: #{tpu_custom_call.1} parent=5 // pred_check
        _
      $region10: #{tpu_custom_call.1} parent=5 // pred_check_branch
        %369 = sbr.rel (%p366) target = $region12
      $region11: #{tpu_custom_call.1} parent=5 // pred_region
        %s370 = ssub.s32 %s29, 1
        // Predicated region
        $region13: #{tpu_custom_call.1} parent=11 // pred_check
          %p371 = pneg %p118
        $region14: #{tpu_custom_call.1} parent=11 // pred_check_branch
          %373 = sbr.rel (%p371) target = $region16
        $region15: #{tpu_custom_call.1} parent=11 // pred_region
          _
        $region16: #{tpu_custom_call.1} parent=11 // pred_fallthru
          _
        // Predicated region
        $region17: #{tpu_custom_call.1} parent=11 // pred_check
          %p374 = pneg %p139
        $region18: #{tpu_custom_call.1} parent=11 // pred_check_branch
          %376 = sbr.rel (%p374) target = $region20
        $region19: #{tpu_custom_call.1} parent=11 // pred_region
          _
        $region20: #{tpu_custom_call.1} parent=11 // pred_fallthru
          _
        // Predicated region
        $region21: #{tpu_custom_call.1} parent=11 // pred_check
          %p377 = pneg %p160
        $region22: #{tpu_custom_call.1} parent=11 // pred_check_branch
          %379 = sbr.rel (%p377) target = $region24
        $region23: #{tpu_custom_call.1} parent=11 // pred_region
          _
        $region24: #{tpu_custom_call.1} parent=11 // pred_fallthru
          _
        // Predicated region
        $region25: #{tpu_custom_call.1} parent=11 // pred_check
          %p380 = pneg %p181
        $region26: #{tpu_custom_call.1} parent=11 // pred_check_branch
          %382 = sbr.rel (%p380) target = $region28
        $region27: #{tpu_custom_call.1} parent=11 // pred_region
          %s384 = ssub.s32 18432, 18432
          %385 = vsyncadd [#allocation6], %s384
          %s386 = sshll.u32 [#allocation7], 4
          %s387 = int_to_ptr.vmem [resolvable:$true] %s386
          %392 = dma.hbm_to_vmem [thread:$0]  %s5, 18432, %s387, [#allocation6], 128, 128, 8
        $region28: #{tpu_custom_call.1} parent=11 // pred_fallthru
          _
        // Predicated region
        $region29: #{tpu_custom_call.1} parent=11 // pred_check
          %p393 = pneg %p202
        $region30: #{tpu_custom_call.1} parent=11 // pred_check_branch
          %395 = sbr.rel (%p393) target = $region32
        $region31: #{tpu_custom_call.1} parent=11 // pred_region
          %s397 = ssub.s32 2048, 2048
          %398 = vsyncadd [#allocation9], %s397
          %s399 = sshll.u32 [#allocation8], 4
          %s400 = int_to_ptr.vmem [resolvable:$true] %s399
          %405 = dma.hbm_to_vmem [thread:$0]  %s6, 2048, %s400, [#allocation9], 128, 128, 8
        $region32: #{tpu_custom_call.1} parent=11 // pred_fallthru
          _
        // Predicated region
        $region33: #{tpu_custom_call.1} parent=11 // pred_check
          %p406 = pneg %p223
        $region34: #{tpu_custom_call.1} parent=11 // pred_check_branch
          %408 = sbr.rel (%p406) target = $region36
        $region35: #{tpu_custom_call.1} parent=11 // pred_region
          _
        $region36: #{tpu_custom_call.1} parent=11 // pred_fallthru
          _
        // Predicated region
        $region37: #{tpu_custom_call.1} parent=11 // pred_check
          %p409 = pneg %p244
        $region38: #{tpu_custom_call.1} parent=11 // pred_check_branch
          %411 = sbr.rel (%p409) target = $region40
        $region39: #{tpu_custom_call.1} parent=11 // pred_region
          _
        $region40: #{tpu_custom_call.1} parent=11 // pred_fallthru
          _
        // Predicated region
        $region41: #{tpu_custom_call.1} parent=11 // pred_check
          %p412 = pneg %p265
        $region42: #{tpu_custom_call.1} parent=11 // pred_check_branch
          %414 = sbr.rel (%p412) target = $region44
        $region43: #{tpu_custom_call.1} parent=11 // pred_region
          _
        $region44: #{tpu_custom_call.1} parent=11 // pred_fallthru
          _
        // Predicated region
        $region45: #{tpu_custom_call.1} parent=11 // pred_check
          %p415 = pneg %p286
        $region46: #{tpu_custom_call.1} parent=11 // pred_check_branch
          %417 = sbr.rel (%p415) target = $region48
        $region47: #{tpu_custom_call.1} parent=11 // pred_region
          _
        $region48: #{tpu_custom_call.1} parent=11 // pred_fallthru
          _
        // Predicated region
        $region49: #{tpu_custom_call.1} parent=11 // pred_check
          %p418 = pneg %p307
        $region50: #{tpu_custom_call.1} parent=11 // pred_check_branch
          %420 = sbr.rel (%p418) target = $region52
        $region51: #{tpu_custom_call.1} parent=11 // pred_region
          _
        $region52: #{tpu_custom_call.1} parent=11 // pred_fallthru
          _
        // Predicated region
        $region53: #{tpu_custom_call.1} parent=11 // pred_check
          %p421 = pneg %p328
        $region54: #{tpu_custom_call.1} parent=11 // pred_check_branch
          %423 = sbr.rel (%p421) target = $region56
        $region55: #{tpu_custom_call.1} parent=11 // pred_region
          _
        $region56: #{tpu_custom_call.1} parent=11 // pred_fallthru
          _
      $region12: #{tpu_custom_call.1} parent=5 // pred_fallthru
        _
      %p424 = scmp.lt.s32.totalorder %s29, 8
      // Predicated region
      $region57: #{tpu_custom_call.1} parent=5 // pred_check
        %p425 = pneg %p424
      $region58: #{tpu_custom_call.1} parent=5 // pred_check_branch
        %427 = sbr.rel (%p425) target = $region60
      $region59: #{tpu_custom_call.1} parent=5 // pred_region
        // Predicated region
        $region61: #{tpu_custom_call.1} parent=59 // pred_check
          %p428 = pneg %p63
        $region62: #{tpu_custom_call.1} parent=59 // pred_check_branch
          %430 = sbr.rel (%p428) target = $region64
        $region63: #{tpu_custom_call.1} parent=59 // pred_region
          %s431 = sand.u32 %s53, 1
          %s432 = scalar_lea.sflag [#allocation3], %s431
          %s433 = sand.u32 %s53, 1
          %s434 = smul.addr %s433, 64
          %s435 = scalar_lea.vmem [#allocation2], %s434
          %s436 = smul.u32 4, %s37
          %s438 = ssub.s32 1024, 1024
          %439 = vsyncadd %s432, %s438
          %s440 = smul.addr %s436, 2
          %s441 = smul.addr %s36, 32
          %s442 = sadd.s32 %s440, %s441
          %s443 = smul.addr %s442, 128
          %s444 = scalar_lea.hbm %s0, %s443
          %s445 = sshll.u32 %s435, 4
          %s446 = int_to_ptr.vmem [resolvable:$true] %s445
          %451 = dma.hbm_to_vmem [thread:$0]  %s444, 1024, %s446, %s432, 128, 128, 8
        $region64: #{tpu_custom_call.1} parent=59 // pred_fallthru
          _
        // Predicated region
        $region65: #{tpu_custom_call.1} parent=59 // pred_check
          %p452 = pneg %p91
        $region66: #{tpu_custom_call.1} parent=59 // pred_check_branch
          %454 = sbr.rel (%p452) target = $region68
        $region67: #{tpu_custom_call.1} parent=59 // pred_region
          %s455 = sand.u32 %s29, 1
          %s456 = scalar_lea.sflag [#allocation6], %s455
          %s457 = sand.u32 %s81, 1
          %s458 = smul.addr %s457, 32
          %s459 = scalar_lea.vmem [#allocation5], %s458
          %s461 = ssub.s32 512, 512
          %462 = vsyncadd %s456, %s461
          %s463 = smul.addr %s37, 4
          %s464 = smul.addr %s36, 16
          %s465 = sadd.s32 %s463, %s464
          %s466 = smul.addr %s465, 128
          %s467 = scalar_lea.hbm %s1, %s466
          %s468 = sshll.u32 %s459, 4
          %s469 = int_to_ptr.vmem [resolvable:$true] %s468
          %474 = dma.hbm_to_vmem [thread:$0]  %s467, 512, %s469, %s456, 128, 128, 8
        $region68: #{tpu_custom_call.1} parent=59 // pred_fallthru
          _
      $region60: #{tpu_custom_call.1} parent=5 // pred_fallthru
        _
      %p475 = scmp.le.s32.totalorder 1, %s29
      %p476 = scmp.lt.s32.totalorder %s29, 9
      %p477 = pnand %p475, %p476
      %p478 = pneg %p477
      // Predicated region
      $region69: #{tpu_custom_call.1} parent=5 // pred_check
        _
      $region70: #{tpu_custom_call.1} parent=5 // pred_check_branch
        %480 = sbr.rel (%p477) target = $region72
      $region71: #{tpu_custom_call.1} parent=5 // pred_region
        %s481 = ssub.s32 %s29, 1
        %s482 = sand.u32 %s56, 1
        %s483 = scalar_lea.sflag [#allocation3], %s482
        %s484 = sand.u32 %s56, 1
        %s485 = smul.addr %s484, 64
        %s486 = scalar_lea.vmem [#allocation2], %s485
        // Predicated region
        $region73: #{tpu_custom_call.1} parent=71 // pred_check
          %p487 = pneg %p69
        $region74: #{tpu_custom_call.1} parent=71 // pred_check_branch
          %489 = sbr.rel (%p487) target = $region76
        $region75: #{tpu_custom_call.1} parent=71 // pred_region
          %490 = dma.done %s483, 1024
        $region76: #{tpu_custom_call.1} parent=71 // pred_fallthru
          _
        %s491 = sand.u32 %s34, 1
        %s492 = scalar_lea.sflag [#allocation6], %s491
        %s493 = sand.u32 %s84, 1
        %s494 = smul.addr %s493, 32
        %s495 = scalar_lea.vmem [#allocation5], %s494
        // Predicated region
        $region77: #{tpu_custom_call.1} parent=71 // pred_check
          %p496 = pneg %p97
        $region78: #{tpu_custom_call.1} parent=71 // pred_check_branch
          %498 = sbr.rel (%p496) target = $region80
        $region79: #{tpu_custom_call.1} parent=71 // pred_region
          %499 = dma.done %s492, 512
        $region80: #{tpu_custom_call.1} parent=71 // pred_fallthru
          _
        // Predicated region
        $region81: #{tpu_custom_call.1} parent=71 // pred_check
          %p500 = pneg %p181
        $region82: #{tpu_custom_call.1} parent=71 // pred_check_branch
          %502 = sbr.rel (%p500) target = $region84
        $region83: #{tpu_custom_call.1} parent=71 // pred_region
          %503 = dma.done [#allocation6], 18432
        $region84: #{tpu_custom_call.1} parent=71 // pred_fallthru
          _
        // Predicated region
        $region85: #{tpu_custom_call.1} parent=71 // pred_check
          %p504 = pneg %p202
        $region86: #{tpu_custom_call.1} parent=71 // pred_check_branch
          %506 = sbr.rel (%p504) target = $region88
        $region87: #{tpu_custom_call.1} parent=71 // pred_region
          %507 = dma.done [#allocation9], 2048
        $region88: #{tpu_custom_call.1} parent=71 // pred_fallthru
          _
        %s508 = sand.u32 %s56, 1
        %s509 = scalar_lea.sflag [#allocation3], %s508
        %s510 = sand.u32 %s56, 1
        %s511 = smul.addr %s510, 64
        %s512 = scalar_lea.vmem [#allocation2], %s511
        %p513 = pneg %p69
        %p514 = pneg %p66
        %s515 = sand.u32 %s34, 1
        %s516 = scalar_lea.sflag [#allocation6], %s515
        %s517 = sand.u32 %s84, 1
        %s518 = smul.addr %s517, 32
        %s519 = scalar_lea.vmem [#allocation5], %s518
        %p520 = pneg %p97
        %p521 = pneg %p94
        %p522 = pneg %p118
        %p523 = pneg %p115
        %p524 = pneg %p139
        %p525 = pneg %p136
        %p526 = pneg %p160
        %p527 = pneg %p157
        %p528 = pneg %p181
        %p529 = pneg %p178
        %p530 = pneg %p202
        %p531 = pneg %p199
        %p532 = pneg %p223
        %p533 = pneg %p220
        %p534 = pneg %p244
        %p535 = pneg %p241
        %p536 = pneg %p265
        %p537 = pneg %p262
        %p538 = pneg %p286
        %p539 = pneg %p283
        %p540 = pneg %p307
        %p541 = pneg %p304
        %p542 = pneg %p328
        %p543 = pneg %p325
        %p544 = pneg %p356
        %p545 = pneg %p353
        %s546 = sand.u32 %s343, 1
        %s547 = scalar_lea.sflag [#allocation4], %s546
        %s548 = sand.u32 %s343, 1
        %s549 = smul.addr %s548, 64
        %s550 = scalar_lea.vmem [#allocation10], %s549
        %s551 = smul.u32 4, %s39
        %s552 = smul.u32 4, %s39
        %v553 = vld [vmem:[%s486] sm:$0xff]
        %v554 = vld [vmem:[%s486 + $0x8] sm:$0xff]
        %v555 = vld [vmem:[%s486 + $0x10] sm:$0xff]
        %v556 = vld [vmem:[%s486 + $0x18] sm:$0xff]
        %v557 = vld [vmem:[%s486 + $0x20] sm:$0xff]
        %v558 = vld [vmem:[%s486 + $0x28] sm:$0xff]
        %v559 = vld [vmem:[%s486 + $0x30] sm:$0xff]
        %v560 = vld [vmem:[%s486 + $0x38] sm:$0xff]
        %v561 = vld [vmem:[%s495] sm:$0xff]
        %v562 = vld [vmem:[%s495 + $0x8] sm:$0xff]
        %v563 = vld [vmem:[%s495 + $0x10] sm:$0xff]
        %v564 = vld [vmem:[%s495 + $0x18] sm:$0xff]
        %v565 = vld [vmem:[%s4] sm:$0xff]
        %v566 = vld [vmem:[%s4 + $0x8] sm:$0xff]
        %v567 = vld [vmem:[%s4 + $0x10] sm:$0xff]
        %v568 = vld [vmem:[%s4 + $0x18] sm:$0xff]
        %v569 = vld [vmem:[%s4 + $0x20] sm:$0xff]
        %v570 = vld [vmem:[%s4 + $0x28] sm:$0xff]
        %v571 = vld [vmem:[%s4 + $0x30] sm:$0xff]
        %v572 = vld [vmem:[%s4 + $0x38] sm:$0xff]
        %v573 = vld [vmem:[%s4 + $0x40] sm:$0xff]
        %v574 = vld [vmem:[%s4 + $0x48] sm:$0xff]
        %v575 = vld [vmem:[%s4 + $0x50] sm:$0xff]
        %v576 = vld [vmem:[%s4 + $0x58] sm:$0xff]
        %v577 = vld [vmem:[%s4 + $0x60] sm:$0xff]
        %v578 = vld [vmem:[%s4 + $0x68] sm:$0xff]
        %v579 = vld [vmem:[%s4 + $0x70] sm:$0xff]
        %v580 = vld [vmem:[%s4 + $0x78] sm:$0xff]
        %581 = vmatprep.subr.mxu0 0.0
        %582 = vmatpush1.msra.mxu0 %v580
        %583 = vmatprep.subr.mxu0 0.0
        %584 = vmatpush1.msra.mxu0 %v579
        %585 = vmatprep.subr.mxu0 0.0
        %586 = vmatpush1.msra.mxu0 %v578
        %587 = vmatprep.subr.mxu0 0.0
        %588 = vmatpush1.msra.mxu0 %v577
        %589 = vmatprep.subr.mxu0 0.0
        %590 = vmatpush1.msra.mxu0 %v576
        %591 = vmatprep.subr.mxu0 0.0
        %592 = vmatpush1.msra.mxu0 %v575
        %593 = vmatprep.subr.mxu0 0.0
        %594 = vmatpush1.msra.mxu0 %v574
        %595 = vmatprep.subr.mxu0 0.0
        %596 = vmatpush1.msra.mxu0 %v573
        %597 = vmatprep.subr.mxu0 0.0
        %598 = vmatpush1.msra.mxu0 %v572
        %599 = vmatprep.subr.mxu0 0.0
        %600 = vmatpush1.msra.mxu0 %v571
        %601 = vmatprep.subr.mxu0 0.0
        %602 = vmatpush1.msra.mxu0 %v570
        %603 = vmatprep.subr.mxu0 0.0
        %604 = vmatpush1.msra.mxu0 %v569
        %605 = vmatprep.subr.mxu0 0.0
        %606 = vmatpush1.msra.mxu0 %v568
        %607 = vmatprep.subr.mxu0 0.0
        %608 = vmatpush1.msra.mxu0 %v567
        %609 = vmatprep.subr.mxu0 0.0
        %610 = vmatpush1.msra.mxu0 %v566
        %611 = vmatprep.subr.mxu0 0.0
        %612 = vmatpush1.msra.mxu0 %v565
        %613 = vmatprep.subr.mxu0 0.0
        %614 = vmatpush2.msra.mxu0 0.0
        %615 = vmatprep.subr.mxu0 0.0
        %616 = vmatpush2.msra.mxu0 0.0
        %617 = vmatprep.subr.mxu0 0.0
        %618 = vmatpush2.msra.mxu0 0.0
        %619 = vmatprep.subr.mxu0 0.0
        %620 = vmatpush2.msra.mxu0 0.0
        %621 = vmatprep.subr.mxu0 0.0
        %622 = vmatpush2.msra.mxu0 0.0
        %623 = vmatprep.subr.mxu0 0.0
        %624 = vmatpush2.msra.mxu0 0.0
        %625 = vmatprep.subr.mxu0 0.0
        %626 = vmatpush2.msra.mxu0 0.0
        %627 = vmatprep.subr.mxu0 0.0
        %628 = vmatpush2.msra.mxu0 0.0
        %629 = vmatprep.subr.mxu0 0.0
        %630 = vmatpush2.msra.mxu0 0.0
        %631 = vmatprep.subr.mxu0 0.0
        %632 = vmatpush2.msra.mxu0 0.0
        %633 = vmatprep.subr.mxu0 0.0
        %634 = vmatpush2.msra.mxu0 0.0
        %635 = vmatprep.subr.mxu0 0.0
        %636 = vmatpush2.msra.mxu0 0.0
        %637 = vmatprep.subr.mxu0 0.0
        %638 = vmatpush2.msra.mxu0 0.0
        %639 = vmatprep.subr.mxu0 0.0
        %640 = vmatpush2.msra.mxu0 0.0
        %641 = vmatprep.subr.mxu0 0.0
        %642 = vmatpush2.msra.mxu0 0.0
        %643 = vmatprep.subr.mxu0 0.0
        %644 = vmatpush2.msra.mxu0 0.0
        %645 = vmatprep.mubr.f32.mxu0 0.0
        %646 = vmatmul.mubr.f32.gmra.mxu0 %v553
        %v647 = vpop.f32.mrf.mxu0
        %v648 = vadd.f32 0.0, %v647
        %v649 = vpop.f32.mrf.mxu0
        %650 = vmatprep.mubr.f32.mxu0 0.0
        %651 = vmatmul.mubr.f32.gmra.mxu0 %v554
        %v652 = vpop.f32.mrf.mxu0
        %v653 = vadd.f32 0.0, %v652
        %v654 = vpop.f32.mrf.mxu0
        %655 = vmatprep.mubr.f32.mxu0 0.0
        %656 = vmatmul.mubr.f32.gmra.mxu0 %v555
        %v657 = vpop.f32.mrf.mxu0
        %v658 = vadd.f32 0.0, %v657
        %v659 = vpop.f32.mrf.mxu0
        %660 = vmatprep.mubr.f32.mxu0 0.0
        %661 = vmatmul.mubr.f32.gmra.mxu0 %v556
        %v662 = vpop.f32.mrf.mxu0
        %v663 = vadd.f32 0.0, %v662
        %v664 = vpop.f32.mrf.mxu0
        %665 = vmatprep.mubr.f32.mxu0 0.0
        %666 = vmatmul.mubr.f32.gmra.mxu0 %v557
        %v667 = vpop.f32.mrf.mxu0
        %v668 = vadd.f32 0.0, %v667
        %v669 = vpop.f32.mrf.mxu0
        %670 = vmatprep.mubr.f32.mxu0 0.0
        %671 = vmatmul.mubr.f32.gmra.mxu0 %v558
        %v672 = vpop.f32.mrf.mxu0
        %v673 = vadd.f32 0.0, %v672
        %v674 = vpop.f32.mrf.mxu0
        %675 = vmatprep.mubr.f32.mxu0 0.0
        %676 = vmatmul.mubr.f32.gmra.mxu0 %v559
        %v677 = vpop.f32.mrf.mxu0
        %v678 = vadd.f32 0.0, %v677
        %v679 = vpop.f32.mrf.mxu0
        %680 = vmatprep.mubr.f32.mxu0 0.0
        %681 = vmatmul.mubr.f32.gmra.mxu0 %v560
        %v682 = vpop.f32.mrf.mxu0
        %v683 = vadd.f32 0.0, %v682
        %v684 = vpop.f32.mrf.mxu0
        %685 = vdwg.mxu0
        %v686 = vld [vmem:[%s7] sm:$0x1]
        %v688 = vlaneseq
        %v689 = vshrl.u32 %v688, 7
        %v690 = vsub.s32 0, %v689
        %v691 = vrot.slane %v686, %v690
        %v693 = vmul.f32 %v648, %v691
        %v694 = vmul.f32 %v653, %v691
        %v695 = vmul.f32 %v658, %v691
        %v696 = vmul.f32 %v663, %v691
        %v697 = vmul.f32 %v668, %v691
        %v698 = vmul.f32 %v673, %v691
        %v699 = vmul.f32 %v678, %v691
        %v700 = vmul.f32 %v683, %v691
        %v701 = vld [vmem:[%s8] sm:$0x1]
        %v703 = vlaneseq
        %v704 = vshrl.u32 %v703, 7
        %v705 = vsub.s32 0, %v704
        %v706 = vrot.slane %v701, %v705
        %v708 = vadd.f32 %v693, %v706
        %v709 = vadd.f32 %v694, %v706
        %v710 = vadd.f32 %v695, %v706
        %v711 = vadd.f32 %v696, %v706
        %v712 = vadd.f32 %v697, %v706
        %v713 = vadd.f32 %v698, %v706
        %v714 = vadd.f32 %v699, %v706
        %v715 = vadd.f32 %v700, %v706
        %v716 = vmax.f32 %v708, 0.0
        %v717 = vmax.f32 %v709, 0.0
        %v718 = vmax.f32 %v710, 0.0
        %v719 = vmax.f32 %v711, 0.0
        %v720 = vmax.f32 %v712, 0.0
        %v721 = vmax.f32 %v713, 0.0
        %v722 = vmax.f32 %v714, 0.0
        %v723 = vmax.f32 %v715, 0.0
        %724 = vmatprep.subr.mxu0 0.0
        %725 = vmatpush1.msra.mxu0 %v580
        %726 = vmatprep.subr.mxu0 0.0
        %727 = vmatpush1.msra.mxu0 %v579
        %728 = vmatprep.subr.mxu0 0.0
        %729 = vmatpush1.msra.mxu0 %v578
        %730 = vmatprep.subr.mxu0 0.0
        %731 = vmatpush1.msra.mxu0 %v577
        %732 = vmatprep.subr.mxu0 0.0
        %733 = vmatpush1.msra.mxu0 %v576
        %734 = vmatprep.subr.mxu0 0.0
        %735 = vmatpush1.msra.mxu0 %v575
        %736 = vmatprep.subr.mxu0 0.0
        %737 = vmatpush1.msra.mxu0 %v574
        %738 = vmatprep.subr.mxu0 0.0
        %739 = vmatpush1.msra.mxu0 %v573
        %740 = vmatprep.subr.mxu0 0.0
        %741 = vmatpush1.msra.mxu0 %v572
        %742 = vmatprep.subr.mxu0 0.0
        %743 = vmatpush1.msra.mxu0 %v571
        %744 = vmatprep.subr.mxu0 0.0
        %745 = vmatpush1.msra.mxu0 %v570
        %746 = vmatprep.subr.mxu0 0.0
        %747 = vmatpush1.msra.mxu0 %v569
        %748 = vmatprep.subr.mxu0 0.0
        %749 = vmatpush1.msra.mxu0 %v568
        %750 = vmatprep.subr.mxu0 0.0
        %751 = vmatpush1.msra.mxu0 %v567
        %752 = vmatprep.subr.mxu0 0.0
        %753 = vmatpush1.msra.mxu0 %v566
        %754 = vmatprep.subr.mxu0 0.0
        %755 = vmatpush1.msra.mxu0 %v565
        %756 = vmatprep.subr.mxu0 0.0
        %757 = vmatpush2.msra.mxu0 0.0
        %758 = vmatprep.subr.mxu0 0.0
        %759 = vmatpush2.msra.mxu0 0.0
        %760 = vmatprep.subr.mxu0 0.0
        %761 = vmatpush2.msra.mxu0 0.0
        %762 = vmatprep.subr.mxu0 0.0
        %763 = vmatpush2.msra.mxu0 0.0
        %764 = vmatprep.subr.mxu0 0.0
        %765 = vmatpush2.msra.mxu0 0.0
        %766 = vmatprep.subr.mxu0 0.0
        %767 = vmatpush2.msra.mxu0 0.0
        %768 = vmatprep.subr.mxu0 0.0
        %769 = vmatpush2.msra.mxu0 0.0
        %770 = vmatprep.subr.mxu0 0.0
        %771 = vmatpush2.msra.mxu0 0.0
        %772 = vmatprep.subr.mxu0 0.0
        %773 = vmatpush2.msra.mxu0 0.0
        %774 = vmatprep.subr.mxu0 0.0
        %775 = vmatpush2.msra.mxu0 0.0
        %776 = vmatprep.subr.mxu0 0.0
        %777 = vmatpush2.msra.mxu0 0.0
        %778 = vmatprep.subr.mxu0 0.0
        %779 = vmatpush2.msra.mxu0 0.0
        %780 = vmatprep.subr.mxu0 0.0
        %781 = vmatpush2.msra.mxu0 0.0
        %782 = vmatprep.subr.mxu0 0.0
        %783 = vmatpush2.msra.mxu0 0.0
        %784 = vmatprep.subr.mxu0 0.0
        %785 = vmatpush2.msra.mxu0 0.0
        %786 = vmatprep.subr.mxu0 0.0
        %787 = vmatpush2.msra.mxu0 0.0
        %788 = vmatprep.mubr.f32.mxu0 0.0
        %789 = vmatmul.mubr.f32.gmra.mxu0 %v561
        %v790 = vpop.f32.mrf.mxu0
        %v791 = vadd.f32 0.0, %v790
        %v792 = vpop.f32.mrf.mxu0
        %793 = vmatprep.mubr.f32.mxu0 0.0
        %794 = vmatmul.mubr.f32.gmra.mxu0 %v562
        %v795 = vpop.f32.mrf.mxu0
        %v796 = vadd.f32 0.0, %v795
        %v797 = vpop.f32.mrf.mxu0
        %798 = vmatprep.mubr.f32.mxu0 0.0
        %799 = vmatmul.mubr.f32.gmra.mxu0 %v563
        %v800 = vpop.f32.mrf.mxu0
        %v801 = vadd.f32 0.0, %v800
        %v802 = vpop.f32.mrf.mxu0
        %803 = vmatprep.mubr.f32.mxu0 0.0
        %804 = vmatmul.mubr.f32.gmra.mxu0 %v564
        %v805 = vpop.f32.mrf.mxu0
        %v806 = vadd.f32 0.0, %v805
        %v807 = vpop.f32.mrf.mxu0
        %808 = vdwg.mxu0
        %v809 = vmul.f32 %v791, %v691
        %v810 = vmul.f32 %v796, %v691
        %v811 = vmul.f32 %v801, %v691
        %v812 = vmul.f32 %v806, %v691
        %v813 = vadd.f32 %v809, %v706
        %v814 = vadd.f32 %v810, %v706
        %v815 = vadd.f32 %v811, %v706
        %v816 = vadd.f32 %v812, %v706
        %v817 = vmax.f32 %v813, 0.0
        %v818 = vmax.f32 %v814, 0.0
        %v819 = vmax.f32 %v815, 0.0
        %v820 = vmax.f32 %v816, 0.0
        %p821 = scmp.gt.s32.totalorder %s39, 0
        %s822 = scalar_select %p821, 1, 0
        %s823 = scvt.s32.f32 %s822
        %v824 = vstv %s823
        %v825 = vmul.f32 %v817, %v824
        %v826 = vmul.f32 %v818, %v824
        %p827 = scmp.lt.s32.totalorder %s39, 3
        %s828 = scalar_select %p827, 1, 0
        %s829 = scvt.s32.f32 %s828
        %v830 = vstv %s829
        %v831 = vmul.f32 %v819, %v830
        %v832 = vmul.f32 %v820, %v830
        %vm845 = vcmask 1040384
        %v846 = vrot.slane %v825, 7
        %v847 = vrot.slane %v826, 7
        %v848 = vsel %vm845, %v846, %v847
        %v849 = vrot.slane %v716, 7
        %v850 = vsel %vm845, %v847, %v849
        %v851 = vrot.slane %v717, 7
        %v852 = vsel %vm845, %v849, %v851
        %v853 = vrot.slane %v718, 7
        %v854 = vsel %vm845, %v851, %v853
        %v855 = vrot.slane %v719, 7
        %v856 = vsel %vm845, %v853, %v855
        %v857 = vrot.slane %v720, 7
        %v858 = vsel %vm845, %v855, %v857
        %v859 = vrot.slane %v721, 7
        %v860 = vsel %vm845, %v857, %v859
        %v861 = vrot.slane %v722, 7
        %v862 = vsel %vm845, %v859, %v861
        %v863 = vrot.slane %v723, 7
        %v864 = vsel %vm845, %v861, %v863
        %v865 = vrot.slane %v831, 7
        %v866 = vsel %vm845, %v863, %v865
        %v867 = vrot.slane %v832, 7
        %v868 = vsel %vm845, %v865, %v867
        %v881 = vsel %vm845, 0.0, %v846
        %v882 = vld [vmem:[%s2] sm:$0xff]
        %v883 = vld [vmem:[%s2 + $0x8] sm:$0xff]
        %v884 = vld [vmem:[%s2 + $0x10] sm:$0xff]
        %v885 = vld [vmem:[%s2 + $0x18] sm:$0xff]
        %v886 = vld [vmem:[%s2 + $0x20] sm:$0xff]
        %v887 = vld [vmem:[%s2 + $0x28] sm:$0xff]
        %v888 = vld [vmem:[%s2 + $0x30] sm:$0xff]
        %v889 = vld [vmem:[%s2 + $0x38] sm:$0xff]
        %v890 = vld [vmem:[%s2 + $0x40] sm:$0xff]
        %v891 = vld [vmem:[%s2 + $0x48] sm:$0xff]
        %v892 = vld [vmem:[%s2 + $0x50] sm:$0xff]
        %v893 = vld [vmem:[%s2 + $0x58] sm:$0xff]
        %895 = vset.pattern.permute.xlu0 0
        %896 = vperm.xlu0 %895, %v882
        %v897 = vpop.permute.xlu0 %896
        %900 = vset.pattern.permute.xlu0 0
        %901 = vperm.xlu0 %900, %v883
        %v902 = vpop.permute.xlu0 %901
        %905 = vset.pattern.permute.xlu0 0
        %906 = vperm.xlu0 %905, %v884
        %v907 = vpop.permute.xlu0 %906
        %910 = vset.pattern.permute.xlu0 0
        %911 = vperm.xlu0 %910, %v885
        %v912 = vpop.permute.xlu0 %911
        %915 = vset.pattern.permute.xlu0 0
        %916 = vperm.xlu0 %915, %v886
        %v917 = vpop.permute.xlu0 %916
        %920 = vset.pattern.permute.xlu0 0
        %921 = vperm.xlu0 %920, %v887
        %v922 = vpop.permute.xlu0 %921
        %925 = vset.pattern.permute.xlu0 0
        %926 = vperm.xlu0 %925, %v888
        %v927 = vpop.permute.xlu0 %926
        %930 = vset.pattern.permute.xlu0 0
        %931 = vperm.xlu0 %930, %v889
        %v932 = vpop.permute.xlu0 %931
        %935 = vset.pattern.permute.xlu0 0
        %936 = vperm.xlu0 %935, %v890
        %v937 = vpop.permute.xlu0 %936
        %940 = vset.pattern.permute.xlu0 0
        %941 = vperm.xlu0 %940, %v891
        %v942 = vpop.permute.xlu0 %941
        %945 = vset.pattern.permute.xlu0 0
        %946 = vperm.xlu0 %945, %v892
        %v947 = vpop.permute.xlu0 %946
        %950 = vset.pattern.permute.xlu0 0
        %951 = vperm.xlu0 %950, %v893
        %v952 = vpop.permute.xlu0 %951
        %v954 = vmul.f32 %v881, %v897
        %v955 = vmul.f32 %v848, %v902
        %v956 = vmul.f32 %v850, %v907
        %v957 = vmul.f32 %v852, %v912
        %v958 = vmul.f32 %v854, %v917
        %v959 = vmul.f32 %v856, %v922
        %v960 = vmul.f32 %v858, %v927
        %v961 = vmul.f32 %v860, %v932
        %v962 = vmul.f32 %v862, %v937
        %v963 = vmul.f32 %v864, %v942
        %v964 = vmul.f32 %v866, %v947
        %v965 = vmul.f32 %v868, %v952
        %vm966 = vcmask 1046528
        %v967 = vrot.slane %v825, 1
        %v968 = vrot.slane %v826, 1
        %v969 = vsel %vm966, %v967, %v968
        %v970 = vrot.slane %v716, 1
        %v971 = vsel %vm966, %v968, %v970
        %v972 = vrot.slane %v717, 1
        %v973 = vsel %vm966, %v970, %v972
        %v974 = vrot.slane %v718, 1
        %v975 = vsel %vm966, %v972, %v974
        %v976 = vrot.slane %v719, 1
        %v977 = vsel %vm966, %v974, %v976
        %v978 = vrot.slane %v720, 1
        %v979 = vsel %vm966, %v976, %v978
        %v980 = vrot.slane %v721, 1
        %v981 = vsel %vm966, %v978, %v980
        %v982 = vrot.slane %v722, 1
        %v983 = vsel %vm966, %v980, %v982
        %v984 = vrot.slane %v723, 1
        %v985 = vsel %vm966, %v982, %v984
        %v986 = vrot.slane %v831, 1
        %v987 = vsel %vm966, %v984, %v986
        %v988 = vrot.slane %v832, 1
        %v989 = vsel %vm966, %v986, %v988
        %v1002 = vsel %vm966, %v988, 0.0
        %v1003 = vld [vmem:[%s3] sm:$0xff]
        %v1004 = vld [vmem:[%s3 + $0x8] sm:$0xff]
        %v1005 = vld [vmem:[%s3 + $0x10] sm:$0xff]
        %v1006 = vld [vmem:[%s3 + $0x18] sm:$0xff]
        %v1007 = vld [vmem:[%s3 + $0x20] sm:$0xff]
        %v1008 = vld [vmem:[%s3 + $0x28] sm:$0xff]
        %v1009 = vld [vmem:[%s3 + $0x30] sm:$0xff]
        %v1010 = vld [vmem:[%s3 + $0x38] sm:$0xff]
        %v1011 = vld [vmem:[%s3 + $0x40] sm:$0xff]
        %v1012 = vld [vmem:[%s3 + $0x48] sm:$0xff]
        %v1013 = vld [vmem:[%s3 + $0x50] sm:$0xff]
        %v1014 = vld [vmem:[%s3 + $0x58] sm:$0xff]
        %1016 = vset.pattern.permute.xlu0 0
        %1017 = vperm.xlu0 %1016, %v1003
        %v1018 = vpop.permute.xlu0 %1017
        %1021 = vset.pattern.permute.xlu0 0
        %1022 = vperm.xlu0 %1021, %v1004
        %v1023 = vpop.permute.xlu0 %1022
        %1026 = vset.pattern.permute.xlu0 0
        %1027 = vperm.xlu0 %1026, %v1005
        %v1028 = vpop.permute.xlu0 %1027
        %1031 = vset.pattern.permute.xlu0 0
        %1032 = vperm.xlu0 %1031, %v1006
        %v1033 = vpop.permute.xlu0 %1032
        %1036 = vset.pattern.permute.xlu0 0
        %1037 = vperm.xlu0 %1036, %v1007
        %v1038 = vpop.permute.xlu0 %1037
        %1041 = vset.pattern.permute.xlu0 0
        %1042 = vperm.xlu0 %1041, %v1008
        %v1043 = vpop.permute.xlu0 %1042
        %1046 = vset.pattern.permute.xlu0 0
        %1047 = vperm.xlu0 %1046, %v1009
        %v1048 = vpop.permute.xlu0 %1047
        %1051 = vset.pattern.permute.xlu0 0
        %1052 = vperm.xlu0 %1051, %v1010
        %v1053 = vpop.permute.xlu0 %1052
        %1056 = vset.pattern.permute.xlu0 0
        %1057 = vperm.xlu0 %1056, %v1011
        %v1058 = vpop.permute.xlu0 %1057
        %1061 = vset.pattern.permute.xlu0 0
        %1062 = vperm.xlu0 %1061, %v1012
        %v1063 = vpop.permute.xlu0 %1062
        %1066 = vset.pattern.permute.xlu0 0
        %1067 = vperm.xlu0 %1066, %v1013
        %v1068 = vpop.permute.xlu0 %1067
        %1071 = vset.pattern.permute.xlu0 0
        %1072 = vperm.xlu0 %1071, %v1014
        %v1073 = vpop.permute.xlu0 %1072
        %v1075 = vmul.f32 %v969, %v1018
        %v1076 = vmul.f32 %v971, %v1023
        %v1077 = vmul.f32 %v973, %v1028
        %v1078 = vmul.f32 %v975, %v1033
        %v1079 = vmul.f32 %v977, %v1038
        %v1080 = vmul.f32 %v979, %v1043
        %v1081 = vmul.f32 %v981, %v1048
        %v1082 = vmul.f32 %v983, %v1053
        %v1083 = vmul.f32 %v985, %v1058
        %v1084 = vmul.f32 %v987, %v1063
        %v1085 = vmul.f32 %v989, %v1068
        %v1086 = vmul.f32 %v1002, %v1073
        %v1087 = vld [vmem:[#allocation7] sm:$0xff]
        %v1088 = vld [vmem:[#allocation7 + $0x8] sm:$0xff]
        %v1089 = vld [vmem:[#allocation7 + $0x10] sm:$0xff]
        %v1090 = vld [vmem:[#allocation7 + $0x18] sm:$0xff]
        %v1091 = vld [vmem:[#allocation7 + $0x20] sm:$0xff]
        %v1092 = vld [vmem:[#allocation7 + $0x28] sm:$0xff]
        %v1093 = vld [vmem:[#allocation7 + $0x30] sm:$0xff]
        %v1094 = vld [vmem:[#allocation7 + $0x38] sm:$0xff]
        %v1095 = vld [vmem:[#allocation7 + $0x40] sm:$0xff]
        %v1096 = vld [vmem:[#allocation7 + $0x48] sm:$0xff]
        %v1097 = vld [vmem:[#allocation7 + $0x50] sm:$0xff]
        %v1098 = vld [vmem:[#allocation7 + $0x58] sm:$0xff]
        %v1099 = vld [vmem:[#allocation7 + $0x60] sm:$0xff]
        %v1100 = vld [vmem:[#allocation7 + $0x68] sm:$0xff]
        %v1101 = vld [vmem:[#allocation7 + $0x70] sm:$0xff]
        %v1102 = vld [vmem:[#allocation7 + $0x78] sm:$0xff]
        %s1103 = scalar_lea.vmem [#allocation7], 128
        %v1104 = vld [vmem:[%s1103] sm:$0xff]
        %v1105 = vld [vmem:[%s1103 + $0x8] sm:$0xff]
        %v1106 = vld [vmem:[%s1103 + $0x10] sm:$0xff]
        %v1107 = vld [vmem:[%s1103 + $0x18] sm:$0xff]
        %v1108 = vld [vmem:[%s1103 + $0x20] sm:$0xff]
        %v1109 = vld [vmem:[%s1103 + $0x28] sm:$0xff]
        %v1110 = vld [vmem:[%s1103 + $0x30] sm:$0xff]
        %v1111 = vld [vmem:[%s1103 + $0x38] sm:$0xff]
        %v1112 = vld [vmem:[%s1103 + $0x40] sm:$0xff]
        %v1113 = vld [vmem:[%s1103 + $0x48] sm:$0xff]
        %v1114 = vld [vmem:[%s1103 + $0x50] sm:$0xff]
        %v1115 = vld [vmem:[%s1103 + $0x58] sm:$0xff]
        %v1116 = vld [vmem:[%s1103 + $0x60] sm:$0xff]
        %v1117 = vld [vmem:[%s1103 + $0x68] sm:$0xff]
        %v1118 = vld [vmem:[%s1103 + $0x70] sm:$0xff]
        %v1119 = vld [vmem:[%s1103 + $0x78] sm:$0xff]
        %1120 = vmatprep.subr.mxu0 0.0
        %1121 = vmatpush1.msra.mxu0 %v1119
        %1122 = vmatprep.subr.mxu0 0.0
        %1123 = vmatpush1.msra.mxu0 %v1118
        %1124 = vmatprep.subr.mxu0 0.0
        %1125 = vmatpush1.msra.mxu0 %v1117
        %1126 = vmatprep.subr.mxu0 0.0
        %1127 = vmatpush1.msra.mxu0 %v1116
        %1128 = vmatprep.subr.mxu0 0.0
        %1129 = vmatpush1.msra.mxu0 %v1115
        %1130 = vmatprep.subr.mxu0 0.0
        %1131 = vmatpush1.msra.mxu0 %v1114
        %1132 = vmatprep.subr.mxu0 0.0
        %1133 = vmatpush1.msra.mxu0 %v1113
        %1134 = vmatprep.subr.mxu0 0.0
        %1135 = vmatpush1.msra.mxu0 %v1112
        %1136 = vmatprep.subr.mxu0 0.0
        %1137 = vmatpush1.msra.mxu0 %v1111
        %1138 = vmatprep.subr.mxu0 0.0
        %1139 = vmatpush1.msra.mxu0 %v1110
        %1140 = vmatprep.subr.mxu0 0.0
        %1141 = vmatpush1.msra.mxu0 %v1109
        %1142 = vmatprep.subr.mxu0 0.0
        %1143 = vmatpush1.msra.mxu0 %v1108
        %1144 = vmatprep.subr.mxu0 0.0
        %1145 = vmatpush1.msra.mxu0 %v1107
        %1146 = vmatprep.subr.mxu0 0.0
        %1147 = vmatpush1.msra.mxu0 %v1106
        %1148 = vmatprep.subr.mxu0 0.0
        %1149 = vmatpush1.msra.mxu0 %v1105
        %1150 = vmatprep.subr.mxu0 0.0
        %1151 = vmatpush1.msra.mxu0 %v1104
        %1152 = vmatprep.subr.mxu0 0.0
        %1153 = vmatpush2.msra.mxu0 0.0
        %1154 = vmatprep.subr.mxu0 0.0
        %1155 = vmatpush2.msra.mxu0 0.0
        %1156 = vmatprep.subr.mxu0 0.0
        %1157 = vmatpush2.msra.mxu0 0.0
        %1158 = vmatprep.subr.mxu0 0.0
        %1159 = vmatpush2.msra.mxu0 0.0
        %1160 = vmatprep.subr.mxu0 0.0
        %1161 = vmatpush2.msra.mxu0 0.0
        %1162 = vmatprep.subr.mxu0 0.0
        %1163 = vmatpush2.msra.mxu0 0.0
        %1164 = vmatprep.subr.mxu0 0.0
        %1165 = vmatpush2.msra.mxu0 0.0
        %1166 = vmatprep.subr.mxu0 0.0
        %1167 = vmatpush2.msra.mxu0 0.0
        %1168 = vmatprep.subr.mxu0 0.0
        %1169 = vmatpush2.msra.mxu0 0.0
        %1170 = vmatprep.subr.mxu0 0.0
        %1171 = vmatpush2.msra.mxu0 0.0
        %1172 = vmatprep.subr.mxu0 0.0
        %1173 = vmatpush2.msra.mxu0 0.0
        %1174 = vmatprep.subr.mxu0 0.0
        %1175 = vmatpush2.msra.mxu0 0.0
        %1176 = vmatprep.subr.mxu0 0.0
        %1177 = vmatpush2.msra.mxu0 0.0
        %1178 = vmatprep.subr.mxu0 0.0
        %1179 = vmatpush2.msra.mxu0 0.0
        %1180 = vmatprep.subr.mxu0 0.0
        %1181 = vmatpush2.msra.mxu0 0.0
        %1182 = vmatprep.subr.mxu0 0.0
        %1183 = vmatpush2.msra.mxu0 0.0
        %1184 = vmatprep.mubr.f32.mxu0 0.0
        %1185 = vmatmul.mubr.f32.gmra.mxu0 %v825
        %v1186 = vpop.f32.mrf.mxu0
        %v1187 = vadd.f32 0.0, %v1186
        %v1188 = vpop.f32.mrf.mxu0
        %1189 = vmatprep.mubr.f32.mxu0 0.0
        %1190 = vmatmul.mubr.f32.gmra.mxu0 %v826
        %v1191 = vpop.f32.mrf.mxu0
        %v1192 = vadd.f32 0.0, %v1191
        %v1193 = vpop.f32.mrf.mxu0
        %1194 = vmatprep.mubr.f32.mxu0 0.0
        %1195 = vmatmul.mubr.f32.gmra.mxu0 %v716
        %v1196 = vpop.f32.mrf.mxu0
        %v1197 = vadd.f32 0.0, %v1196
        %v1198 = vpop.f32.mrf.mxu0
        %1199 = vmatprep.mubr.f32.mxu0 0.0
        %1200 = vmatmul.mubr.f32.gmra.mxu0 %v717
        %v1201 = vpop.f32.mrf.mxu0
        %v1202 = vadd.f32 0.0, %v1201
        %v1203 = vpop.f32.mrf.mxu0
        %1204 = vmatprep.mubr.f32.mxu0 0.0
        %1205 = vmatmul.mubr.f32.gmra.mxu0 %v718
        %v1206 = vpop.f32.mrf.mxu0
        %v1207 = vadd.f32 0.0, %v1206
        %v1208 = vpop.f32.mrf.mxu0
        %1209 = vmatprep.mubr.f32.mxu0 0.0
        %1210 = vmatmul.mubr.f32.gmra.mxu0 %v719
        %v1211 = vpop.f32.mrf.mxu0
        %v1212 = vadd.f32 0.0, %v1211
        %v1213 = vpop.f32.mrf.mxu0
        %1214 = vmatprep.mubr.f32.mxu0 0.0
        %1215 = vmatmul.mubr.f32.gmra.mxu0 %v720
        %v1216 = vpop.f32.mrf.mxu0
        %v1217 = vadd.f32 0.0, %v1216
        %v1218 = vpop.f32.mrf.mxu0
        %1219 = vmatprep.mubr.f32.mxu0 0.0
        %1220 = vmatmul.mubr.f32.gmra.mxu0 %v721
        %v1221 = vpop.f32.mrf.mxu0
        %v1222 = vadd.f32 0.0, %v1221
        %v1223 = vpop.f32.mrf.mxu0
        %1224 = vdwg.mxu0
        %1225 = vmatprep.subr.mxu0 0.0
        %1226 = vmatpush1.msra.mxu0 %v1102
        %1227 = vmatprep.subr.mxu0 0.0
        %1228 = vmatpush1.msra.mxu0 %v1101
        %1229 = vmatprep.subr.mxu0 0.0
        %1230 = vmatpush1.msra.mxu0 %v1100
        %1231 = vmatprep.subr.mxu0 0.0
        %1232 = vmatpush1.msra.mxu0 %v1099
        %1233 = vmatprep.subr.mxu0 0.0
        %1234 = vmatpush1.msra.mxu0 %v1098
        %1235 = vmatprep.subr.mxu0 0.0
        %1236 = vmatpush1.msra.mxu0 %v1097
        %1237 = vmatprep.subr.mxu0 0.0
        %1238 = vmatpush1.msra.mxu0 %v1096
        %1239 = vmatprep.subr.mxu0 0.0
        %1240 = vmatpush1.msra.mxu0 %v1095
        %1241 = vmatprep.subr.mxu0 0.0
        %1242 = vmatpush1.msra.mxu0 %v1094
        %1243 = vmatprep.subr.mxu0 0.0
        %1244 = vmatpush1.msra.mxu0 %v1093
        %1245 = vmatprep.subr.mxu0 0.0
        %1246 = vmatpush1.msra.mxu0 %v1092
        %1247 = vmatprep.subr.mxu0 0.0
        %1248 = vmatpush1.msra.mxu0 %v1091
        %1249 = vmatprep.subr.mxu0 0.0
        %1250 = vmatpush1.msra.mxu0 %v1090
        %1251 = vmatprep.subr.mxu0 0.0
        %1252 = vmatpush1.msra.mxu0 %v1089
        %1253 = vmatprep.subr.mxu0 0.0
        %1254 = vmatpush1.msra.mxu0 %v1088
        %1255 = vmatprep.subr.mxu0 0.0
        %1256 = vmatpush1.msra.mxu0 %v1087
        %1257 = vmatprep.subr.mxu0 0.0
        %1258 = vmatpush2.msra.mxu0 0.0
        %1259 = vmatprep.subr.mxu0 0.0
        %1260 = vmatpush2.msra.mxu0 0.0
        %1261 = vmatprep.subr.mxu0 0.0
        %1262 = vmatpush2.msra.mxu0 0.0
        %1263 = vmatprep.subr.mxu0 0.0
        %1264 = vmatpush2.msra.mxu0 0.0
        %1265 = vmatprep.subr.mxu0 0.0
        %1266 = vmatpush2.msra.mxu0 0.0
        %1267 = vmatprep.subr.mxu0 0.0
        %1268 = vmatpush2.msra.mxu0 0.0
        %1269 = vmatprep.subr.mxu0 0.0
        %1270 = vmatpush2.msra.mxu0 0.0
        %1271 = vmatprep.subr.mxu0 0.0
        %1272 = vmatpush2.msra.mxu0 0.0
        %1273 = vmatprep.subr.mxu0 0.0
        %1274 = vmatpush2.msra.mxu0 0.0
        %1275 = vmatprep.subr.mxu0 0.0
        %1276 = vmatpush2.msra.mxu0 0.0
        %1277 = vmatprep.subr.mxu0 0.0
        %1278 = vmatpush2.msra.mxu0 0.0
        %1279 = vmatprep.subr.mxu0 0.0
        %1280 = vmatpush2.msra.mxu0 0.0
        %1281 = vmatprep.subr.mxu0 0.0
        %1282 = vmatpush2.msra.mxu0 0.0
        %1283 = vmatprep.subr.mxu0 0.0
        %1284 = vmatpush2.msra.mxu0 0.0
        %1285 = vmatprep.subr.mxu0 0.0
        %1286 = vmatpush2.msra.mxu0 0.0
        %1287 = vmatprep.subr.mxu0 0.0
        %1288 = vmatpush2.msra.mxu0 0.0
        %1289 = vmatprep.mubr.f32.mxu0 0.0
        %1290 = vmatmul.mubr.f32.gmra.mxu0 %v954
        %v1291 = vpop.f32.mrf.mxu0
        %v1292 = vadd.f32 %v1187, %v1291
        %v1293 = vpop.f32.mrf.mxu0
        %1294 = vmatprep.mubr.f32.mxu0 0.0
        %1295 = vmatmul.mubr.f32.gmra.mxu0 %v955
        %v1296 = vpop.f32.mrf.mxu0
        %v1297 = vadd.f32 %v1192, %v1296
        %v1298 = vpop.f32.mrf.mxu0
        %1299 = vmatprep.mubr.f32.mxu0 0.0
        %1300 = vmatmul.mubr.f32.gmra.mxu0 %v956
        %v1301 = vpop.f32.mrf.mxu0
        %v1302 = vadd.f32 %v1197, %v1301
        %v1303 = vpop.f32.mrf.mxu0
        %1304 = vmatprep.mubr.f32.mxu0 0.0
        %1305 = vmatmul.mubr.f32.gmra.mxu0 %v957
        %v1306 = vpop.f32.mrf.mxu0
        %v1307 = vadd.f32 %v1202, %v1306
        %v1308 = vpop.f32.mrf.mxu0
        %1309 = vmatprep.mubr.f32.mxu0 0.0
        %1310 = vmatmul.mubr.f32.gmra.mxu0 %v958
        %v1311 = vpop.f32.mrf.mxu0
        %v1312 = vadd.f32 %v1207, %v1311
        %v1313 = vpop.f32.mrf.mxu0
        %1314 = vmatprep.mubr.f32.mxu0 0.0
        %1315 = vmatmul.mubr.f32.gmra.mxu0 %v959
        %v1316 = vpop.f32.mrf.mxu0
        %v1317 = vadd.f32 %v1212, %v1316
        %v1318 = vpop.f32.mrf.mxu0
        %1319 = vmatprep.mubr.f32.mxu0 0.0
        %1320 = vmatmul.mubr.f32.gmra.mxu0 %v960
        %v1321 = vpop.f32.mrf.mxu0
        %v1322 = vadd.f32 %v1217, %v1321
        %v1323 = vpop.f32.mrf.mxu0
        %1324 = vmatprep.mubr.f32.mxu0 0.0
        %1325 = vmatmul.mubr.f32.gmra.mxu0 %v961
        %v1326 = vpop.f32.mrf.mxu0
        %v1327 = vadd.f32 %v1222, %v1326
        %v1328 = vpop.f32.mrf.mxu0
        %1329 = vdwg.mxu0
        %s1330 = scalar_lea.vmem [#allocation7], 256
        %v1331 = vld [vmem:[%s1330] sm:$0xff]
        %v1332 = vld [vmem:[%s1330 + $0x8] sm:$0xff]
        %v1333 = vld [vmem:[%s1330 + $0x10] sm:$0xff]
        %v1334 = vld [vmem:[%s1330 + $0x18] sm:$0xff]
        %v1335 = vld [vmem:[%s1330 + $0x20] sm:$0xff]
        %v1336 = vld [vmem:[%s1330 + $0x28] sm:$0xff]
        %v1337 = vld [vmem:[%s1330 + $0x30] sm:$0xff]
        %v1338 = vld [vmem:[%s1330 + $0x38] sm:$0xff]
        %v1339 = vld [vmem:[%s1330 + $0x40] sm:$0xff]
        %v1340 = vld [vmem:[%s1330 + $0x48] sm:$0xff]
        %v1341 = vld [vmem:[%s1330 + $0x50] sm:$0xff]
        %v1342 = vld [vmem:[%s1330 + $0x58] sm:$0xff]
        %v1343 = vld [vmem:[%s1330 + $0x60] sm:$0xff]
        %v1344 = vld [vmem:[%s1330 + $0x68] sm:$0xff]
        %v1345 = vld [vmem:[%s1330 + $0x70] sm:$0xff]
        %v1346 = vld [vmem:[%s1330 + $0x78] sm:$0xff]
        %1347 = vmatprep.subr.mxu0 0.0
        %1348 = vmatpush1.msra.mxu0 %v1346
        %1349 = vmatprep.subr.mxu0 0.0
        %1350 = vmatpush1.msra.mxu0 %v1345
        %1351 = vmatprep.subr.mxu0 0.0
        %1352 = vmatpush1.msra.mxu0 %v1344
        %1353 = vmatprep.subr.mxu0 0.0
        %1354 = vmatpush1.msra.mxu0 %v1343
        %1355 = vmatprep.subr.mxu0 0.0
        %1356 = vmatpush1.msra.mxu0 %v1342
        %1357 = vmatprep.subr.mxu0 0.0
        %1358 = vmatpush1.msra.mxu0 %v1341
        %1359 = vmatprep.subr.mxu0 0.0
        %1360 = vmatpush1.msra.mxu0 %v1340
        %1361 = vmatprep.subr.mxu0 0.0
        %1362 = vmatpush1.msra.mxu0 %v1339
        %1363 = vmatprep.subr.mxu0 0.0
        %1364 = vmatpush1.msra.mxu0 %v1338
        %1365 = vmatprep.subr.mxu0 0.0
        %1366 = vmatpush1.msra.mxu0 %v1337
        %1367 = vmatprep.subr.mxu0 0.0
        %1368 = vmatpush1.msra.mxu0 %v1336
        %1369 = vmatprep.subr.mxu0 0.0
        %1370 = vmatpush1.msra.mxu0 %v1335
        %1371 = vmatprep.subr.mxu0 0.0
        %1372 = vmatpush1.msra.mxu0 %v1334
        %1373 = vmatprep.subr.mxu0 0.0
        %1374 = vmatpush1.msra.mxu0 %v1333
        %1375 = vmatprep.subr.mxu0 0.0
        %1376 = vmatpush1.msra.mxu0 %v1332
        %1377 = vmatprep.subr.mxu0 0.0
        %1378 = vmatpush1.msra.mxu0 %v1331
        %1379 = vmatprep.subr.mxu0 0.0
        %1380 = vmatpush2.msra.mxu0 0.0
        %1381 = vmatprep.subr.mxu0 0.0
        %1382 = vmatpush2.msra.mxu0 0.0
        %1383 = vmatprep.subr.mxu0 0.0
        %1384 = vmatpush2.msra.mxu0 0.0
        %1385 = vmatprep.subr.mxu0 0.0
        %1386 = vmatpush2.msra.mxu0 0.0
        %1387 = vmatprep.subr.mxu0 0.0
        %1388 = vmatpush2.msra.mxu0 0.0
        %1389 = vmatprep.subr.mxu0 0.0
        %1390 = vmatpush2.msra.mxu0 0.0
        %1391 = vmatprep.subr.mxu0 0.0
        %1392 = vmatpush2.msra.mxu0 0.0
        %1393 = vmatprep.subr.mxu0 0.0
        %1394 = vmatpush2.msra.mxu0 0.0
        %1395 = vmatprep.subr.mxu0 0.0
        %1396 = vmatpush2.msra.mxu0 0.0
        %1397 = vmatprep.subr.mxu0 0.0
        %1398 = vmatpush2.msra.mxu0 0.0
        %1399 = vmatprep.subr.mxu0 0.0
        %1400 = vmatpush2.msra.mxu0 0.0
        %1401 = vmatprep.subr.mxu0 0.0
        %1402 = vmatpush2.msra.mxu0 0.0
        %1403 = vmatprep.subr.mxu0 0.0
        %1404 = vmatpush2.msra.mxu0 0.0
        %1405 = vmatprep.subr.mxu0 0.0
        %1406 = vmatpush2.msra.mxu0 0.0
        %1407 = vmatprep.subr.mxu0 0.0
        %1408 = vmatpush2.msra.mxu0 0.0
        %1409 = vmatprep.subr.mxu0 0.0
        %1410 = vmatpush2.msra.mxu0 0.0
        %1411 = vmatprep.mubr.f32.mxu0 0.0
        %1412 = vmatmul.mubr.f32.gmra.mxu0 %v1075
        %v1413 = vpop.f32.mrf.mxu0
        %v1414 = vadd.f32 0.0, %v1413
        %v1415 = vpop.f32.mrf.mxu0
        %1416 = vmatprep.mubr.f32.mxu0 0.0
        %1417 = vmatmul.mubr.f32.gmra.mxu0 %v1076
        %v1418 = vpop.f32.mrf.mxu0
        %v1419 = vadd.f32 0.0, %v1418
        %v1420 = vpop.f32.mrf.mxu0
        %1421 = vmatprep.mubr.f32.mxu0 0.0
        %1422 = vmatmul.mubr.f32.gmra.mxu0 %v1077
        %v1423 = vpop.f32.mrf.mxu0
        %v1424 = vadd.f32 0.0, %v1423
        %v1425 = vpop.f32.mrf.mxu0
        %1426 = vmatprep.mubr.f32.mxu0 0.0
        %1427 = vmatmul.mubr.f32.gmra.mxu0 %v1078
        %v1428 = vpop.f32.mrf.mxu0
        %v1429 = vadd.f32 0.0, %v1428
        %v1430 = vpop.f32.mrf.mxu0
        %1431 = vmatprep.mubr.f32.mxu0 0.0
        %1432 = vmatmul.mubr.f32.gmra.mxu0 %v1079
        %v1433 = vpop.f32.mrf.mxu0
        %v1434 = vadd.f32 0.0, %v1433
        %v1435 = vpop.f32.mrf.mxu0
        %1436 = vmatprep.mubr.f32.mxu0 0.0
        %1437 = vmatmul.mubr.f32.gmra.mxu0 %v1080
        %v1438 = vpop.f32.mrf.mxu0
        %v1439 = vadd.f32 0.0, %v1438
        %v1440 = vpop.f32.mrf.mxu0
        %1441 = vmatprep.mubr.f32.mxu0 0.0
        %1442 = vmatmul.mubr.f32.gmra.mxu0 %v1081
        %v1443 = vpop.f32.mrf.mxu0
        %v1444 = vadd.f32 0.0, %v1443
        %v1445 = vpop.f32.mrf.mxu0
        %1446 = vmatprep.mubr.f32.mxu0 0.0
        %1447 = vmatmul.mubr.f32.gmra.mxu0 %v1082
        %v1448 = vpop.f32.mrf.mxu0
        %v1449 = vadd.f32 0.0, %v1448
        %v1450 = vpop.f32.mrf.mxu0
        %1451 = vdwg.mxu0
        %v1452 = vadd.f32 %v1292, %v1414
        %v1453 = vadd.f32 %v1297, %v1419
        %v1454 = vadd.f32 %v1302, %v1424
        %v1455 = vadd.f32 %v1307, %v1429
        %v1456 = vadd.f32 %v1312, %v1434
        %v1457 = vadd.f32 %v1317, %v1439
        %v1458 = vadd.f32 %v1322, %v1444
        %v1459 = vadd.f32 %v1327, %v1449
        %s1460 = scalar_lea.vmem [#allocation7], 384
        %v1461 = vld [vmem:[%s1460] sm:$0xff]
        %v1462 = vld [vmem:[%s1460 + $0x8] sm:$0xff]
        %v1463 = vld [vmem:[%s1460 + $0x10] sm:$0xff]
        %v1464 = vld [vmem:[%s1460 + $0x18] sm:$0xff]
        %v1465 = vld [vmem:[%s1460 + $0x20] sm:$0xff]
        %v1466 = vld [vmem:[%s1460 + $0x28] sm:$0xff]
        %v1467 = vld [vmem:[%s1460 + $0x30] sm:$0xff]
        %v1468 = vld [vmem:[%s1460 + $0x38] sm:$0xff]
        %v1469 = vld [vmem:[%s1460 + $0x40] sm:$0xff]
        %v1470 = vld [vmem:[%s1460 + $0x48] sm:$0xff]
        %v1471 = vld [vmem:[%s1460 + $0x50] sm:$0xff]
        %v1472 = vld [vmem:[%s1460 + $0x58] sm:$0xff]
        %v1473 = vld [vmem:[%s1460 + $0x60] sm:$0xff]
        %v1474 = vld [vmem:[%s1460 + $0x68] sm:$0xff]
        %v1475 = vld [vmem:[%s1460 + $0x70] sm:$0xff]
        %v1476 = vld [vmem:[%s1460 + $0x78] sm:$0xff]
        %1477 = vmatprep.subr.mxu0 0.0
        %1478 = vmatpush1.msra.mxu0 %v1476
        %1479 = vmatprep.subr.mxu0 0.0
        %1480 = vmatpush1.msra.mxu0 %v1475
        %1481 = vmatprep.subr.mxu0 0.0
        %1482 = vmatpush1.msra.mxu0 %v1474
        %1483 = vmatprep.subr.mxu0 0.0
        %1484 = vmatpush1.msra.mxu0 %v1473
        %1485 = vmatprep.subr.mxu0 0.0
        %1486 = vmatpush1.msra.mxu0 %v1472
        %1487 = vmatprep.subr.mxu0 0.0
        %1488 = vmatpush1.msra.mxu0 %v1471
        %1489 = vmatprep.subr.mxu0 0.0
        %1490 = vmatpush1.msra.mxu0 %v1470
        %1491 = vmatprep.subr.mxu0 0.0
        %1492 = vmatpush1.msra.mxu0 %v1469
        %1493 = vmatprep.subr.mxu0 0.0
        %1494 = vmatpush1.msra.mxu0 %v1468
        %1495 = vmatprep.subr.mxu0 0.0
        %1496 = vmatpush1.msra.mxu0 %v1467
        %1497 = vmatprep.subr.mxu0 0.0
        %1498 = vmatpush1.msra.mxu0 %v1466
        %1499 = vmatprep.subr.mxu0 0.0
        %1500 = vmatpush1.msra.mxu0 %v1465
        %1501 = vmatprep.subr.mxu0 0.0
        %1502 = vmatpush1.msra.mxu0 %v1464
        %1503 = vmatprep.subr.mxu0 0.0
        %1504 = vmatpush1.msra.mxu0 %v1463
        %1505 = vmatprep.subr.mxu0 0.0
        %1506 = vmatpush1.msra.mxu0 %v1462
        %1507 = vmatprep.subr.mxu0 0.0
        %1508 = vmatpush1.msra.mxu0 %v1461
        %1509 = vmatprep.subr.mxu0 0.0
        %1510 = vmatpush2.msra.mxu0 0.0
        %1511 = vmatprep.subr.mxu0 0.0
        %1512 = vmatpush2.msra.mxu0 0.0
        %1513 = vmatprep.subr.mxu0 0.0
        %1514 = vmatpush2.msra.mxu0 0.0
        %1515 = vmatprep.subr.mxu0 0.0
        %1516 = vmatpush2.msra.mxu0 0.0
        %1517 = vmatprep.subr.mxu0 0.0
        %1518 = vmatpush2.msra.mxu0 0.0
        %1519 = vmatprep.subr.mxu0 0.0
        %1520 = vmatpush2.msra.mxu0 0.0
        %1521 = vmatprep.subr.mxu0 0.0
        %1522 = vmatpush2.msra.mxu0 0.0
        %1523 = vmatprep.subr.mxu0 0.0
        %1524 = vmatpush2.msra.mxu0 0.0
        %1525 = vmatprep.subr.mxu0 0.0
        %1526 = vmatpush2.msra.mxu0 0.0
        %1527 = vmatprep.subr.mxu0 0.0
        %1528 = vmatpush2.msra.mxu0 0.0
        %1529 = vmatprep.subr.mxu0 0.0
        %1530 = vmatpush2.msra.mxu0 0.0
        %1531 = vmatprep.subr.mxu0 0.0
        %1532 = vmatpush2.msra.mxu0 0.0
        %1533 = vmatprep.subr.mxu0 0.0
        %1534 = vmatpush2.msra.mxu0 0.0
        %1535 = vmatprep.subr.mxu0 0.0
        %1536 = vmatpush2.msra.mxu0 0.0
        %1537 = vmatprep.subr.mxu0 0.0
        %1538 = vmatpush2.msra.mxu0 0.0
        %1539 = vmatprep.subr.mxu0 0.0
        %1540 = vmatpush2.msra.mxu0 0.0
        %1541 = vmatprep.mubr.f32.mxu0 0.0
        %1542 = vmatmul.mubr.f32.gmra.mxu0 %v956
        %v1543 = vpop.f32.mrf.mxu0
        %v1544 = vadd.f32 0.0, %v1543
        %v1545 = vpop.f32.mrf.mxu0
        %1546 = vmatprep.mubr.f32.mxu0 0.0
        %1547 = vmatmul.mubr.f32.gmra.mxu0 %v957
        %v1548 = vpop.f32.mrf.mxu0
        %v1549 = vadd.f32 0.0, %v1548
        %v1550 = vpop.f32.mrf.mxu0
        %1551 = vmatprep.mubr.f32.mxu0 0.0
        %1552 = vmatmul.mubr.f32.gmra.mxu0 %v958
        %v1553 = vpop.f32.mrf.mxu0
        %v1554 = vadd.f32 0.0, %v1553
        %v1555 = vpop.f32.mrf.mxu0
        %1556 = vmatprep.mubr.f32.mxu0 0.0
        %1557 = vmatmul.mubr.f32.gmra.mxu0 %v959
        %v1558 = vpop.f32.mrf.mxu0
        %v1559 = vadd.f32 0.0, %v1558
        %v1560 = vpop.f32.mrf.mxu0
        %1561 = vmatprep.mubr.f32.mxu0 0.0
        %1562 = vmatmul.mubr.f32.gmra.mxu0 %v960
        %v1563 = vpop.f32.mrf.mxu0
        %v1564 = vadd.f32 0.0, %v1563
        %v1565 = vpop.f32.mrf.mxu0
        %1566 = vmatprep.mubr.f32.mxu0 0.0
        %1567 = vmatmul.mubr.f32.gmra.mxu0 %v961
        %v1568 = vpop.f32.mrf.mxu0
        %v1569 = vadd.f32 0.0, %v1568
        %v1570 = vpop.f32.mrf.mxu0
        %1571 = vmatprep.mubr.f32.mxu0 0.0
        %1572 = vmatmul.mubr.f32.gmra.mxu0 %v962
        %v1573 = vpop.f32.mrf.mxu0
        %v1574 = vadd.f32 0.0, %v1573
        %v1575 = vpop.f32.mrf.mxu0
        %1576 = vmatprep.mubr.f32.mxu0 0.0
        %1577 = vmatmul.mubr.f32.gmra.mxu0 %v963
        %v1578 = vpop.f32.mrf.mxu0
        %v1579 = vadd.f32 0.0, %v1578
        %v1580 = vpop.f32.mrf.mxu0
        %1581 = vdwg.mxu0
        %v1582 = vadd.f32 %v1452, %v1544
        %v1583 = vadd.f32 %v1453, %v1549
        %v1584 = vadd.f32 %v1454, %v1554
        %v1585 = vadd.f32 %v1455, %v1559
        %v1586 = vadd.f32 %v1456, %v1564
        %v1587 = vadd.f32 %v1457, %v1569
        %v1588 = vadd.f32 %v1458, %v1574
        %v1589 = vadd.f32 %v1459, %v1579
        %s1590 = scalar_lea.vmem [#allocation7], 512
        %v1591 = vld [vmem:[%s1590] sm:$0xff]
        %v1592 = vld [vmem:[%s1590 + $0x8] sm:$0xff]
        %v1593 = vld [vmem:[%s1590 + $0x10] sm:$0xff]
        %v1594 = vld [vmem:[%s1590 + $0x18] sm:$0xff]
        %v1595 = vld [vmem:[%s1590 + $0x20] sm:$0xff]
        %v1596 = vld [vmem:[%s1590 + $0x28] sm:$0xff]
        %v1597 = vld [vmem:[%s1590 + $0x30] sm:$0xff]
        %v1598 = vld [vmem:[%s1590 + $0x38] sm:$0xff]
        %v1599 = vld [vmem:[%s1590 + $0x40] sm:$0xff]
        %v1600 = vld [vmem:[%s1590 + $0x48] sm:$0xff]
        %v1601 = vld [vmem:[%s1590 + $0x50] sm:$0xff]
        %v1602 = vld [vmem:[%s1590 + $0x58] sm:$0xff]
        %v1603 = vld [vmem:[%s1590 + $0x60] sm:$0xff]
        %v1604 = vld [vmem:[%s1590 + $0x68] sm:$0xff]
        %v1605 = vld [vmem:[%s1590 + $0x70] sm:$0xff]
        %v1606 = vld [vmem:[%s1590 + $0x78] sm:$0xff]
        %1607 = vmatprep.subr.mxu0 0.0
        %1608 = vmatpush1.msra.mxu0 %v1606
        %1609 = vmatprep.subr.mxu0 0.0
        %1610 = vmatpush1.msra.mxu0 %v1605
        %1611 = vmatprep.subr.mxu0 0.0
        %1612 = vmatpush1.msra.mxu0 %v1604
        %1613 = vmatprep.subr.mxu0 0.0
        %1614 = vmatpush1.msra.mxu0 %v1603
        %1615 = vmatprep.subr.mxu0 0.0
        %1616 = vmatpush1.msra.mxu0 %v1602
        %1617 = vmatprep.subr.mxu0 0.0
        %1618 = vmatpush1.msra.mxu0 %v1601
        %1619 = vmatprep.subr.mxu0 0.0
        %1620 = vmatpush1.msra.mxu0 %v1600
        %1621 = vmatprep.subr.mxu0 0.0
        %1622 = vmatpush1.msra.mxu0 %v1599
        %1623 = vmatprep.subr.mxu0 0.0
        %1624 = vmatpush1.msra.mxu0 %v1598
        %1625 = vmatprep.subr.mxu0 0.0
        %1626 = vmatpush1.msra.mxu0 %v1597
        %1627 = vmatprep.subr.mxu0 0.0
        %1628 = vmatpush1.msra.mxu0 %v1596
        %1629 = vmatprep.subr.mxu0 0.0
        %1630 = vmatpush1.msra.mxu0 %v1595
        %1631 = vmatprep.subr.mxu0 0.0
        %1632 = vmatpush1.msra.mxu0 %v1594
        %1633 = vmatprep.subr.mxu0 0.0
        %1634 = vmatpush1.msra.mxu0 %v1593
        %1635 = vmatprep.subr.mxu0 0.0
        %1636 = vmatpush1.msra.mxu0 %v1592
        %1637 = vmatprep.subr.mxu0 0.0
        %1638 = vmatpush1.msra.mxu0 %v1591
        %1639 = vmatprep.subr.mxu0 0.0
        %1640 = vmatpush2.msra.mxu0 0.0
        %1641 = vmatprep.subr.mxu0 0.0
        %1642 = vmatpush2.msra.mxu0 0.0
        %1643 = vmatprep.subr.mxu0 0.0
        %1644 = vmatpush2.msra.mxu0 0.0
        %1645 = vmatprep.subr.mxu0 0.0
        %1646 = vmatpush2.msra.mxu0 0.0
        %1647 = vmatprep.subr.mxu0 0.0
        %1648 = vmatpush2.msra.mxu0 0.0
        %1649 = vmatprep.subr.mxu0 0.0
        %1650 = vmatpush2.msra.mxu0 0.0
        %1651 = vmatprep.subr.mxu0 0.0
        %1652 = vmatpush2.msra.mxu0 0.0
        %1653 = vmatprep.subr.mxu0 0.0
        %1654 = vmatpush2.msra.mxu0 0.0
        %1655 = vmatprep.subr.mxu0 0.0
        %1656 = vmatpush2.msra.mxu0 0.0
        %1657 = vmatprep.subr.mxu0 0.0
        %1658 = vmatpush2.msra.mxu0 0.0
        %1659 = vmatprep.subr.mxu0 0.0
        %1660 = vmatpush2.msra.mxu0 0.0
        %1661 = vmatprep.subr.mxu0 0.0
        %1662 = vmatpush2.msra.mxu0 0.0
        %1663 = vmatprep.subr.mxu0 0.0
        %1664 = vmatpush2.msra.mxu0 0.0
        %1665 = vmatprep.subr.mxu0 0.0
        %1666 = vmatpush2.msra.mxu0 0.0
        %1667 = vmatprep.subr.mxu0 0.0
        %1668 = vmatpush2.msra.mxu0 0.0
        %1669 = vmatprep.subr.mxu0 0.0
        %1670 = vmatpush2.msra.mxu0 0.0
        %1671 = vmatprep.mubr.f32.mxu0 0.0
        %1672 = vmatmul.mubr.f32.gmra.mxu0 %v716
        %v1673 = vpop.f32.mrf.mxu0
        %v1674 = vadd.f32 0.0, %v1673
        %v1675 = vpop.f32.mrf.mxu0
        %1676 = vmatprep.mubr.f32.mxu0 0.0
        %1677 = vmatmul.mubr.f32.gmra.mxu0 %v717
        %v1678 = vpop.f32.mrf.mxu0
        %v1679 = vadd.f32 0.0, %v1678
        %v1680 = vpop.f32.mrf.mxu0
        %1681 = vmatprep.mubr.f32.mxu0 0.0
        %1682 = vmatmul.mubr.f32.gmra.mxu0 %v718
        %v1683 = vpop.f32.mrf.mxu0
        %v1684 = vadd.f32 0.0, %v1683
        %v1685 = vpop.f32.mrf.mxu0
        %1686 = vmatprep.mubr.f32.mxu0 0.0
        %1687 = vmatmul.mubr.f32.gmra.mxu0 %v719
        %v1688 = vpop.f32.mrf.mxu0
        %v1689 = vadd.f32 0.0, %v1688
        %v1690 = vpop.f32.mrf.mxu0
        %1691 = vmatprep.mubr.f32.mxu0 0.0
        %1692 = vmatmul.mubr.f32.gmra.mxu0 %v720
        %v1693 = vpop.f32.mrf.mxu0
        %v1694 = vadd.f32 0.0, %v1693
        %v1695 = vpop.f32.mrf.mxu0
        %1696 = vmatprep.mubr.f32.mxu0 0.0
        %1697 = vmatmul.mubr.f32.gmra.mxu0 %v721
        %v1698 = vpop.f32.mrf.mxu0
        %v1699 = vadd.f32 0.0, %v1698
        %v1700 = vpop.f32.mrf.mxu0
        %1701 = vmatprep.mubr.f32.mxu0 0.0
        %1702 = vmatmul.mubr.f32.gmra.mxu0 %v722
        %v1703 = vpop.f32.mrf.mxu0
        %v1704 = vadd.f32 0.0, %v1703
        %v1705 = vpop.f32.mrf.mxu0
        %1706 = vmatprep.mubr.f32.mxu0 0.0
        %1707 = vmatmul.mubr.f32.gmra.mxu0 %v723
        %v1708 = vpop.f32.mrf.mxu0
        %v1709 = vadd.f32 0.0, %v1708
        %v1710 = vpop.f32.mrf.mxu0
        %1711 = vdwg.mxu0
        %v1712 = vadd.f32 %v1582, %v1674
        %v1713 = vadd.f32 %v1583, %v1679
        %v1714 = vadd.f32 %v1584, %v1684
        %v1715 = vadd.f32 %v1585, %v1689
        %v1716 = vadd.f32 %v1586, %v1694
        %v1717 = vadd.f32 %v1587, %v1699
        %v1718 = vadd.f32 %v1588, %v1704
        %v1719 = vadd.f32 %v1589, %v1709
        %s1720 = scalar_lea.vmem [#allocation7], 640
        %v1721 = vld [vmem:[%s1720] sm:$0xff]
        %v1722 = vld [vmem:[%s1720 + $0x8] sm:$0xff]
        %v1723 = vld [vmem:[%s1720 + $0x10] sm:$0xff]
        %v1724 = vld [vmem:[%s1720 + $0x18] sm:$0xff]
        %v1725 = vld [vmem:[%s1720 + $0x20] sm:$0xff]
        %v1726 = vld [vmem:[%s1720 + $0x28] sm:$0xff]
        %v1727 = vld [vmem:[%s1720 + $0x30] sm:$0xff]
        %v1728 = vld [vmem:[%s1720 + $0x38] sm:$0xff]
        %v1729 = vld [vmem:[%s1720 + $0x40] sm:$0xff]
        %v1730 = vld [vmem:[%s1720 + $0x48] sm:$0xff]
        %v1731 = vld [vmem:[%s1720 + $0x50] sm:$0xff]
        %v1732 = vld [vmem:[%s1720 + $0x58] sm:$0xff]
        %v1733 = vld [vmem:[%s1720 + $0x60] sm:$0xff]
        %v1734 = vld [vmem:[%s1720 + $0x68] sm:$0xff]
        %v1735 = vld [vmem:[%s1720 + $0x70] sm:$0xff]
        %v1736 = vld [vmem:[%s1720 + $0x78] sm:$0xff]
        %1737 = vmatprep.subr.mxu0 0.0
        %1738 = vmatpush1.msra.mxu0 %v1736
        %1739 = vmatprep.subr.mxu0 0.0
        %1740 = vmatpush1.msra.mxu0 %v1735
        %1741 = vmatprep.subr.mxu0 0.0
        %1742 = vmatpush1.msra.mxu0 %v1734
        %1743 = vmatprep.subr.mxu0 0.0
        %1744 = vmatpush1.msra.mxu0 %v1733
        %1745 = vmatprep.subr.mxu0 0.0
        %1746 = vmatpush1.msra.mxu0 %v1732
        %1747 = vmatprep.subr.mxu0 0.0
        %1748 = vmatpush1.msra.mxu0 %v1731
        %1749 = vmatprep.subr.mxu0 0.0
        %1750 = vmatpush1.msra.mxu0 %v1730
        %1751 = vmatprep.subr.mxu0 0.0
        %1752 = vmatpush1.msra.mxu0 %v1729
        %1753 = vmatprep.subr.mxu0 0.0
        %1754 = vmatpush1.msra.mxu0 %v1728
        %1755 = vmatprep.subr.mxu0 0.0
        %1756 = vmatpush1.msra.mxu0 %v1727
        %1757 = vmatprep.subr.mxu0 0.0
        %1758 = vmatpush1.msra.mxu0 %v1726
        %1759 = vmatprep.subr.mxu0 0.0
        %1760 = vmatpush1.msra.mxu0 %v1725
        %1761 = vmatprep.subr.mxu0 0.0
        %1762 = vmatpush1.msra.mxu0 %v1724
        %1763 = vmatprep.subr.mxu0 0.0
        %1764 = vmatpush1.msra.mxu0 %v1723
        %1765 = vmatprep.subr.mxu0 0.0
        %1766 = vmatpush1.msra.mxu0 %v1722
        %1767 = vmatprep.subr.mxu0 0.0
        %1768 = vmatpush1.msra.mxu0 %v1721
        %1769 = vmatprep.subr.mxu0 0.0
        %1770 = vmatpush2.msra.mxu0 0.0
        %1771 = vmatprep.subr.mxu0 0.0
        %1772 = vmatpush2.msra.mxu0 0.0
        %1773 = vmatprep.subr.mxu0 0.0
        %1774 = vmatpush2.msra.mxu0 0.0
        %1775 = vmatprep.subr.mxu0 0.0
        %1776 = vmatpush2.msra.mxu0 0.0
        %1777 = vmatprep.subr.mxu0 0.0
        %1778 = vmatpush2.msra.mxu0 0.0
        %1779 = vmatprep.subr.mxu0 0.0
        %1780 = vmatpush2.msra.mxu0 0.0
        %1781 = vmatprep.subr.mxu0 0.0
        %1782 = vmatpush2.msra.mxu0 0.0
        %1783 = vmatprep.subr.mxu0 0.0
        %1784 = vmatpush2.msra.mxu0 0.0
        %1785 = vmatprep.subr.mxu0 0.0
        %1786 = vmatpush2.msra.mxu0 0.0
        %1787 = vmatprep.subr.mxu0 0.0
        %1788 = vmatpush2.msra.mxu0 0.0
        %1789 = vmatprep.subr.mxu0 0.0
        %1790 = vmatpush2.msra.mxu0 0.0
        %1791 = vmatprep.subr.mxu0 0.0
        %1792 = vmatpush2.msra.mxu0 0.0
        %1793 = vmatprep.subr.mxu0 0.0
        %1794 = vmatpush2.msra.mxu0 0.0
        %1795 = vmatprep.subr.mxu0 0.0
        %1796 = vmatpush2.msra.mxu0 0.0
        %1797 = vmatprep.subr.mxu0 0.0
        %1798 = vmatpush2.msra.mxu0 0.0
        %1799 = vmatprep.subr.mxu0 0.0
        %1800 = vmatpush2.msra.mxu0 0.0
        %1801 = vmatprep.mubr.f32.mxu0 0.0
        %1802 = vmatmul.mubr.f32.gmra.mxu0 %v1077
        %v1803 = vpop.f32.mrf.mxu0
        %v1804 = vadd.f32 0.0, %v1803
        %v1805 = vpop.f32.mrf.mxu0
        %1806 = vmatprep.mubr.f32.mxu0 0.0
        %1807 = vmatmul.mubr.f32.gmra.mxu0 %v1078
        %v1808 = vpop.f32.mrf.mxu0
        %v1809 = vadd.f32 0.0, %v1808
        %v1810 = vpop.f32.mrf.mxu0
        %1811 = vmatprep.mubr.f32.mxu0 0.0
        %1812 = vmatmul.mubr.f32.gmra.mxu0 %v1079
        %v1813 = vpop.f32.mrf.mxu0
        %v1814 = vadd.f32 0.0, %v1813
        %v1815 = vpop.f32.mrf.mxu0
        %1816 = vmatprep.mubr.f32.mxu0 0.0
        %1817 = vmatmul.mubr.f32.gmra.mxu0 %v1080
        %v1818 = vpop.f32.mrf.mxu0
        %v1819 = vadd.f32 0.0, %v1818
        %v1820 = vpop.f32.mrf.mxu0
        %1821 = vmatprep.mubr.f32.mxu0 0.0
        %1822 = vmatmul.mubr.f32.gmra.mxu0 %v1081
        %v1823 = vpop.f32.mrf.mxu0
        %v1824 = vadd.f32 0.0, %v1823
        %v1825 = vpop.f32.mrf.mxu0
        %1826 = vmatprep.mubr.f32.mxu0 0.0
        %1827 = vmatmul.mubr.f32.gmra.mxu0 %v1082
        %v1828 = vpop.f32.mrf.mxu0
        %v1829 = vadd.f32 0.0, %v1828
        %v1830 = vpop.f32.mrf.mxu0
        %1831 = vmatprep.mubr.f32.mxu0 0.0
        %1832 = vmatmul.mubr.f32.gmra.mxu0 %v1083
        %v1833 = vpop.f32.mrf.mxu0
        %v1834 = vadd.f32 0.0, %v1833
        %v1835 = vpop.f32.mrf.mxu0
        %1836 = vmatprep.mubr.f32.mxu0 0.0
        %1837 = vmatmul.mubr.f32.gmra.mxu0 %v1084
        %v1838 = vpop.f32.mrf.mxu0
        %v1839 = vadd.f32 0.0, %v1838
        %v1840 = vpop.f32.mrf.mxu0
        %1841 = vdwg.mxu0
        %v1842 = vadd.f32 %v1712, %v1804
        %v1843 = vadd.f32 %v1713, %v1809
        %v1844 = vadd.f32 %v1714, %v1814
        %v1845 = vadd.f32 %v1715, %v1819
        %v1846 = vadd.f32 %v1716, %v1824
        %v1847 = vadd.f32 %v1717, %v1829
        %v1848 = vadd.f32 %v1718, %v1834
        %v1849 = vadd.f32 %v1719, %v1839
        %s1850 = scalar_lea.vmem [#allocation7], 768
        %v1851 = vld [vmem:[%s1850] sm:$0xff]
        %v1852 = vld [vmem:[%s1850 + $0x8] sm:$0xff]
        %v1853 = vld [vmem:[%s1850 + $0x10] sm:$0xff]
        %v1854 = vld [vmem:[%s1850 + $0x18] sm:$0xff]
        %v1855 = vld [vmem:[%s1850 + $0x20] sm:$0xff]
        %v1856 = vld [vmem:[%s1850 + $0x28] sm:$0xff]
        %v1857 = vld [vmem:[%s1850 + $0x30] sm:$0xff]
        %v1858 = vld [vmem:[%s1850 + $0x38] sm:$0xff]
        %v1859 = vld [vmem:[%s1850 + $0x40] sm:$0xff]
        %v1860 = vld [vmem:[%s1850 + $0x48] sm:$0xff]
        %v1861 = vld [vmem:[%s1850 + $0x50] sm:$0xff]
        %v1862 = vld [vmem:[%s1850 + $0x58] sm:$0xff]
        %v1863 = vld [vmem:[%s1850 + $0x60] sm:$0xff]
        %v1864 = vld [vmem:[%s1850 + $0x68] sm:$0xff]
        %v1865 = vld [vmem:[%s1850 + $0x70] sm:$0xff]
        %v1866 = vld [vmem:[%s1850 + $0x78] sm:$0xff]
        %1867 = vmatprep.subr.mxu0 0.0
        %1868 = vmatpush1.msra.mxu0 %v1866
        %1869 = vmatprep.subr.mxu0 0.0
        %1870 = vmatpush1.msra.mxu0 %v1865
        %1871 = vmatprep.subr.mxu0 0.0
        %1872 = vmatpush1.msra.mxu0 %v1864
        %1873 = vmatprep.subr.mxu0 0.0
        %1874 = vmatpush1.msra.mxu0 %v1863
        %1875 = vmatprep.subr.mxu0 0.0
        %1876 = vmatpush1.msra.mxu0 %v1862
        %1877 = vmatprep.subr.mxu0 0.0
        %1878 = vmatpush1.msra.mxu0 %v1861
        %1879 = vmatprep.subr.mxu0 0.0
        %1880 = vmatpush1.msra.mxu0 %v1860
        %1881 = vmatprep.subr.mxu0 0.0
        %1882 = vmatpush1.msra.mxu0 %v1859
        %1883 = vmatprep.subr.mxu0 0.0
        %1884 = vmatpush1.msra.mxu0 %v1858
        %1885 = vmatprep.subr.mxu0 0.0
        %1886 = vmatpush1.msra.mxu0 %v1857
        %1887 = vmatprep.subr.mxu0 0.0
        %1888 = vmatpush1.msra.mxu0 %v1856
        %1889 = vmatprep.subr.mxu0 0.0
        %1890 = vmatpush1.msra.mxu0 %v1855
        %1891 = vmatprep.subr.mxu0 0.0
        %1892 = vmatpush1.msra.mxu0 %v1854
        %1893 = vmatprep.subr.mxu0 0.0
        %1894 = vmatpush1.msra.mxu0 %v1853
        %1895 = vmatprep.subr.mxu0 0.0
        %1896 = vmatpush1.msra.mxu0 %v1852
        %1897 = vmatprep.subr.mxu0 0.0
        %1898 = vmatpush1.msra.mxu0 %v1851
        %1899 = vmatprep.subr.mxu0 0.0
        %1900 = vmatpush2.msra.mxu0 0.0
        %1901 = vmatprep.subr.mxu0 0.0
        %1902 = vmatpush2.msra.mxu0 0.0
        %1903 = vmatprep.subr.mxu0 0.0
        %1904 = vmatpush2.msra.mxu0 0.0
        %1905 = vmatprep.subr.mxu0 0.0
        %1906 = vmatpush2.msra.mxu0 0.0
        %1907 = vmatprep.subr.mxu0 0.0
        %1908 = vmatpush2.msra.mxu0 0.0
        %1909 = vmatprep.subr.mxu0 0.0
        %1910 = vmatpush2.msra.mxu0 0.0
        %1911 = vmatprep.subr.mxu0 0.0
        %1912 = vmatpush2.msra.mxu0 0.0
        %1913 = vmatprep.subr.mxu0 0.0
        %1914 = vmatpush2.msra.mxu0 0.0
        %1915 = vmatprep.subr.mxu0 0.0
        %1916 = vmatpush2.msra.mxu0 0.0
        %1917 = vmatprep.subr.mxu0 0.0
        %1918 = vmatpush2.msra.mxu0 0.0
        %1919 = vmatprep.subr.mxu0 0.0
        %1920 = vmatpush2.msra.mxu0 0.0
        %1921 = vmatprep.subr.mxu0 0.0
        %1922 = vmatpush2.msra.mxu0 0.0
        %1923 = vmatprep.subr.mxu0 0.0
        %1924 = vmatpush2.msra.mxu0 0.0
        %1925 = vmatprep.subr.mxu0 0.0
        %1926 = vmatpush2.msra.mxu0 0.0
        %1927 = vmatprep.subr.mxu0 0.0
        %1928 = vmatpush2.msra.mxu0 0.0
        %1929 = vmatprep.subr.mxu0 0.0
        %1930 = vmatpush2.msra.mxu0 0.0
        %1931 = vmatprep.mubr.f32.mxu0 0.0
        %1932 = vmatmul.mubr.f32.gmra.mxu0 %v958
        %v1933 = vpop.f32.mrf.mxu0
        %v1934 = vadd.f32 0.0, %v1933
        %v1935 = vpop.f32.mrf.mxu0
        %1936 = vmatprep.mubr.f32.mxu0 0.0
        %1937 = vmatmul.mubr.f32.gmra.mxu0 %v959
        %v1938 = vpop.f32.mrf.mxu0
        %v1939 = vadd.f32 0.0, %v1938
        %v1940 = vpop.f32.mrf.mxu0
        %1941 = vmatprep.mubr.f32.mxu0 0.0
        %1942 = vmatmul.mubr.f32.gmra.mxu0 %v960
        %v1943 = vpop.f32.mrf.mxu0
        %v1944 = vadd.f32 0.0, %v1943
        %v1945 = vpop.f32.mrf.mxu0
        %1946 = vmatprep.mubr.f32.mxu0 0.0
        %1947 = vmatmul.mubr.f32.gmra.mxu0 %v961
        %v1948 = vpop.f32.mrf.mxu0
        %v1949 = vadd.f32 0.0, %v1948
        %v1950 = vpop.f32.mrf.mxu0
        %1951 = vmatprep.mubr.f32.mxu0 0.0
        %1952 = vmatmul.mubr.f32.gmra.mxu0 %v962
        %v1953 = vpop.f32.mrf.mxu0
        %v1954 = vadd.f32 0.0, %v1953
        %v1955 = vpop.f32.mrf.mxu0
        %1956 = vmatprep.mubr.f32.mxu0 0.0
        %1957 = vmatmul.mubr.f32.gmra.mxu0 %v963
        %v1958 = vpop.f32.mrf.mxu0
        %v1959 = vadd.f32 0.0, %v1958
        %v1960 = vpop.f32.mrf.mxu0
        %1961 = vmatprep.mubr.f32.mxu0 0.0
        %1962 = vmatmul.mubr.f32.gmra.mxu0 %v964
        %v1963 = vpop.f32.mrf.mxu0
        %v1964 = vadd.f32 0.0, %v1963
        %v1965 = vpop.f32.mrf.mxu0
        %1966 = vmatprep.mubr.f32.mxu0 0.0
        %1967 = vmatmul.mubr.f32.gmra.mxu0 %v965
        %v1968 = vpop.f32.mrf.mxu0
        %v1969 = vadd.f32 0.0, %v1968
        %v1970 = vpop.f32.mrf.mxu0
        %1971 = vdwg.mxu0
        %v1972 = vadd.f32 %v1842, %v1934
        %v1973 = vadd.f32 %v1843, %v1939
        %v1974 = vadd.f32 %v1844, %v1944
        %v1975 = vadd.f32 %v1845, %v1949
        %v1976 = vadd.f32 %v1846, %v1954
        %v1977 = vadd.f32 %v1847, %v1959
        %v1978 = vadd.f32 %v1848, %v1964
        %v1979 = vadd.f32 %v1849, %v1969
        %s1980 = scalar_lea.vmem [#allocation7], 896
        %v1981 = vld [vmem:[%s1980] sm:$0xff]
        %v1982 = vld [vmem:[%s1980 + $0x8] sm:$0xff]
        %v1983 = vld [vmem:[%s1980 + $0x10] sm:$0xff]
        %v1984 = vld [vmem:[%s1980 + $0x18] sm:$0xff]
        %v1985 = vld [vmem:[%s1980 + $0x20] sm:$0xff]
        %v1986 = vld [vmem:[%s1980 + $0x28] sm:$0xff]
        %v1987 = vld [vmem:[%s1980 + $0x30] sm:$0xff]
        %v1988 = vld [vmem:[%s1980 + $0x38] sm:$0xff]
        %v1989 = vld [vmem:[%s1980 + $0x40] sm:$0xff]
        %v1990 = vld [vmem:[%s1980 + $0x48] sm:$0xff]
        %v1991 = vld [vmem:[%s1980 + $0x50] sm:$0xff]
        %v1992 = vld [vmem:[%s1980 + $0x58] sm:$0xff]
        %v1993 = vld [vmem:[%s1980 + $0x60] sm:$0xff]
        %v1994 = vld [vmem:[%s1980 + $0x68] sm:$0xff]
        %v1995 = vld [vmem:[%s1980 + $0x70] sm:$0xff]
        %v1996 = vld [vmem:[%s1980 + $0x78] sm:$0xff]
        %1997 = vmatprep.subr.mxu0 0.0
        %1998 = vmatpush1.msra.mxu0 %v1996
        %1999 = vmatprep.subr.mxu0 0.0
        %2000 = vmatpush1.msra.mxu0 %v1995
        %2001 = vmatprep.subr.mxu0 0.0
        %2002 = vmatpush1.msra.mxu0 %v1994
        %2003 = vmatprep.subr.mxu0 0.0
        %2004 = vmatpush1.msra.mxu0 %v1993
        %2005 = vmatprep.subr.mxu0 0.0
        %2006 = vmatpush1.msra.mxu0 %v1992
        %2007 = vmatprep.subr.mxu0 0.0
        %2008 = vmatpush1.msra.mxu0 %v1991
        %2009 = vmatprep.subr.mxu0 0.0
        %2010 = vmatpush1.msra.mxu0 %v1990
        %2011 = vmatprep.subr.mxu0 0.0
        %2012 = vmatpush1.msra.mxu0 %v1989
        %2013 = vmatprep.subr.mxu0 0.0
        %2014 = vmatpush1.msra.mxu0 %v1988
        %2015 = vmatprep.subr.mxu0 0.0
        %2016 = vmatpush1.msra.mxu0 %v1987
        %2017 = vmatprep.subr.mxu0 0.0
        %2018 = vmatpush1.msra.mxu0 %v1986
        %2019 = vmatprep.subr.mxu0 0.0
        %2020 = vmatpush1.msra.mxu0 %v1985
        %2021 = vmatprep.subr.mxu0 0.0
        %2022 = vmatpush1.msra.mxu0 %v1984
        %2023 = vmatprep.subr.mxu0 0.0
        %2024 = vmatpush1.msra.mxu0 %v1983
        %2025 = vmatprep.subr.mxu0 0.0
        %2026 = vmatpush1.msra.mxu0 %v1982
        %2027 = vmatprep.subr.mxu0 0.0
        %2028 = vmatpush1.msra.mxu0 %v1981
        %2029 = vmatprep.subr.mxu0 0.0
        %2030 = vmatpush2.msra.mxu0 0.0
        %2031 = vmatprep.subr.mxu0 0.0
        %2032 = vmatpush2.msra.mxu0 0.0
        %2033 = vmatprep.subr.mxu0 0.0
        %2034 = vmatpush2.msra.mxu0 0.0
        %2035 = vmatprep.subr.mxu0 0.0
        %2036 = vmatpush2.msra.mxu0 0.0
        %2037 = vmatprep.subr.mxu0 0.0
        %2038 = vmatpush2.msra.mxu0 0.0
        %2039 = vmatprep.subr.mxu0 0.0
        %2040 = vmatpush2.msra.mxu0 0.0
        %2041 = vmatprep.subr.mxu0 0.0
        %2042 = vmatpush2.msra.mxu0 0.0
        %2043 = vmatprep.subr.mxu0 0.0
        %2044 = vmatpush2.msra.mxu0 0.0
        %2045 = vmatprep.subr.mxu0 0.0
        %2046 = vmatpush2.msra.mxu0 0.0
        %2047 = vmatprep.subr.mxu0 0.0
        %2048 = vmatpush2.msra.mxu0 0.0
        %2049 = vmatprep.subr.mxu0 0.0
        %2050 = vmatpush2.msra.mxu0 0.0
        %2051 = vmatprep.subr.mxu0 0.0
        %2052 = vmatpush2.msra.mxu0 0.0
        %2053 = vmatprep.subr.mxu0 0.0
        %2054 = vmatpush2.msra.mxu0 0.0
        %2055 = vmatprep.subr.mxu0 0.0
        %2056 = vmatpush2.msra.mxu0 0.0
        %2057 = vmatprep.subr.mxu0 0.0
        %2058 = vmatpush2.msra.mxu0 0.0
        %2059 = vmatprep.subr.mxu0 0.0
        %2060 = vmatpush2.msra.mxu0 0.0
        %2061 = vmatprep.mubr.f32.mxu0 0.0
        %2062 = vmatmul.mubr.f32.gmra.mxu0 %v718
        %v2063 = vpop.f32.mrf.mxu0
        %v2064 = vadd.f32 0.0, %v2063
        %v2065 = vpop.f32.mrf.mxu0
        %2066 = vmatprep.mubr.f32.mxu0 0.0
        %2067 = vmatmul.mubr.f32.gmra.mxu0 %v719
        %v2068 = vpop.f32.mrf.mxu0
        %v2069 = vadd.f32 0.0, %v2068
        %v2070 = vpop.f32.mrf.mxu0
        %2071 = vmatprep.mubr.f32.mxu0 0.0
        %2072 = vmatmul.mubr.f32.gmra.mxu0 %v720
        %v2073 = vpop.f32.mrf.mxu0
        %v2074 = vadd.f32 0.0, %v2073
        %v2075 = vpop.f32.mrf.mxu0
        %2076 = vmatprep.mubr.f32.mxu0 0.0
        %2077 = vmatmul.mubr.f32.gmra.mxu0 %v721
        %v2078 = vpop.f32.mrf.mxu0
        %v2079 = vadd.f32 0.0, %v2078
        %v2080 = vpop.f32.mrf.mxu0
        %2081 = vmatprep.mubr.f32.mxu0 0.0
        %2082 = vmatmul.mubr.f32.gmra.mxu0 %v722
        %v2083 = vpop.f32.mrf.mxu0
        %v2084 = vadd.f32 0.0, %v2083
        %v2085 = vpop.f32.mrf.mxu0
        %2086 = vmatprep.mubr.f32.mxu0 0.0
        %2087 = vmatmul.mubr.f32.gmra.mxu0 %v723
        %v2088 = vpop.f32.mrf.mxu0
        %v2089 = vadd.f32 0.0, %v2088
        %v2090 = vpop.f32.mrf.mxu0
        %2091 = vmatprep.mubr.f32.mxu0 0.0
        %2092 = vmatmul.mubr.f32.gmra.mxu0 %v831
        %v2093 = vpop.f32.mrf.mxu0
        %v2094 = vadd.f32 0.0, %v2093
        %v2095 = vpop.f32.mrf.mxu0
        %2096 = vmatprep.mubr.f32.mxu0 0.0
        %2097 = vmatmul.mubr.f32.gmra.mxu0 %v832
        %v2098 = vpop.f32.mrf.mxu0
        %v2099 = vadd.f32 0.0, %v2098
        %v2100 = vpop.f32.mrf.mxu0
        %2101 = vdwg.mxu0
        %v2102 = vadd.f32 %v1972, %v2064
        %v2103 = vadd.f32 %v1973, %v2069
        %v2104 = vadd.f32 %v1974, %v2074
        %v2105 = vadd.f32 %v1975, %v2079
        %v2106 = vadd.f32 %v1976, %v2084
        %v2107 = vadd.f32 %v1977, %v2089
        %v2108 = vadd.f32 %v1978, %v2094
        %v2109 = vadd.f32 %v1979, %v2099
        %s2110 = scalar_lea.vmem [#allocation7], 1024
        %v2111 = vld [vmem:[%s2110] sm:$0xff]
        %v2112 = vld [vmem:[%s2110 + $0x8] sm:$0xff]
        %v2113 = vld [vmem:[%s2110 + $0x10] sm:$0xff]
        %v2114 = vld [vmem:[%s2110 + $0x18] sm:$0xff]
        %v2115 = vld [vmem:[%s2110 + $0x20] sm:$0xff]
        %v2116 = vld [vmem:[%s2110 + $0x28] sm:$0xff]
        %v2117 = vld [vmem:[%s2110 + $0x30] sm:$0xff]
        %v2118 = vld [vmem:[%s2110 + $0x38] sm:$0xff]
        %v2119 = vld [vmem:[%s2110 + $0x40] sm:$0xff]
        %v2120 = vld [vmem:[%s2110 + $0x48] sm:$0xff]
        %v2121 = vld [vmem:[%s2110 + $0x50] sm:$0xff]
        %v2122 = vld [vmem:[%s2110 + $0x58] sm:$0xff]
        %v2123 = vld [vmem:[%s2110 + $0x60] sm:$0xff]
        %v2124 = vld [vmem:[%s2110 + $0x68] sm:$0xff]
        %v2125 = vld [vmem:[%s2110 + $0x70] sm:$0xff]
        %v2126 = vld [vmem:[%s2110 + $0x78] sm:$0xff]
        %2127 = vmatprep.subr.mxu0 0.0
        %2128 = vmatpush1.msra.mxu0 %v2126
        %2129 = vmatprep.subr.mxu0 0.0
        %2130 = vmatpush1.msra.mxu0 %v2125
        %2131 = vmatprep.subr.mxu0 0.0
        %2132 = vmatpush1.msra.mxu0 %v2124
        %2133 = vmatprep.subr.mxu0 0.0
        %2134 = vmatpush1.msra.mxu0 %v2123
        %2135 = vmatprep.subr.mxu0 0.0
        %2136 = vmatpush1.msra.mxu0 %v2122
        %2137 = vmatprep.subr.mxu0 0.0
        %2138 = vmatpush1.msra.mxu0 %v2121
        %2139 = vmatprep.subr.mxu0 0.0
        %2140 = vmatpush1.msra.mxu0 %v2120
        %2141 = vmatprep.subr.mxu0 0.0
        %2142 = vmatpush1.msra.mxu0 %v2119
        %2143 = vmatprep.subr.mxu0 0.0
        %2144 = vmatpush1.msra.mxu0 %v2118
        %2145 = vmatprep.subr.mxu0 0.0
        %2146 = vmatpush1.msra.mxu0 %v2117
        %2147 = vmatprep.subr.mxu0 0.0
        %2148 = vmatpush1.msra.mxu0 %v2116
        %2149 = vmatprep.subr.mxu0 0.0
        %2150 = vmatpush1.msra.mxu0 %v2115
        %2151 = vmatprep.subr.mxu0 0.0
        %2152 = vmatpush1.msra.mxu0 %v2114
        %2153 = vmatprep.subr.mxu0 0.0
        %2154 = vmatpush1.msra.mxu0 %v2113
        %2155 = vmatprep.subr.mxu0 0.0
        %2156 = vmatpush1.msra.mxu0 %v2112
        %2157 = vmatprep.subr.mxu0 0.0
        %2158 = vmatpush1.msra.mxu0 %v2111
        %2159 = vmatprep.subr.mxu0 0.0
        %2160 = vmatpush2.msra.mxu0 0.0
        %2161 = vmatprep.subr.mxu0 0.0
        %2162 = vmatpush2.msra.mxu0 0.0
        %2163 = vmatprep.subr.mxu0 0.0
        %2164 = vmatpush2.msra.mxu0 0.0
        %2165 = vmatprep.subr.mxu0 0.0
        %2166 = vmatpush2.msra.mxu0 0.0
        %2167 = vmatprep.subr.mxu0 0.0
        %2168 = vmatpush2.msra.mxu0 0.0
        %2169 = vmatprep.subr.mxu0 0.0
        %2170 = vmatpush2.msra.mxu0 0.0
        %2171 = vmatprep.subr.mxu0 0.0
        %2172 = vmatpush2.msra.mxu0 0.0
        %2173 = vmatprep.subr.mxu0 0.0
        %2174 = vmatpush2.msra.mxu0 0.0
        %2175 = vmatprep.subr.mxu0 0.0
        %2176 = vmatpush2.msra.mxu0 0.0
        %2177 = vmatprep.subr.mxu0 0.0
        %2178 = vmatpush2.msra.mxu0 0.0
        %2179 = vmatprep.subr.mxu0 0.0
        %2180 = vmatpush2.msra.mxu0 0.0
        %2181 = vmatprep.subr.mxu0 0.0
        %2182 = vmatpush2.msra.mxu0 0.0
        %2183 = vmatprep.subr.mxu0 0.0
        %2184 = vmatpush2.msra.mxu0 0.0
        %2185 = vmatprep.subr.mxu0 0.0
        %2186 = vmatpush2.msra.mxu0 0.0
        %2187 = vmatprep.subr.mxu0 0.0
        %2188 = vmatpush2.msra.mxu0 0.0
        %2189 = vmatprep.subr.mxu0 0.0
        %2190 = vmatpush2.msra.mxu0 0.0
        %2191 = vmatprep.mubr.f32.mxu0 0.0
        %2192 = vmatmul.mubr.f32.gmra.mxu0 %v1079
        %v2193 = vpop.f32.mrf.mxu0
        %v2194 = vadd.f32 0.0, %v2193
        %v2195 = vpop.f32.mrf.mxu0
        %2196 = vmatprep.mubr.f32.mxu0 0.0
        %2197 = vmatmul.mubr.f32.gmra.mxu0 %v1080
        %v2198 = vpop.f32.mrf.mxu0
        %v2199 = vadd.f32 0.0, %v2198
        %v2200 = vpop.f32.mrf.mxu0
        %2201 = vmatprep.mubr.f32.mxu0 0.0
        %2202 = vmatmul.mubr.f32.gmra.mxu0 %v1081
        %v2203 = vpop.f32.mrf.mxu0
        %v2204 = vadd.f32 0.0, %v2203
        %v2205 = vpop.f32.mrf.mxu0
        %2206 = vmatprep.mubr.f32.mxu0 0.0
        %2207 = vmatmul.mubr.f32.gmra.mxu0 %v1082
        %v2208 = vpop.f32.mrf.mxu0
        %v2209 = vadd.f32 0.0, %v2208
        %v2210 = vpop.f32.mrf.mxu0
        %2211 = vmatprep.mubr.f32.mxu0 0.0
        %2212 = vmatmul.mubr.f32.gmra.mxu0 %v1083
        %v2213 = vpop.f32.mrf.mxu0
        %v2214 = vadd.f32 0.0, %v2213
        %v2215 = vpop.f32.mrf.mxu0
        %2216 = vmatprep.mubr.f32.mxu0 0.0
        %2217 = vmatmul.mubr.f32.gmra.mxu0 %v1084
        %v2218 = vpop.f32.mrf.mxu0
        %v2219 = vadd.f32 0.0, %v2218
        %v2220 = vpop.f32.mrf.mxu0
        %2221 = vmatprep.mubr.f32.mxu0 0.0
        %2222 = vmatmul.mubr.f32.gmra.mxu0 %v1085
        %v2223 = vpop.f32.mrf.mxu0
        %v2224 = vadd.f32 0.0, %v2223
        %v2225 = vpop.f32.mrf.mxu0
        %2226 = vmatprep.mubr.f32.mxu0 0.0
        %2227 = vmatmul.mubr.f32.gmra.mxu0 %v1086
        %v2228 = vpop.f32.mrf.mxu0
        %v2229 = vadd.f32 0.0, %v2228
        %v2230 = vpop.f32.mrf.mxu0
        %2231 = vdwg.mxu0
        %v2232 = vadd.f32 %v2102, %v2194
        %v2233 = vadd.f32 %v2103, %v2199
        %v2234 = vadd.f32 %v2104, %v2204
        %v2235 = vadd.f32 %v2105, %v2209
        %v2236 = vadd.f32 %v2106, %v2214
        %v2237 = vadd.f32 %v2107, %v2219
        %v2238 = vadd.f32 %v2108, %v2224
        %v2239 = vadd.f32 %v2109, %v2229
        %v2240 = vld [vmem:[%s9] sm:$0x1]
        %v2242 = vlaneseq
        %v2243 = vshrl.u32 %v2242, 7
        %v2244 = vsub.s32 0, %v2243
        %v2245 = vrot.slane %v2240, %v2244
        %v2247 = vmul.f32 %v2232, %v2245
        %v2248 = vmul.f32 %v2233, %v2245
        %v2249 = vmul.f32 %v2234, %v2245
        %v2250 = vmul.f32 %v2235, %v2245
        %v2251 = vmul.f32 %v2236, %v2245
        %v2252 = vmul.f32 %v2237, %v2245
        %v2253 = vmul.f32 %v2238, %v2245
        %v2254 = vmul.f32 %v2239, %v2245
        %v2255 = vld [vmem:[%s10] sm:$0x1]
        %v2257 = vlaneseq
        %v2258 = vshrl.u32 %v2257, 7
        %v2259 = vsub.s32 0, %v2258
        %v2260 = vrot.slane %v2255, %v2259
        %v2262 = vadd.f32 %v2247, %v2260
        %v2263 = vadd.f32 %v2248, %v2260
        %v2264 = vadd.f32 %v2249, %v2260
        %v2265 = vadd.f32 %v2250, %v2260
        %v2266 = vadd.f32 %v2251, %v2260
        %v2267 = vadd.f32 %v2252, %v2260
        %v2268 = vadd.f32 %v2253, %v2260
        %v2269 = vadd.f32 %v2254, %v2260
        %v2270 = vmax.f32 %v2262, 0.0
        %v2271 = vmax.f32 %v2263, 0.0
        %v2272 = vmax.f32 %v2264, 0.0
        %v2273 = vmax.f32 %v2265, 0.0
        %v2274 = vmax.f32 %v2266, 0.0
        %v2275 = vmax.f32 %v2267, 0.0
        %v2276 = vmax.f32 %v2268, 0.0
        %v2277 = vmax.f32 %v2269, 0.0
        %v2278 = vld [vmem:[#allocation8] sm:$0xff]
        %v2279 = vld [vmem:[#allocation8 + $0x8] sm:$0xff]
        %v2280 = vld [vmem:[#allocation8 + $0x10] sm:$0xff]
        %v2281 = vld [vmem:[#allocation8 + $0x18] sm:$0xff]
        %v2282 = vld [vmem:[#allocation8 + $0x20] sm:$0xff]
        %v2283 = vld [vmem:[#allocation8 + $0x28] sm:$0xff]
        %v2284 = vld [vmem:[#allocation8 + $0x30] sm:$0xff]
        %v2285 = vld [vmem:[#allocation8 + $0x38] sm:$0xff]
        %v2286 = vld [vmem:[#allocation8 + $0x40] sm:$0xff]
        %v2287 = vld [vmem:[#allocation8 + $0x48] sm:$0xff]
        %v2288 = vld [vmem:[#allocation8 + $0x50] sm:$0xff]
        %v2289 = vld [vmem:[#allocation8 + $0x58] sm:$0xff]
        %v2290 = vld [vmem:[#allocation8 + $0x60] sm:$0xff]
        %v2291 = vld [vmem:[#allocation8 + $0x68] sm:$0xff]
        %v2292 = vld [vmem:[#allocation8 + $0x70] sm:$0xff]
        %v2293 = vld [vmem:[#allocation8 + $0x78] sm:$0xff]
        %2294 = vmatprep.subr.mxu0 0.0
        %2295 = vmatpush1.msra.mxu0 %v2293
        %2296 = vmatprep.subr.mxu0 0.0
        %2297 = vmatpush1.msra.mxu0 %v2292
        %2298 = vmatprep.subr.mxu0 0.0
        %2299 = vmatpush1.msra.mxu0 %v2291
        %2300 = vmatprep.subr.mxu0 0.0
        %2301 = vmatpush1.msra.mxu0 %v2290
        %2302 = vmatprep.subr.mxu0 0.0
        %2303 = vmatpush1.msra.mxu0 %v2289
        %2304 = vmatprep.subr.mxu0 0.0
        %2305 = vmatpush1.msra.mxu0 %v2288
        %2306 = vmatprep.subr.mxu0 0.0
        %2307 = vmatpush1.msra.mxu0 %v2287
        %2308 = vmatprep.subr.mxu0 0.0
        %2309 = vmatpush1.msra.mxu0 %v2286
        %2310 = vmatprep.subr.mxu0 0.0
        %2311 = vmatpush1.msra.mxu0 %v2285
        %2312 = vmatprep.subr.mxu0 0.0
        %2313 = vmatpush1.msra.mxu0 %v2284
        %2314 = vmatprep.subr.mxu0 0.0
        %2315 = vmatpush1.msra.mxu0 %v2283
        %2316 = vmatprep.subr.mxu0 0.0
        %2317 = vmatpush1.msra.mxu0 %v2282
        %2318 = vmatprep.subr.mxu0 0.0
        %2319 = vmatpush1.msra.mxu0 %v2281
        %2320 = vmatprep.subr.mxu0 0.0
        %2321 = vmatpush1.msra.mxu0 %v2280
        %2322 = vmatprep.subr.mxu0 0.0
        %2323 = vmatpush1.msra.mxu0 %v2279
        %2324 = vmatprep.subr.mxu0 0.0
        %2325 = vmatpush1.msra.mxu0 %v2278
        %2326 = vmatprep.subr.mxu0 0.0
        %2327 = vmatpush2.msra.mxu0 0.0
        %2328 = vmatprep.subr.mxu0 0.0
        %2329 = vmatpush2.msra.mxu0 0.0
        %2330 = vmatprep.subr.mxu0 0.0
        %2331 = vmatpush2.msra.mxu0 0.0
        %2332 = vmatprep.subr.mxu0 0.0
        %2333 = vmatpush2.msra.mxu0 0.0
        %2334 = vmatprep.subr.mxu0 0.0
        %2335 = vmatpush2.msra.mxu0 0.0
        %2336 = vmatprep.subr.mxu0 0.0
        %2337 = vmatpush2.msra.mxu0 0.0
        %2338 = vmatprep.subr.mxu0 0.0
        %2339 = vmatpush2.msra.mxu0 0.0
        %2340 = vmatprep.subr.mxu0 0.0
        %2341 = vmatpush2.msra.mxu0 0.0
        %2342 = vmatprep.subr.mxu0 0.0
        %2343 = vmatpush2.msra.mxu0 0.0
        %2344 = vmatprep.subr.mxu0 0.0
        %2345 = vmatpush2.msra.mxu0 0.0
        %2346 = vmatprep.subr.mxu0 0.0
        %2347 = vmatpush2.msra.mxu0 0.0
        %2348 = vmatprep.subr.mxu0 0.0
        %2349 = vmatpush2.msra.mxu0 0.0
        %2350 = vmatprep.subr.mxu0 0.0
        %2351 = vmatpush2.msra.mxu0 0.0
        %2352 = vmatprep.subr.mxu0 0.0
        %2353 = vmatpush2.msra.mxu0 0.0
        %2354 = vmatprep.subr.mxu0 0.0
        %2355 = vmatpush2.msra.mxu0 0.0
        %2356 = vmatprep.subr.mxu0 0.0
        %2357 = vmatpush2.msra.mxu0 0.0
        %2358 = vmatprep.mubr.f32.mxu0 0.0
        %2359 = vmatmul.mubr.f32.gmra.mxu0 %v2270
        %v2360 = vpop.f32.mrf.mxu0
        %v2361 = vadd.f32 0.0, %v2360
        %v2362 = vpop.f32.mrf.mxu0
        %2363 = vmatprep.mubr.f32.mxu0 0.0
        %2364 = vmatmul.mubr.f32.gmra.mxu0 %v2271
        %v2365 = vpop.f32.mrf.mxu0
        %v2366 = vadd.f32 0.0, %v2365
        %v2367 = vpop.f32.mrf.mxu0
        %2368 = vmatprep.mubr.f32.mxu0 0.0
        %2369 = vmatmul.mubr.f32.gmra.mxu0 %v2272
        %v2370 = vpop.f32.mrf.mxu0
        %v2371 = vadd.f32 0.0, %v2370
        %v2372 = vpop.f32.mrf.mxu0
        %2373 = vmatprep.mubr.f32.mxu0 0.0
        %2374 = vmatmul.mubr.f32.gmra.mxu0 %v2273
        %v2375 = vpop.f32.mrf.mxu0
        %v2376 = vadd.f32 0.0, %v2375
        %v2377 = vpop.f32.mrf.mxu0
        %2378 = vmatprep.mubr.f32.mxu0 0.0
        %2379 = vmatmul.mubr.f32.gmra.mxu0 %v2274
        %v2380 = vpop.f32.mrf.mxu0
        %v2381 = vadd.f32 0.0, %v2380
        %v2382 = vpop.f32.mrf.mxu0
        %2383 = vmatprep.mubr.f32.mxu0 0.0
        %2384 = vmatmul.mubr.f32.gmra.mxu0 %v2275
        %v2385 = vpop.f32.mrf.mxu0
        %v2386 = vadd.f32 0.0, %v2385
        %v2387 = vpop.f32.mrf.mxu0
        %2388 = vmatprep.mubr.f32.mxu0 0.0
        %2389 = vmatmul.mubr.f32.gmra.mxu0 %v2276
        %v2390 = vpop.f32.mrf.mxu0
        %v2391 = vadd.f32 0.0, %v2390
        %v2392 = vpop.f32.mrf.mxu0
        %2393 = vmatprep.mubr.f32.mxu0 0.0
        %2394 = vmatmul.mubr.f32.gmra.mxu0 %v2277
        %v2395 = vpop.f32.mrf.mxu0
        %v2396 = vadd.f32 0.0, %v2395
        %v2397 = vpop.f32.mrf.mxu0
        %2398 = vdwg.mxu0
        %v2399 = vld [vmem:[%s11] sm:$0x1]
        %v2401 = vlaneseq
        %v2402 = vshrl.u32 %v2401, 7
        %v2403 = vsub.s32 0, %v2402
        %v2404 = vrot.slane %v2399, %v2403
        %v2406 = vmul.f32 %v2361, %v2404
        %v2407 = vmul.f32 %v2366, %v2404
        %v2408 = vmul.f32 %v2371, %v2404
        %v2409 = vmul.f32 %v2376, %v2404
        %v2410 = vmul.f32 %v2381, %v2404
        %v2411 = vmul.f32 %v2386, %v2404
        %v2412 = vmul.f32 %v2391, %v2404
        %v2413 = vmul.f32 %v2396, %v2404
        %v2414 = vld [vmem:[%s12] sm:$0x1]
        %v2416 = vlaneseq
        %v2417 = vshrl.u32 %v2416, 7
        %v2418 = vsub.s32 0, %v2417
        %v2419 = vrot.slane %v2414, %v2418
        %v2421 = vadd.f32 %v2406, %v2419
        %v2422 = vadd.f32 %v2407, %v2419
        %v2423 = vadd.f32 %v2408, %v2419
        %v2424 = vadd.f32 %v2409, %v2419
        %v2425 = vadd.f32 %v2410, %v2419
        %v2426 = vadd.f32 %v2411, %v2419
        %v2427 = vadd.f32 %v2412, %v2419
        %v2428 = vadd.f32 %v2413, %v2419
        %v2429 = vadd.f32 %v2421, %v553
        %v2430 = vadd.f32 %v2422, %v554
        %v2431 = vadd.f32 %v2423, %v555
        %v2432 = vadd.f32 %v2424, %v556
        %v2433 = vadd.f32 %v2425, %v557
        %v2434 = vadd.f32 %v2426, %v558
        %v2435 = vadd.f32 %v2427, %v559
        %v2436 = vadd.f32 %v2428, %v560
        %v2437 = vmax.f32 %v2429, 0.0
        %v2438 = vmax.f32 %v2430, 0.0
        %v2439 = vmax.f32 %v2431, 0.0
        %v2440 = vmax.f32 %v2432, 0.0
        %v2441 = vmax.f32 %v2433, 0.0
        %v2442 = vmax.f32 %v2434, 0.0
        %v2443 = vmax.f32 %v2435, 0.0
        %v2444 = vmax.f32 %v2436, 0.0
        %2445 = vst [vmem:[%s550] sm:$0xff] %v2437
        %2446 = vst [vmem:[%s550 + $0x8] sm:$0xff] %v2438
        %2447 = vst [vmem:[%s550 + $0x10] sm:$0xff] %v2439
        %2448 = vst [vmem:[%s550 + $0x18] sm:$0xff] %v2440
        %2449 = vst [vmem:[%s550 + $0x20] sm:$0xff] %v2441
        %2450 = vst [vmem:[%s550 + $0x28] sm:$0xff] %v2442
        %2451 = vst [vmem:[%s550 + $0x30] sm:$0xff] %v2443
        %2452 = vst [vmem:[%s550 + $0x38] sm:$0xff] %v2444
        %s2453 = sand.u32 %s343, 1
        %s2454 = scalar_lea.sflag [#allocation4], %s2453
        %s2455 = sand.u32 %s343, 1
        %s2456 = smul.addr %s2455, 64
        %s2457 = scalar_lea.vmem [#allocation10], %s2456
        // Predicated region
        $region89: #{tpu_custom_call.1} parent=71 // pred_check
          %p2458 = pneg %p353
        $region90: #{tpu_custom_call.1} parent=71 // pred_check_branch
          %2460 = sbr.rel (%p2458) target = $region92
        $region91: #{tpu_custom_call.1} parent=71 // pred_region
          %s2461 = smul.u32 4, %s39
          %s2463 = ssub.s32 1024, 1024
          %2464 = vsyncadd %s2454, %s2463
          %s2465 = smul.addr %s2461, 2
          %s2466 = smul.addr %s38, 32
          %s2467 = sadd.s32 %s2465, %s2466
          %s2468 = smul.addr %s2467, 128
          %s2469 = scalar_lea.hbm %s13, %s2468
          %s2470 = sshll.u32 %s2457, 4
          %s2471 = int_to_ptr.vmem [resolvable:$true] %s2470
          %2476 = dma.vmem_to_hbm [thread:$0]  %s2471, 1024, %s2469, %s2454, 128, 128, 8
        $region92: #{tpu_custom_call.1} parent=71 // pred_fallthru
          _
      $region72: #{tpu_custom_call.1} parent=5 // pred_fallthru
        _
      %p2477 = scmp.le.s32.totalorder 2, %s29
      // Predicated region
      $region93: #{tpu_custom_call.1} parent=5 // pred_check
        %p2478 = pneg %p2477
      $region94: #{tpu_custom_call.1} parent=5 // pred_check_branch
        %2480 = sbr.rel (%p2478) target = $region96
      $region95: #{tpu_custom_call.1} parent=5 // pred_region
        %s2481 = ssub.s32 %s29, 2
        // Predicated region
        $region97: #{tpu_custom_call.1} parent=95 // pred_check
          %p2482 = pneg %p359
        $region98: #{tpu_custom_call.1} parent=95 // pred_check_branch
          %2484 = sbr.rel (%p2482) target = $region100
        $region99: #{tpu_custom_call.1} parent=95 // pred_region
          %s2485 = sand.u32 %s344, 1
          %s2486 = scalar_lea.sflag [#allocation4], %s2485
          %s2487 = sand.u32 %s344, 1
          %s2488 = smul.addr %s2487, 64
          %s2489 = scalar_lea.vmem [#allocation10], %s2488
          %2490 = dma.done %s2486, 1024
        $region100: #{tpu_custom_call.1} parent=95 // pred_fallthru
          _
      $region96: #{tpu_custom_call.1} parent=5 // pred_fallthru
        _
    $region6: #{tpu_custom_call.1} parent=1 // loop_footer
      %s33 = sadd.s32 1, %s29
    $region7: #{tpu_custom_call.1} parent=1 // loop_footer_branch
      %28 = sbr.rel target = $region3
    $region8: #{tpu_custom_call.1} parent=1 // loop_exit
      _
    %2491 = vsyncpa [#allocation3], 1
    %s2492 = scalar_lea.sflag [#allocation3], 1
    %2493 = vsyncpa %s2492, 1
    %2494 = vsyncpa [#allocation6], 1
    %s2495 = scalar_lea.sflag [#allocation6], 1
    %2496 = vsyncpa %s2495, 1
    %2497 = vsyncpa [#allocation9], 1
    %2498 = vsyncpa [#allocation4], 1
    %s2499 = scalar_lea.sflag [#allocation4], 1
    %2500 = vsyncpa %s2499, 1

// kernel: tpu_custom_call.1
$region0: #{tpu_custom_call.1}
  #allocation0 [shape = 'u32[]', space=smem, size = 0x4, offset = 0x4, fixed_abs, tag = 'smem constant byte address 0x4 - core index']
  #allocation1 [shape = 'u32[144,128]{1,0:T(1,128)}', space=vmem, size = 0x12000, scoped, tag = 'internal scratch']
  %s0 = inlined_call_operand.hbm [shape: f32[2,16,16,128], index: 0, kind: input, shape index: {}]
  %s1 = inlined_call_operand.hbm [shape: f32[2,4,2,16,128], index: 1, kind: input, shape index: {}]
  %s2 = inlined_call_operand.vmem [shape: f32[96,1], index: 2, kind: input, shape index: {}]
  %s3 = inlined_call_operand.vmem [shape: f32[96,1], index: 3, kind: input, shape index: {}]
  %s4 = inlined_call_operand.vmem [shape: f32[128,128], index: 4, kind: input, shape index: {}]
  %s5 = inlined_call_operand.hbm [shape: f32[9,128,128], index: 5, kind: input, shape index: {}]
  %s6 = inlined_call_operand.hbm [shape: f32[128,128], index: 6, kind: input, shape index: {}]
  %s7 = inlined_call_operand.vmem [shape: f32[1,128], index: 7, kind: input, shape index: {}]
  %s8 = inlined_call_operand.vmem [shape: f32[1,128], index: 8, kind: input, shape index: {}]
  %s9 = inlined_call_operand.vmem [shape: f32[1,128], index: 9, kind: input, shape index: {}]
  %s10 = inlined_call_operand.vmem [shape: f32[1,128], index: 10, kind: input, shape index: {}]
  %s11 = inlined_call_operand.vmem [shape: f32[1,128], index: 11, kind: input, shape index: {}]
  %s12 = inlined_call_operand.vmem [shape: f32[1,128], index: 12, kind: input, shape index: {}]
  %s13 = inlined_call_operand.hbm [shape: f32[2,16,16,128], index: 13, kind: output, shape index: {}]
  %s14 = sld [smem:[#allocation0]]
  $region101: #{tpu_custom_call.1} parent=0
    _
  %s16 = ssub.s32 1, %s14
  %s17 = scalar_select 0, %s16, %s14
  $region1: #{tpu_custom_call.1} parent=0
    #allocation2 [shape = 'u8[65536]{0}', space=vmem, size = 0x10000, scoped, tag = 'input window, operand 0']
    #allocation3 [shape = 's32[2]{0}', space=sflag, size = 0x8, scoped, tag = 'scoped memory for tpu_custom_call.1']
    #allocation4 [shape = 's32[2]{0}', space=sflag, size = 0x8, scoped, tag = 'scoped memory for tpu_custom_call.1']
    #allocation5 [shape = 'u8[32768]{0}', space=vmem, size = 0x8000, scoped, tag = 'input window, operand 1']
    #allocation6 [shape = 's32[2]{0}', space=sflag, size = 0x8, scoped, tag = 'scoped memory for tpu_custom_call.1']
    #allocation7 [shape = 'u8[589824]{0}', space=vmem, size = 0x90000, scoped, tag = 'input window, operand 5, single buffered']
    #allocation8 [shape = 'u8[65536]{0}', space=vmem, size = 0x10000, scoped, tag = 'input window, operand 6, single buffered']
    #allocation9 [shape = 's32[1]{0}', space=sflag, size = 0x4, scoped, tag = 'scoped memory for tpu_custom_call.1']
    #allocation10 [shape = 'u8[65536]{0}', space=vmem, size = 0x10000, scoped, tag = 'output window, operand 0']
    %18 = vsyncpa [#allocation3], 0
    %s19 = scalar_lea.sflag [#allocation3], 1
    %20 = vsyncpa %s19, 0
    %21 = vsyncpa [#allocation6], 0
    %s22 = scalar_lea.sflag [#allocation6], 1
    %23 = vsyncpa %s22, 0
    %24 = vsyncpa [#allocation9], 0
    %25 = vsyncpa [#allocation4], 0
    %s26 = scalar_lea.sflag [#allocation4], 1
    %27 = vsyncpa %s26, 0
    loop: start=0, step=1, limit=10
    $region2: #{tpu_custom_call.1} parent=1 // loop_pre_header
      _
    $region3: #{tpu_custom_call.1} parent=1 // loop_header
      %s29 = sphi 0, %s33
      %p30 = scmp.ge.s32.totalorder %s29, 10
      %s36 = sphi 0, %s48
      %s37 = sphi 0, %s44
      %s38 = sphi 0, %s36
      %s39 = sphi 0, %s37
      %s40 = sphi 0, %s38
      %s41 = sphi 0, %s39
      %s53 = sphi 0, %s55
      %s56 = sphi 0, %s53
      %s57 = sphi 0, %s56
      %s73 = sphi 0, %s57
      %s81 = sphi 0, %s83
      %s84 = sphi 0, %s81
      %s85 = sphi 0, %s84
      %s101 = sphi 0, %s85
      %s105 = sphi 0, %s105
      %s107 = sphi 0, %s105
      %s108 = sphi 0, %s107
      %s122 = sphi 0, %s108
      %s126 = sphi 0, %s126
      %s128 = sphi 0, %s126
      %s129 = sphi 0, %s128
      %s143 = sphi 0, %s129
      %s147 = sphi 0, %s147
      %s149 = sphi 0, %s147
      %s150 = sphi 0, %s149
      %s164 = sphi 0, %s150
      %s168 = sphi 0, %s168
      %s170 = sphi 0, %s168
      %s171 = sphi 0, %s170
      %s185 = sphi 0, %s171
      %s189 = sphi 0, %s189
      %s191 = sphi 0, %s189
      %s192 = sphi 0, %s191
      %s206 = sphi 0, %s192
      %s210 = sphi 0, %s210
      %s212 = sphi 0, %s210
      %s213 = sphi 0, %s212
      %s227 = sphi 0, %s213
      %s231 = sphi 0, %s231
      %s233 = sphi 0, %s231
      %s234 = sphi 0, %s233
      %s248 = sphi 0, %s234
      %s252 = sphi 0, %s252
      %s254 = sphi 0, %s252
      %s255 = sphi 0, %s254
      %s269 = sphi 0, %s255
      %s273 = sphi 0, %s273
      %s275 = sphi 0, %s273
      %s276 = sphi 0, %s275
      %s290 = sphi 0, %s276
      %s294 = sphi 0, %s294
      %s296 = sphi 0, %s294
      %s297 = sphi 0, %s296
      %s311 = sphi 0, %s297
      %s315 = sphi 0, %s315
      %s317 = sphi 0, %s315
      %s318 = sphi 0, %s317
      %s332 = sphi 0, %s318
      %s340 = sphi 0, %s342
      %s343 = sphi 0, %s340
      %s344 = sphi 0, %s343
      %s360 = sphi 0, %s344
    $region4: #{tpu_custom_call.1} parent=1 // loop_header_branch
      %32 = sbr.rel (%p30) target = $region8
    $region5: #{tpu_custom_call.1} parent=1 // loop_body
      %s34 = ssub.s32 %s29, 1
      %s35 = ssub.s32 %s29, 2
      %s42 = sadd.s32 1, %s37
      %p43 = scmp.ge.s32.totalorder %s42, 4
      %s44 = scalar_select %p43, 0, %s42
      %s45 = sadd.s32 1, %s36
      %s46 = scalar_select %p43, %s45, %s36
      %p47 = scmp.ge.s32.totalorder %s46, 2
      %s48 = scalar_select %p47, 0, %s46
      %s49 = ssub.s32 %s36, %s48
      %s50 = ssub.s32 %s37, %s44
      %s51 = sor.u32 %s49, %s50
      %p52 = scmp.eq.s32.totalorder %s51, 0
      %s54 = sadd.s32 %s53, 1
      %s55 = scalar_select %p52, %s53, %s54
      %p58 = pneg %p52
      %p59 = scmp.eq.s32.totalorder %s29, 7
      %p60 = por %p58, %p59
      %p61 = scmp.ne.s32.totalorder %s53, %s56
      %p62 = scmp.eq.s32.totalorder %s29, 0
      %p63 = por %p61, %p62
      %p64 = scmp.ne.s32.totalorder %s53, %s56
      %p65 = scmp.eq.s32.totalorder %s34, 7
      %p66 = por %p64, %p65
      %p67 = scmp.ne.s32.totalorder %s56, %s57
      %p68 = scmp.eq.s32.totalorder %s34, 0
      %p69 = por %p67, %p68
      %p70 = scmp.ne.s32.totalorder %s56, %s57
      %p71 = scmp.eq.s32.totalorder %s35, 7
      %p72 = por %p70, %p71
      %p74 = scmp.ne.s32.totalorder %s57, %s73
      %p75 = scmp.eq.s32.totalorder %s35, 0
      %p76 = por %p74, %p75
      %s77 = ssub.s32 %s36, %s48
      %s78 = ssub.s32 %s37, %s44
      %s79 = sor.u32 %s77, %s78
      %p80 = scmp.eq.s32.totalorder %s79, 0
      %s82 = sadd.s32 %s81, 1
      %s83 = scalar_select %p80, %s81, %s82
      %p86 = pneg %p80
      %p87 = scmp.eq.s32.totalorder %s29, 7
      %p88 = por %p86, %p87
      %p89 = scmp.ne.s32.totalorder %s81, %s84
      %p90 = scmp.eq.s32.totalorder %s29, 0
      %p91 = por %p89, %p90
      %p92 = scmp.ne.s32.totalorder %s81, %s84
      %p93 = scmp.eq.s32.totalorder %s34, 7
      %p94 = por %p92, %p93
      %p95 = scmp.ne.s32.totalorder %s84, %s85
      %p96 = scmp.eq.s32.totalorder %s34, 0
      %p97 = por %p95, %p96
      %p98 = scmp.ne.s32.totalorder %s84, %s85
      %p99 = scmp.eq.s32.totalorder %s35, 7
      %p100 = por %p98, %p99
      %p102 = scmp.ne.s32.totalorder %s85, %s101
      %p103 = scmp.eq.s32.totalorder %s35, 0
      %p104 = por %p102, %p103
      %s106 = sadd.s32 %s105, 1
      %p109 = scmp.eq.s32.totalorder %s29, 7
      %p110 = scmp.ne.s32.totalorder %s105, %s107
      %p111 = scmp.eq.s32.totalorder %s29, 0
      %p112 = por %p110, %p111
      %p113 = scmp.ne.s32.totalorder %s105, %s107
      %p114 = scmp.eq.s32.totalorder %s34, 7
      %p115 = por %p113, %p114
      %p116 = scmp.ne.s32.totalorder %s107, %s108
      %p117 = scmp.eq.s32.totalorder %s34, 0
      %p118 = por %p116, %p117
      %p119 = scmp.ne.s32.totalorder %s107, %s108
      %p120 = scmp.eq.s32.totalorder %s35, 7
      %p121 = por %p119, %p120
      %p123 = scmp.ne.s32.totalorder %s108, %s122
      %p124 = scmp.eq.s32.totalorder %s35, 0
      %p125 = por %p123, %p124
      %s127 = sadd.s32 %s126, 1
      %p130 = scmp.eq.s32.totalorder %s29, 7
      %p131 = scmp.ne.s32.totalorder %s126, %s128
      %p132 = scmp.eq.s32.totalorder %s29, 0
      %p133 = por %p131, %p132
      %p134 = scmp.ne.s32.totalorder %s126, %s128
      %p135 = scmp.eq.s32.totalorder %s34, 7
      %p136 = por %p134, %p135
      %p137 = scmp.ne.s32.totalorder %s128, %s129
      %p138 = scmp.eq.s32.totalorder %s34, 0
      %p139 = por %p137, %p138
      %p140 = scmp.ne.s32.totalorder %s128, %s129
      %p141 = scmp.eq.s32.totalorder %s35, 7
      %p142 = por %p140, %p141
      %p144 = scmp.ne.s32.totalorder %s129, %s143
      %p145 = scmp.eq.s32.totalorder %s35, 0
      %p146 = por %p144, %p145
      %s148 = sadd.s32 %s147, 1
      %p151 = scmp.eq.s32.totalorder %s29, 7
      %p152 = scmp.ne.s32.totalorder %s147, %s149
      %p153 = scmp.eq.s32.totalorder %s29, 0
      %p154 = por %p152, %p153
      %p155 = scmp.ne.s32.totalorder %s147, %s149
      %p156 = scmp.eq.s32.totalorder %s34, 7
      %p157 = por %p155, %p156
      %p158 = scmp.ne.s32.totalorder %s149, %s150
      %p159 = scmp.eq.s32.totalorder %s34, 0
      %p160 = por %p158, %p159
      %p161 = scmp.ne.s32.totalorder %s149, %s150
      %p162 = scmp.eq.s32.totalorder %s35, 7
      %p163 = por %p161, %p162
      %p165 = scmp.ne.s32.totalorder %s150, %s164
      %p166 = scmp.eq.s32.totalorder %s35, 0
      %p167 = por %p165, %p166
      %s169 = sadd.s32 %s168, 1
      %p172 = scmp.eq.s32.totalorder %s29, 7
      %p173 = scmp.ne.s32.totalorder %s168, %s170
      %p174 = scmp.eq.s32.totalorder %s29, 0
      %p175 = por %p173, %p174
      %p176 = scmp.ne.s32.totalorder %s168, %s170
      %p177 = scmp.eq.s32.totalorder %s34, 7
      %p178 = por %p176, %p177
      %p179 = scmp.ne.s32.totalorder %s170, %s171
      %p180 = scmp.eq.s32.totalorder %s34, 0
      %p181 = por %p179, %p180
      %p182 = scmp.ne.s32.totalorder %s170, %s171
      %p183 = scmp.eq.s32.totalorder %s35, 7
      %p184 = por %p182, %p183
      %p186 = scmp.ne.s32.totalorder %s171, %s185
      %p187 = scmp.eq.s32.totalorder %s35, 0
      %p188 = por %p186, %p187
      %s190 = sadd.s32 %s189, 1
      %p193 = scmp.eq.s32.totalorder %s29, 7
      %p194 = scmp.ne.s32.totalorder %s189, %s191
      %p195 = scmp.eq.s32.totalorder %s29, 0
      %p196 = por %p194, %p195
      %p197 = scmp.ne.s32.totalorder %s189, %s191
      %p198 = scmp.eq.s32.totalorder %s34, 7
      %p199 = por %p197, %p198
      %p200 = scmp.ne.s32.totalorder %s191, %s192
      %p201 = scmp.eq.s32.totalorder %s34, 0
      %p202 = por %p200, %p201
      %p203 = scmp.ne.s32.totalorder %s191, %s192
      %p204 = scmp.eq.s32.totalorder %s35, 7
      %p205 = por %p203, %p204
      %p207 = scmp.ne.s32.totalorder %s192, %s206
      %p208 = scmp.eq.s32.totalorder %s35, 0
      %p209 = por %p207, %p208
      %s211 = sadd.s32 %s210, 1
      %p214 = scmp.eq.s32.totalorder %s29, 7
      %p215 = scmp.ne.s32.totalorder %s210, %s212
      %p216 = scmp.eq.s32.totalorder %s29, 0
      %p217 = por %p215, %p216
      %p218 = scmp.ne.s32.totalorder %s210, %s212
      %p219 = scmp.eq.s32.totalorder %s34, 7
      %p220 = por %p218, %p219
      %p221 = scmp.ne.s32.totalorder %s212, %s213
      %p222 = scmp.eq.s32.totalorder %s34, 0
      %p223 = por %p221, %p222
      %p224 = scmp.ne.s32.totalorder %s212, %s213
      %p225 = scmp.eq.s32.totalorder %s35, 7
      %p226 = por %p224, %p225
      %p228 = scmp.ne.s32.totalorder %s213, %s227
      %p229 = scmp.eq.s32.totalorder %s35, 0
      %p230 = por %p228, %p229
      %s232 = sadd.s32 %s231, 1
      %p235 = scmp.eq.s32.totalorder %s29, 7
      %p236 = scmp.ne.s32.totalorder %s231, %s233
      %p237 = scmp.eq.s32.totalorder %s29, 0
      %p238 = por %p236, %p237
      %p239 = scmp.ne.s32.totalorder %s231, %s233
      %p240 = scmp.eq.s32.totalorder %s34, 7
      %p241 = por %p239, %p240
      %p242 = scmp.ne.s32.totalorder %s233, %s234
      %p243 = scmp.eq.s32.totalorder %s34, 0
      %p244 = por %p242, %p243
      %p245 = scmp.ne.s32.totalorder %s233, %s234
      %p246 = scmp.eq.s32.totalorder %s35, 7
      %p247 = por %p245, %p246
      %p249 = scmp.ne.s32.totalorder %s234, %s248
      %p250 = scmp.eq.s32.totalorder %s35, 0
      %p251 = por %p249, %p250
      %s253 = sadd.s32 %s252, 1
      %p256 = scmp.eq.s32.totalorder %s29, 7
      %p257 = scmp.ne.s32.totalorder %s252, %s254
      %p258 = scmp.eq.s32.totalorder %s29, 0
      %p259 = por %p257, %p258
      %p260 = scmp.ne.s32.totalorder %s252, %s254
      %p261 = scmp.eq.s32.totalorder %s34, 7
      %p262 = por %p260, %p261
      %p263 = scmp.ne.s32.totalorder %s254, %s255
      %p264 = scmp.eq.s32.totalorder %s34, 0
      %p265 = por %p263, %p264
      %p266 = scmp.ne.s32.totalorder %s254, %s255
      %p267 = scmp.eq.s32.totalorder %s35, 7
      %p268 = por %p266, %p267
      %p270 = scmp.ne.s32.totalorder %s255, %s269
      %p271 = scmp.eq.s32.totalorder %s35, 0
      %p272 = por %p270, %p271
      %s274 = sadd.s32 %s273, 1
      %p277 = scmp.eq.s32.totalorder %s29, 7
      %p278 = scmp.ne.s32.totalorder %s273, %s275
      %p279 = scmp.eq.s32.totalorder %s29, 0
      %p280 = por %p278, %p279
      %p281 = scmp.ne.s32.totalorder %s273, %s275
      %p282 = scmp.eq.s32.totalorder %s34, 7
      %p283 = por %p281, %p282
      %p284 = scmp.ne.s32.totalorder %s275, %s276
      %p285 = scmp.eq.s32.totalorder %s34, 0
      %p286 = por %p284, %p285
      %p287 = scmp.ne.s32.totalorder %s275, %s276
      %p288 = scmp.eq.s32.totalorder %s35, 7
      %p289 = por %p287, %p288
      %p291 = scmp.ne.s32.totalorder %s276, %s290
      %p292 = scmp.eq.s32.totalorder %s35, 0
      %p293 = por %p291, %p292
      %s295 = sadd.s32 %s294, 1
      %p298 = scmp.eq.s32.totalorder %s29, 7
      %p299 = scmp.ne.s32.totalorder %s294, %s296
      %p300 = scmp.eq.s32.totalorder %s29, 0
      %p301 = por %p299, %p300
      %p302 = scmp.ne.s32.totalorder %s294, %s296
      %p303 = scmp.eq.s32.totalorder %s34, 7
      %p304 = por %p302, %p303
      %p305 = scmp.ne.s32.totalorder %s296, %s297
      %p306 = scmp.eq.s32.totalorder %s34, 0
      %p307 = por %p305, %p306
      %p308 = scmp.ne.s32.totalorder %s296, %s297
      %p309 = scmp.eq.s32.totalorder %s35, 7
      %p310 = por %p308, %p309
      %p312 = scmp.ne.s32.totalorder %s297, %s311
      %p313 = scmp.eq.s32.totalorder %s35, 0
      %p314 = por %p312, %p313
      %s316 = sadd.s32 %s315, 1
      %p319 = scmp.eq.s32.totalorder %s29, 7
      %p320 = scmp.ne.s32.totalorder %s315, %s317
      %p321 = scmp.eq.s32.totalorder %s29, 0
      %p322 = por %p320, %p321
      %p323 = scmp.ne.s32.totalorder %s315, %s317
      %p324 = scmp.eq.s32.totalorder %s34, 7
      %p325 = por %p323, %p324
      %p326 = scmp.ne.s32.totalorder %s317, %s318
      %p327 = scmp.eq.s32.totalorder %s34, 0
      %p328 = por %p326, %p327
      %p329 = scmp.ne.s32.totalorder %s317, %s318
      %p330 = scmp.eq.s32.totalorder %s35, 7
      %p331 = por %p329, %p330
      %p333 = scmp.ne.s32.totalorder %s318, %s332
      %p334 = scmp.eq.s32.totalorder %s35, 0
      %p335 = por %p333, %p334
      %s336 = ssub.s32 %s36, %s48
      %s337 = ssub.s32 %s37, %s44
      %s338 = sor.u32 %s336, %s337
      %p339 = scmp.eq.s32.totalorder %s338, 0
      %s341 = sadd.s32 %s340, 1
      %s342 = scalar_select %p339, %s340, %s341
      %p345 = pneg %p339
      %p346 = scmp.eq.s32.totalorder %s29, 7
      %p347 = por %p345, %p346
      %p348 = scmp.ne.s32.totalorder %s340, %s343
      %p349 = scmp.eq.s32.totalorder %s29, 0
      %p350 = por %p348, %p349
      %p351 = scmp.ne.s32.totalorder %s340, %s343
      %p352 = scmp.eq.s32.totalorder %s34, 7
      %p353 = por %p351, %p352
      %p354 = scmp.ne.s32.totalorder %s343, %s344
      %p355 = scmp.eq.s32.totalorder %s34, 0
      %p356 = por %p354, %p355
      %p357 = scmp.ne.s32.totalorder %s343, %s344
      %p358 = scmp.eq.s32.totalorder %s35, 7
      %p359 = por %p357, %p358
      %p361 = scmp.ne.s32.totalorder %s344, %s360
      %p362 = scmp.eq.s32.totalorder %s35, 0
      %p363 = por %p361, %p362
      %p364 = scmp.le.s32.totalorder 1, %s29
      %p365 = scmp.lt.s32.totalorder %s29, 9
      %p366 = pnand %p364, %p365
      %p367 = pneg %p366
      // Predicated region
      $region9: #{tpu_custom_call.1} parent=5 // pred_check
        _
      $region10: #{tpu_custom_call.1} parent=5 // pred_check_branch
        %369 = sbr.rel (%p366) target = $region12
      $region11: #{tpu_custom_call.1} parent=5 // pred_region
        %s370 = ssub.s32 %s29, 1
        // Predicated region
        $region13: #{tpu_custom_call.1} parent=11 // pred_check
          %p371 = pneg %p118
        $region14: #{tpu_custom_call.1} parent=11 // pred_check_branch
          %373 = sbr.rel (%p371) target = $region16
        $region15: #{tpu_custom_call.1} parent=11 // pred_region
          _
        $region16: #{tpu_custom_call.1} parent=11 // pred_fallthru
          _
        // Predicated region
        $region17: #{tpu_custom_call.1} parent=11 // pred_check
          %p374 = pneg %p139
        $region18: #{tpu_custom_call.1} parent=11 // pred_check_branch
          %376 = sbr.rel (%p374) target = $region20
        $region19: #{tpu_custom_call.1} parent=11 // pred_region
          _
        $region20: #{tpu_custom_call.1} parent=11 // pred_fallthru
          _
        // Predicated region
        $region21: #{tpu_custom_call.1} parent=11 // pred_check
          %p377 = pneg %p160
        $region22: #{tpu_custom_call.1} parent=11 // pred_check_branch
          %379 = sbr.rel (%p377) target = $region24
        $region23: #{tpu_custom_call.1} parent=11 // pred_region
          _
        $region24: #{tpu_custom_call.1} parent=11 // pred_fallthru
          _
        // Predicated region
        $region25: #{tpu_custom_call.1} parent=11 // pred_check
          %p380 = pneg %p181
        $region26: #{tpu_custom_call.1} parent=11 // pred_check_branch
          %382 = sbr.rel (%p380) target = $region28
        $region27: #{tpu_custom_call.1} parent=11 // pred_region
          %s384 = ssub.s32 18432, 18432
          %385 = vsyncadd [#allocation6], %s384
          %s386 = sshll.u32 [#allocation7], 4
          %s387 = int_to_ptr.vmem [resolvable:$true] %s386
          %392 = dma.hbm_to_vmem [thread:$0]  %s5, 18432, %s387, [#allocation6], 128, 128, 8
        $region28: #{tpu_custom_call.1} parent=11 // pred_fallthru
          _
        // Predicated region
        $region29: #{tpu_custom_call.1} parent=11 // pred_check
          %p393 = pneg %p202
        $region30: #{tpu_custom_call.1} parent=11 // pred_check_branch
          %395 = sbr.rel (%p393) target = $region32
        $region31: #{tpu_custom_call.1} parent=11 // pred_region
          %s397 = ssub.s32 2048, 2048
          %398 = vsyncadd [#allocation9], %s397
          %s399 = sshll.u32 [#allocation8], 4
          %s400 = int_to_ptr.vmem [resolvable:$true] %s399
          %405 = dma.hbm_to_vmem [thread:$0]  %s6, 2048, %s400, [#allocation9], 128, 128, 8
        $region32: #{tpu_custom_call.1} parent=11 // pred_fallthru
          _
        // Predicated region
        $region33: #{tpu_custom_call.1} parent=11 // pred_check
          %p406 = pneg %p223
        $region34: #{tpu_custom_call.1} parent=11 // pred_check_branch
          %408 = sbr.rel (%p406) target = $region36
        $region35: #{tpu_custom_call.1} parent=11 // pred_region
          _
        $region36: #{tpu_custom_call.1} parent=11 // pred_fallthru
          _
        // Predicated region
        $region37: #{tpu_custom_call.1} parent=11 // pred_check
          %p409 = pneg %p244
        $region38: #{tpu_custom_call.1} parent=11 // pred_check_branch
          %411 = sbr.rel (%p409) target = $region40
        $region39: #{tpu_custom_call.1} parent=11 // pred_region
          _
        $region40: #{tpu_custom_call.1} parent=11 // pred_fallthru
          _
        // Predicated region
        $region41: #{tpu_custom_call.1} parent=11 // pred_check
          %p412 = pneg %p265
        $region42: #{tpu_custom_call.1} parent=11 // pred_check_branch
          %414 = sbr.rel (%p412) target = $region44
        $region43: #{tpu_custom_call.1} parent=11 // pred_region
          _
        $region44: #{tpu_custom_call.1} parent=11 // pred_fallthru
          _
        // Predicated region
        $region45: #{tpu_custom_call.1} parent=11 // pred_check
          %p415 = pneg %p286
        $region46: #{tpu_custom_call.1} parent=11 // pred_check_branch
          %417 = sbr.rel (%p415) target = $region48
        $region47: #{tpu_custom_call.1} parent=11 // pred_region
          _
        $region48: #{tpu_custom_call.1} parent=11 // pred_fallthru
          _
        // Predicated region
        $region49: #{tpu_custom_call.1} parent=11 // pred_check
          %p418 = pneg %p307
        $region50: #{tpu_custom_call.1} parent=11 // pred_check_branch
          %420 = sbr.rel (%p418) target = $region52
        $region51: #{tpu_custom_call.1} parent=11 // pred_region
          _
        $region52: #{tpu_custom_call.1} parent=11 // pred_fallthru
          _
        // Predicated region
        $region53: #{tpu_custom_call.1} parent=11 // pred_check
          %p421 = pneg %p328
        $region54: #{tpu_custom_call.1} parent=11 // pred_check_branch
          %423 = sbr.rel (%p421) target = $region56
        $region55: #{tpu_custom_call.1} parent=11 // pred_region
          _
        $region56: #{tpu_custom_call.1} parent=11 // pred_fallthru
          _
      $region12: #{tpu_custom_call.1} parent=5 // pred_fallthru
        _
      %p424 = scmp.lt.s32.totalorder %s29, 8
      // Predicated region
      $region57: #{tpu_custom_call.1} parent=5 // pred_check
        %p425 = pneg %p424
      $region58: #{tpu_custom_call.1} parent=5 // pred_check_branch
        %427 = sbr.rel (%p425) target = $region60
      $region59: #{tpu_custom_call.1} parent=5 // pred_region
        // Predicated region
        $region61: #{tpu_custom_call.1} parent=59 // pred_check
          %p428 = pneg %p63
        $region62: #{tpu_custom_call.1} parent=59 // pred_check_branch
          %430 = sbr.rel (%p428) target = $region64
        $region63: #{tpu_custom_call.1} parent=59 // pred_region
          %s431 = sand.u32 %s53, 1
          %s432 = scalar_lea.sflag [#allocation3], %s431
          %s433 = sand.u32 %s53, 1
          %s434 = smul.addr %s433, 64
          %s435 = scalar_lea.vmem [#allocation2], %s434
          %s436 = smul.u32 4, %s37
          %s438 = ssub.s32 1024, 1024
          %439 = vsyncadd %s432, %s438
          %s440 = smul.addr %s436, 2
          %s441 = smul.addr %s36, 32
          %s442 = sadd.s32 %s440, %s441
          %s443 = smul.addr %s442, 128
          %s444 = scalar_lea.hbm %s0, %s443
          %s445 = sshll.u32 %s435, 4
          %s446 = int_to_ptr.vmem [resolvable:$true] %s445
          %451 = dma.hbm_to_vmem [thread:$0]  %s444, 1024, %s446, %s432, 128, 128, 8
        $region64: #{tpu_custom_call.1} parent=59 // pred_fallthru
          _
        // Predicated region
        $region65: #{tpu_custom_call.1} parent=59 // pred_check
          %p452 = pneg %p91
        $region66: #{tpu_custom_call.1} parent=59 // pred_check_branch
          %454 = sbr.rel (%p452) target = $region68
        $region67: #{tpu_custom_call.1} parent=59 // pred_region
          %s455 = sand.u32 %s29, 1
          %s456 = scalar_lea.sflag [#allocation6], %s455
          %s457 = sand.u32 %s81, 1
          %s458 = smul.addr %s457, 32
          %s459 = scalar_lea.vmem [#allocation5], %s458
          %s461 = ssub.s32 512, 512
          %462 = vsyncadd %s456, %s461
          %s463 = smul.addr %s37, 4
          %s464 = smul.addr %s36, 16
          %s465 = sadd.s32 %s463, %s464
          %s466 = smul.addr %s465, 128
          %s467 = scalar_lea.hbm %s1, %s466
          %s468 = sshll.u32 %s459, 4
          %s469 = int_to_ptr.vmem [resolvable:$true] %s468
          %474 = dma.hbm_to_vmem [thread:$0]  %s467, 512, %s469, %s456, 128, 128, 8
        $region68: #{tpu_custom_call.1} parent=59 // pred_fallthru
          _
      $region60: #{tpu_custom_call.1} parent=5 // pred_fallthru
        _
      %p475 = scmp.le.s32.totalorder 1, %s29
      %p476 = scmp.lt.s32.totalorder %s29, 9
      %p477 = pnand %p475, %p476
      %p478 = pneg %p477
      // Predicated region
      $region69: #{tpu_custom_call.1} parent=5 // pred_check
        _
      $region70: #{tpu_custom_call.1} parent=5 // pred_check_branch
        %480 = sbr.rel (%p477) target = $region72
      $region71: #{tpu_custom_call.1} parent=5 // pred_region
        %s481 = ssub.s32 %s29, 1
        %s482 = sand.u32 %s56, 1
        %s483 = scalar_lea.sflag [#allocation3], %s482
        %s484 = sand.u32 %s56, 1
        %s485 = smul.addr %s484, 64
        %s486 = scalar_lea.vmem [#allocation2], %s485
        // Predicated region
        $region73: #{tpu_custom_call.1} parent=71 // pred_check
          %p487 = pneg %p69
        $region74: #{tpu_custom_call.1} parent=71 // pred_check_branch
          %489 = sbr.rel (%p487) target = $region76
        $region75: #{tpu_custom_call.1} parent=71 // pred_region
          %490 = dma.done %s483, 1024
        $region76: #{tpu_custom_call.1} parent=71 // pred_fallthru
          _
        %s491 = sand.u32 %s34, 1
        %s492 = scalar_lea.sflag [#allocation6], %s491
        %s493 = sand.u32 %s84, 1
        %s494 = smul.addr %s493, 32
        %s495 = scalar_lea.vmem [#allocation5], %s494
        // Predicated region
        $region77: #{tpu_custom_call.1} parent=71 // pred_check
          %p496 = pneg %p97
        $region78: #{tpu_custom_call.1} parent=71 // pred_check_branch
          %498 = sbr.rel (%p496) target = $region80
        $region79: #{tpu_custom_call.1} parent=71 // pred_region
          %499 = dma.done %s492, 512
        $region80: #{tpu_custom_call.1} parent=71 // pred_fallthru
          _
        // Predicated region
        $region81: #{tpu_custom_call.1} parent=71 // pred_check
          %p500 = pneg %p181
        $region82: #{tpu_custom_call.1} parent=71 // pred_check_branch
          %502 = sbr.rel (%p500) target = $region84
        $region83: #{tpu_custom_call.1} parent=71 // pred_region
          %503 = dma.done [#allocation6], 18432
        $region84: #{tpu_custom_call.1} parent=71 // pred_fallthru
          _
        // Predicated region
        $region85: #{tpu_custom_call.1} parent=71 // pred_check
          %p504 = pneg %p202
        $region86: #{tpu_custom_call.1} parent=71 // pred_check_branch
          %506 = sbr.rel (%p504) target = $region88
        $region87: #{tpu_custom_call.1} parent=71 // pred_region
          %507 = dma.done [#allocation9], 2048
        $region88: #{tpu_custom_call.1} parent=71 // pred_fallthru
          _
        %s508 = sand.u32 %s56, 1
        %s509 = scalar_lea.sflag [#allocation3], %s508
        %s510 = sand.u32 %s56, 1
        %s511 = smul.addr %s510, 64
        %s512 = scalar_lea.vmem [#allocation2], %s511
        %p513 = pneg %p69
        %p514 = pneg %p66
        %s515 = sand.u32 %s34, 1
        %s516 = scalar_lea.sflag [#allocation6], %s515
        %s517 = sand.u32 %s84, 1
        %s518 = smul.addr %s517, 32
        %s519 = scalar_lea.vmem [#allocation5], %s518
        %p520 = pneg %p97
        %p521 = pneg %p94
        %p522 = pneg %p118
        %p523 = pneg %p115
        %p524 = pneg %p139
        %p525 = pneg %p136
        %p526 = pneg %p160
        %p527 = pneg %p157
        %p528 = pneg %p181
        %p529 = pneg %p178
        %p530 = pneg %p202
        %p531 = pneg %p199
        %p532 = pneg %p223
        %p533 = pneg %p220
        %p534 = pneg %p244
        %p535 = pneg %p241
        %p536 = pneg %p265
        %p537 = pneg %p262
        %p538 = pneg %p286
        %p539 = pneg %p283
        %p540 = pneg %p307
        %p541 = pneg %p304
        %p542 = pneg %p328
        %p543 = pneg %p325
        %p544 = pneg %p356
        %p545 = pneg %p353
        %s546 = sand.u32 %s343, 1
        %s547 = scalar_lea.sflag [#allocation4], %s546
        %s548 = sand.u32 %s343, 1
        %s549 = smul.addr %s548, 64
        %s550 = scalar_lea.vmem [#allocation10], %s549
        %s551 = smul.u32 4, %s39
        %s552 = smul.u32 4, %s39
        %v553 = vld [vmem:[%s486] sm:$0xff]
        %v554 = vld [vmem:[%s486 + $0x8] sm:$0xff]
        %v555 = vld [vmem:[%s486 + $0x10] sm:$0xff]
        %v556 = vld [vmem:[%s486 + $0x18] sm:$0xff]
        %v557 = vld [vmem:[%s486 + $0x20] sm:$0xff]
        %v558 = vld [vmem:[%s486 + $0x28] sm:$0xff]
        %v559 = vld [vmem:[%s486 + $0x30] sm:$0xff]
        %v560 = vld [vmem:[%s486 + $0x38] sm:$0xff]
        %v561 = vld [vmem:[%s495] sm:$0xff]
        %v562 = vld [vmem:[%s495 + $0x8] sm:$0xff]
        %v563 = vld [vmem:[%s495 + $0x10] sm:$0xff]
        %v564 = vld [vmem:[%s495 + $0x18] sm:$0xff]
        %v565 = vld [vmem:[%s4] sm:$0xff]
        %v566 = vld [vmem:[%s4 + $0x8] sm:$0xff]
        %v567 = vld [vmem:[%s4 + $0x10] sm:$0xff]
        %v568 = vld [vmem:[%s4 + $0x18] sm:$0xff]
        %v569 = vld [vmem:[%s4 + $0x20] sm:$0xff]
        %v570 = vld [vmem:[%s4 + $0x28] sm:$0xff]
        %v571 = vld [vmem:[%s4 + $0x30] sm:$0xff]
        %v572 = vld [vmem:[%s4 + $0x38] sm:$0xff]
        %v573 = vld [vmem:[%s4 + $0x40] sm:$0xff]
        %v574 = vld [vmem:[%s4 + $0x48] sm:$0xff]
        %v575 = vld [vmem:[%s4 + $0x50] sm:$0xff]
        %v576 = vld [vmem:[%s4 + $0x58] sm:$0xff]
        %v577 = vld [vmem:[%s4 + $0x60] sm:$0xff]
        %v578 = vld [vmem:[%s4 + $0x68] sm:$0xff]
        %v579 = vld [vmem:[%s4 + $0x70] sm:$0xff]
        %v580 = vld [vmem:[%s4 + $0x78] sm:$0xff]
        %581 = vmatprep.subr.mxu0 0.0
        %582 = vmatpush1.msra.mxu0 %v580
        %583 = vmatprep.subr.mxu0 0.0
        %584 = vmatpush1.msra.mxu0 %v579
        %585 = vmatprep.subr.mxu0 0.0
        %586 = vmatpush1.msra.mxu0 %v578
        %587 = vmatprep.subr.mxu0 0.0
        %588 = vmatpush1.msra.mxu0 %v577
        %589 = vmatprep.subr.mxu0 0.0
        %590 = vmatpush1.msra.mxu0 %v576
        %591 = vmatprep.subr.mxu0 0.0
        %592 = vmatpush1.msra.mxu0 %v575
        %593 = vmatprep.subr.mxu0 0.0
        %594 = vmatpush1.msra.mxu0 %v574
        %595 = vmatprep.subr.mxu0 0.0
        %596 = vmatpush1.msra.mxu0 %v573
        %597 = vmatprep.subr.mxu0 0.0
        %598 = vmatpush1.msra.mxu0 %v572
        %599 = vmatprep.subr.mxu0 0.0
        %600 = vmatpush1.msra.mxu0 %v571
        %601 = vmatprep.subr.mxu0 0.0
        %602 = vmatpush1.msra.mxu0 %v570
        %603 = vmatprep.subr.mxu0 0.0
        %604 = vmatpush1.msra.mxu0 %v569
        %605 = vmatprep.subr.mxu0 0.0
        %606 = vmatpush1.msra.mxu0 %v568
        %607 = vmatprep.subr.mxu0 0.0
        %608 = vmatpush1.msra.mxu0 %v567
        %609 = vmatprep.subr.mxu0 0.0
        %610 = vmatpush1.msra.mxu0 %v566
        %611 = vmatprep.subr.mxu0 0.0
        %612 = vmatpush1.msra.mxu0 %v565
        %613 = vmatprep.subr.mxu0 0.0
        %614 = vmatpush2.msra.mxu0 0.0
        %615 = vmatprep.subr.mxu0 0.0
        %616 = vmatpush2.msra.mxu0 0.0
        %617 = vmatprep.subr.mxu0 0.0
        %618 = vmatpush2.msra.mxu0 0.0
        %619 = vmatprep.subr.mxu0 0.0
        %620 = vmatpush2.msra.mxu0 0.0
        %621 = vmatprep.subr.mxu0 0.0
        %622 = vmatpush2.msra.mxu0 0.0
        %623 = vmatprep.subr.mxu0 0.0
        %624 = vmatpush2.msra.mxu0 0.0
        %625 = vmatprep.subr.mxu0 0.0
        %626 = vmatpush2.msra.mxu0 0.0
        %627 = vmatprep.subr.mxu0 0.0
        %628 = vmatpush2.msra.mxu0 0.0
        %629 = vmatprep.subr.mxu0 0.0
        %630 = vmatpush2.msra.mxu0 0.0
        %631 = vmatprep.subr.mxu0 0.0
        %632 = vmatpush2.msra.mxu0 0.0
        %633 = vmatprep.subr.mxu0 0.0
        %634 = vmatpush2.msra.mxu0 0.0
        %635 = vmatprep.subr.mxu0 0.0
        %636 = vmatpush2.msra.mxu0 0.0
        %637 = vmatprep.subr.mxu0 0.0
        %638 = vmatpush2.msra.mxu0 0.0
        %639 = vmatprep.subr.mxu0 0.0
        %640 = vmatpush2.msra.mxu0 0.0
        %641 = vmatprep.subr.mxu0 0.0
        %642 = vmatpush2.msra.mxu0 0.0
        %643 = vmatprep.subr.mxu0 0.0
        %644 = vmatpush2.msra.mxu0 0.0
        %645 = vmatprep.mubr.f32.mxu0 0.0
        %646 = vmatmul.mubr.f32.gmra.mxu0 %v553
        %v647 = vpop.f32.mrf.mxu0
        %v648 = vadd.f32 0.0, %v647
        %v649 = vpop.f32.mrf.mxu0
        %650 = vmatprep.mubr.f32.mxu0 0.0
        %651 = vmatmul.mubr.f32.gmra.mxu0 %v554
        %v652 = vpop.f32.mrf.mxu0
        %v653 = vadd.f32 0.0, %v652
        %v654 = vpop.f32.mrf.mxu0
        %655 = vmatprep.mubr.f32.mxu0 0.0
        %656 = vmatmul.mubr.f32.gmra.mxu0 %v555
        %v657 = vpop.f32.mrf.mxu0
        %v658 = vadd.f32 0.0, %v657
        %v659 = vpop.f32.mrf.mxu0
        %660 = vmatprep.mubr.f32.mxu0 0.0
        %661 = vmatmul.mubr.f32.gmra.mxu0 %v556
        %v662 = vpop.f32.mrf.mxu0
        %v663 = vadd.f32 0.0, %v662
        %v664 = vpop.f32.mrf.mxu0
        %665 = vmatprep.mubr.f32.mxu0 0.0
        %666 = vmatmul.mubr.f32.gmra.mxu0 %v557
        %v667 = vpop.f32.mrf.mxu0
        %v668 = vadd.f32 0.0, %v667
        %v669 = vpop.f32.mrf.mxu0
        %670 = vmatprep.mubr.f32.mxu0 0.0
        %671 = vmatmul.mubr.f32.gmra.mxu0 %v558
        %v672 = vpop.f32.mrf.mxu0
        %v673 = vadd.f32 0.0, %v672
        %v674 = vpop.f32.mrf.mxu0
        %675 = vmatprep.mubr.f32.mxu0 0.0
        %676 = vmatmul.mubr.f32.gmra.mxu0 %v559
        %v677 = vpop.f32.mrf.mxu0
        %v678 = vadd.f32 0.0, %v677
        %v679 = vpop.f32.mrf.mxu0
        %680 = vmatprep.mubr.f32.mxu0 0.0
        %681 = vmatmul.mubr.f32.gmra.mxu0 %v560
        %v682 = vpop.f32.mrf.mxu0
        %v683 = vadd.f32 0.0, %v682
        %v684 = vpop.f32.mrf.mxu0
        %685 = vdwg.mxu0
        %v686 = vld [vmem:[%s7] sm:$0x1]
        %v688 = vlaneseq
        %v689 = vshrl.u32 %v688, 7
        %v690 = vsub.s32 0, %v689
        %v691 = vrot.slane %v686, %v690
        %v693 = vmul.f32 %v648, %v691
        %v694 = vmul.f32 %v653, %v691
        %v695 = vmul.f32 %v658, %v691
        %v696 = vmul.f32 %v663, %v691
        %v697 = vmul.f32 %v668, %v691
        %v698 = vmul.f32 %v673, %v691
        %v699 = vmul.f32 %v678, %v691
        %v700 = vmul.f32 %v683, %v691
        %v701 = vld [vmem:[%s8] sm:$0x1]
        %v703 = vlaneseq
        %v704 = vshrl.u32 %v703, 7
        %v705 = vsub.s32 0, %v704
        %v706 = vrot.slane %v701, %v705
        %v708 = vadd.f32 %v693, %v706
        %v709 = vadd.f32 %v694, %v706
        %v710 = vadd.f32 %v695, %v706
        %v711 = vadd.f32 %v696, %v706
        %v712 = vadd.f32 %v697, %v706
        %v713 = vadd.f32 %v698, %v706
        %v714 = vadd.f32 %v699, %v706
        %v715 = vadd.f32 %v700, %v706
        %v716 = vmax.f32 %v708, 0.0
        %v717 = vmax.f32 %v709, 0.0
        %v718 = vmax.f32 %v710, 0.0
        %v719 = vmax.f32 %v711, 0.0
        %v720 = vmax.f32 %v712, 0.0
        %v721 = vmax.f32 %v713, 0.0
        %v722 = vmax.f32 %v714, 0.0
        %v723 = vmax.f32 %v715, 0.0
        %724 = vmatprep.subr.mxu0 0.0
        %725 = vmatpush1.msra.mxu0 %v580
        %726 = vmatprep.subr.mxu0 0.0
        %727 = vmatpush1.msra.mxu0 %v579
        %728 = vmatprep.subr.mxu0 0.0
        %729 = vmatpush1.msra.mxu0 %v578
        %730 = vmatprep.subr.mxu0 0.0
        %731 = vmatpush1.msra.mxu0 %v577
        %732 = vmatprep.subr.mxu0 0.0
        %733 = vmatpush1.msra.mxu0 %v576
        %734 = vmatprep.subr.mxu0 0.0
        %735 = vmatpush1.msra.mxu0 %v575
        %736 = vmatprep.subr.mxu0 0.0
        %737 = vmatpush1.msra.mxu0 %v574
        %738 = vmatprep.subr.mxu0 0.0
        %739 = vmatpush1.msra.mxu0 %v573
        %740 = vmatprep.subr.mxu0 0.0
        %741 = vmatpush1.msra.mxu0 %v572
        %742 = vmatprep.subr.mxu0 0.0
        %743 = vmatpush1.msra.mxu0 %v571
        %744 = vmatprep.subr.mxu0 0.0
        %745 = vmatpush1.msra.mxu0 %v570
        %746 = vmatprep.subr.mxu0 0.0
        %747 = vmatpush1.msra.mxu0 %v569
        %748 = vmatprep.subr.mxu0 0.0
        %749 = vmatpush1.msra.mxu0 %v568
        %750 = vmatprep.subr.mxu0 0.0
        %751 = vmatpush1.msra.mxu0 %v567
        %752 = vmatprep.subr.mxu0 0.0
        %753 = vmatpush1.msra.mxu0 %v566
        %754 = vmatprep.subr.mxu0 0.0
        %755 = vmatpush1.msra.mxu0 %v565
        %756 = vmatprep.subr.mxu0 0.0
        %757 = vmatpush2.msra.mxu0 0.0
        %758 = vmatprep.subr.mxu0 0.0
        %759 = vmatpush2.msra.mxu0 0.0
        %760 = vmatprep.subr.mxu0 0.0
        %761 = vmatpush2.msra.mxu0 0.0
        %762 = vmatprep.subr.mxu0 0.0
        %763 = vmatpush2.msra.mxu0 0.0
        %764 = vmatprep.subr.mxu0 0.0
        %765 = vmatpush2.msra.mxu0 0.0
        %766 = vmatprep.subr.mxu0 0.0
        %767 = vmatpush2.msra.mxu0 0.0
        %768 = vmatprep.subr.mxu0 0.0
        %769 = vmatpush2.msra.mxu0 0.0
        %770 = vmatprep.subr.mxu0 0.0
        %771 = vmatpush2.msra.mxu0 0.0
        %772 = vmatprep.subr.mxu0 0.0
        %773 = vmatpush2.msra.mxu0 0.0
        %774 = vmatprep.subr.mxu0 0.0
        %775 = vmatpush2.msra.mxu0 0.0
        %776 = vmatprep.subr.mxu0 0.0
        %777 = vmatpush2.msra.mxu0 0.0
        %778 = vmatprep.subr.mxu0 0.0
        %779 = vmatpush2.msra.mxu0 0.0
        %780 = vmatprep.subr.mxu0 0.0
        %781 = vmatpush2.msra.mxu0 0.0
        %782 = vmatprep.subr.mxu0 0.0
        %783 = vmatpush2.msra.mxu0 0.0
        %784 = vmatprep.subr.mxu0 0.0
        %785 = vmatpush2.msra.mxu0 0.0
        %786 = vmatprep.subr.mxu0 0.0
        %787 = vmatpush2.msra.mxu0 0.0
        %788 = vmatprep.mubr.f32.mxu0 0.0
        %789 = vmatmul.mubr.f32.gmra.mxu0 %v561
        %v790 = vpop.f32.mrf.mxu0
        %v791 = vadd.f32 0.0, %v790
        %v792 = vpop.f32.mrf.mxu0
        %793 = vmatprep.mubr.f32.mxu0 0.0
        %794 = vmatmul.mubr.f32.gmra.mxu0 %v562
        %v795 = vpop.f32.mrf.mxu0
        %v796 = vadd.f32 0.0, %v795
        %v797 = vpop.f32.mrf.mxu0
        %798 = vmatprep.mubr.f32.mxu0 0.0
        %799 = vmatmul.mubr.f32.gmra.mxu0 %v563
        %v800 = vpop.f32.mrf.mxu0
        %v801 = vadd.f32 0.0, %v800
        %v802 = vpop.f32.mrf.mxu0
        %803 = vmatprep.mubr.f32.mxu0 0.0
        %804 = vmatmul.mubr.f32.gmra.mxu0 %v564
        %v805 = vpop.f32.mrf.mxu0
        %v806 = vadd.f32 0.0, %v805
        %v807 = vpop.f32.mrf.mxu0
        %808 = vdwg.mxu0
        %v809 = vmul.f32 %v791, %v691
        %v810 = vmul.f32 %v796, %v691
        %v811 = vmul.f32 %v801, %v691
        %v812 = vmul.f32 %v806, %v691
        %v813 = vadd.f32 %v809, %v706
        %v814 = vadd.f32 %v810, %v706
        %v815 = vadd.f32 %v811, %v706
        %v816 = vadd.f32 %v812, %v706
        %v817 = vmax.f32 %v813, 0.0
        %v818 = vmax.f32 %v814, 0.0
        %v819 = vmax.f32 %v815, 0.0
        %v820 = vmax.f32 %v816, 0.0
        %p821 = scmp.gt.s32.totalorder %s39, 0
        %s822 = scalar_select %p821, 1, 0
        %s823 = scvt.s32.f32 %s822
        %v824 = vstv %s823
        %v825 = vmul.f32 %v817, %v824
        %v826 = vmul.f32 %v818, %v824
        %p827 = scmp.lt.s32.totalorder %s39, 3
        %s828 = scalar_select %p827, 1, 0
        %s829 = scvt.s32.f32 %s828
        %v830 = vstv %s829
        %v831 = vmul.f32 %v819, %v830
        %v832 = vmul.f32 %v820, %v830
        %vm845 = vcmask 1040384
        %v846 = vrot.slane %v825, 7
        %v847 = vrot.slane %v826, 7
        %v848 = vsel %vm845, %v846, %v847
        %v849 = vrot.slane %v716, 7
        %v850 = vsel %vm845, %v847, %v849
        %v851 = vrot.slane %v717, 7
        %v852 = vsel %vm845, %v849, %v851
        %v853 = vrot.slane %v718, 7
        %v854 = vsel %vm845, %v851, %v853
        %v855 = vrot.slane %v719, 7
        %v856 = vsel %vm845, %v853, %v855
        %v857 = vrot.slane %v720, 7
        %v858 = vsel %vm845, %v855, %v857
        %v859 = vrot.slane %v721, 7
        %v860 = vsel %vm845, %v857, %v859
        %v861 = vrot.slane %v722, 7
        %v862 = vsel %vm845, %v859, %v861
        %v863 = vrot.slane %v723, 7
        %v864 = vsel %vm845, %v861, %v863
        %v865 = vrot.slane %v831, 7
        %v866 = vsel %vm845, %v863, %v865
        %v867 = vrot.slane %v832, 7
        %v868 = vsel %vm845, %v865, %v867
        %v881 = vsel %vm845, 0.0, %v846
        %v882 = vld [vmem:[%s2] sm:$0xff]
        %v883 = vld [vmem:[%s2 + $0x8] sm:$0xff]
        %v884 = vld [vmem:[%s2 + $0x10] sm:$0xff]
        %v885 = vld [vmem:[%s2 + $0x18] sm:$0xff]
        %v886 = vld [vmem:[%s2 + $0x20] sm:$0xff]
        %v887 = vld [vmem:[%s2 + $0x28] sm:$0xff]
        %v888 = vld [vmem:[%s2 + $0x30] sm:$0xff]
        %v889 = vld [vmem:[%s2 + $0x38] sm:$0xff]
        %v890 = vld [vmem:[%s2 + $0x40] sm:$0xff]
        %v891 = vld [vmem:[%s2 + $0x48] sm:$0xff]
        %v892 = vld [vmem:[%s2 + $0x50] sm:$0xff]
        %v893 = vld [vmem:[%s2 + $0x58] sm:$0xff]
        %895 = vset.pattern.permute.xlu0 0
        %896 = vperm.xlu0 %895, %v882
        %v897 = vpop.permute.xlu0 %896
        %900 = vset.pattern.permute.xlu0 0
        %901 = vperm.xlu0 %900, %v883
        %v902 = vpop.permute.xlu0 %901
        %905 = vset.pattern.permute.xlu0 0
        %906 = vperm.xlu0 %905, %v884
        %v907 = vpop.permute.xlu0 %906
        %910 = vset.pattern.permute.xlu0 0
        %911 = vperm.xlu0 %910, %v885
        %v912 = vpop.permute.xlu0 %911
        %915 = vset.pattern.permute.xlu0 0
        %916 = vperm.xlu0 %915, %v886
        %v917 = vpop.permute.xlu0 %916
        %920 = vset.pattern.permute.xlu0 0
        %921 = vperm.xlu0 %920, %v887
        %v922 = vpop.permute.xlu0 %921
        %925 = vset.pattern.permute.xlu0 0
        %926 = vperm.xlu0 %925, %v888
        %v927 = vpop.permute.xlu0 %926
        %930 = vset.pattern.permute.xlu0 0
        %931 = vperm.xlu0 %930, %v889
        %v932 = vpop.permute.xlu0 %931
        %935 = vset.pattern.permute.xlu0 0
        %936 = vperm.xlu0 %935, %v890
        %v937 = vpop.permute.xlu0 %936
        %940 = vset.pattern.permute.xlu0 0
        %941 = vperm.xlu0 %940, %v891
        %v942 = vpop.permute.xlu0 %941
        %945 = vset.pattern.permute.xlu0 0
        %946 = vperm.xlu0 %945, %v892
        %v947 = vpop.permute.xlu0 %946
        %950 = vset.pattern.permute.xlu0 0
        %951 = vperm.xlu0 %950, %v893
        %v952 = vpop.permute.xlu0 %951
        %v954 = vmul.f32 %v881, %v897
        %v955 = vmul.f32 %v848, %v902
        %v956 = vmul.f32 %v850, %v907
        %v957 = vmul.f32 %v852, %v912
        %v958 = vmul.f32 %v854, %v917
        %v959 = vmul.f32 %v856, %v922
        %v960 = vmul.f32 %v858, %v927
        %v961 = vmul.f32 %v860, %v932
        %v962 = vmul.f32 %v862, %v937
        %v963 = vmul.f32 %v864, %v942
        %v964 = vmul.f32 %v866, %v947
        %v965 = vmul.f32 %v868, %v952
        %vm966 = vcmask 1046528
        %v967 = vrot.slane %v825, 1
        %v968 = vrot.slane %v826, 1
        %v969 = vsel %vm966, %v967, %v968
        %v970 = vrot.slane %v716, 1
        %v971 = vsel %vm966, %v968, %v970
        %v972 = vrot.slane %v717, 1
        %v973 = vsel %vm966, %v970, %v972
        %v974 = vrot.slane %v718, 1
        %v975 = vsel %vm966, %v972, %v974
        %v976 = vrot.slane %v719, 1
        %v977 = vsel %vm966, %v974, %v976
        %v978 = vrot.slane %v720, 1
        %v979 = vsel %vm966, %v976, %v978
        %v980 = vrot.slane %v721, 1
        %v981 = vsel %vm966, %v978, %v980
        %v982 = vrot.slane %v722, 1
        %v983 = vsel %vm966, %v980, %v982
        %v984 = vrot.slane %v723, 1
        %v985 = vsel %vm966, %v982, %v984
        %v986 = vrot.slane %v831, 1
        %v987 = vsel %vm966, %v984, %v986
        %v988 = vrot.slane %v832, 1
        %v989 = vsel %vm966, %v986, %v988
        %v1002 = vsel %vm966, %v988, 0.0
        %v1003 = vld [vmem:[%s3] sm:$0xff]
        %v1004 = vld [vmem:[%s3 + $0x8] sm:$0xff]
        %v1005 = vld [vmem:[%s3 + $0x10] sm:$0xff]
        %v1006 = vld [vmem:[%s3 + $0x18] sm:$0xff]
        %v1007 = vld [vmem:[%s3 + $0x20] sm:$0xff]
        %v1008 = vld [vmem:[%s3 + $0x28] sm:$0xff]
        %v1009 = vld [vmem:[%s3 + $0x30] sm:$0xff]
        %v1010 = vld [vmem:[%s3 + $0x38] sm:$0xff]
        %v1011 = vld [vmem:[%s3 + $0x40] sm:$0xff]
        %v1012 = vld [vmem:[%s3 + $0x48] sm:$0xff]
        %v1013 = vld [vmem:[%s3 + $0x50] sm:$0xff]
        %v1014 = vld [vmem:[%s3 + $0x58] sm:$0xff]
        %1016 = vset.pattern.permute.xlu0 0
        %1017 = vperm.xlu0 %1016, %v1003
        %v1018 = vpop.permute.xlu0 %1017
        %1021 = vset.pattern.permute.xlu0 0
        %1022 = vperm.xlu0 %1021, %v1004
        %v1023 = vpop.permute.xlu0 %1022
        %1026 = vset.pattern.permute.xlu0 0
        %1027 = vperm.xlu0 %1026, %v1005
        %v1028 = vpop.permute.xlu0 %1027
        %1031 = vset.pattern.permute.xlu0 0
        %1032 = vperm.xlu0 %1031, %v1006
        %v1033 = vpop.permute.xlu0 %1032
        %1036 = vset.pattern.permute.xlu0 0
        %1037 = vperm.xlu0 %1036, %v1007
        %v1038 = vpop.permute.xlu0 %1037
        %1041 = vset.pattern.permute.xlu0 0
        %1042 = vperm.xlu0 %1041, %v1008
        %v1043 = vpop.permute.xlu0 %1042
        %1046 = vset.pattern.permute.xlu0 0
        %1047 = vperm.xlu0 %1046, %v1009
        %v1048 = vpop.permute.xlu0 %1047
        %1051 = vset.pattern.permute.xlu0 0
        %1052 = vperm.xlu0 %1051, %v1010
        %v1053 = vpop.permute.xlu0 %1052
        %1056 = vset.pattern.permute.xlu0 0
        %1057 = vperm.xlu0 %1056, %v1011
        %v1058 = vpop.permute.xlu0 %1057
        %1061 = vset.pattern.permute.xlu0 0
        %1062 = vperm.xlu0 %1061, %v1012
        %v1063 = vpop.permute.xlu0 %1062
        %1066 = vset.pattern.permute.xlu0 0
        %1067 = vperm.xlu0 %1066, %v1013
        %v1068 = vpop.permute.xlu0 %1067
        %1071 = vset.pattern.permute.xlu0 0
        %1072 = vperm.xlu0 %1071, %v1014
        %v1073 = vpop.permute.xlu0 %1072
        %v1075 = vmul.f32 %v969, %v1018
        %v1076 = vmul.f32 %v971, %v1023
        %v1077 = vmul.f32 %v973, %v1028
        %v1078 = vmul.f32 %v975, %v1033
        %v1079 = vmul.f32 %v977, %v1038
        %v1080 = vmul.f32 %v979, %v1043
        %v1081 = vmul.f32 %v981, %v1048
        %v1082 = vmul.f32 %v983, %v1053
        %v1083 = vmul.f32 %v985, %v1058
        %v1084 = vmul.f32 %v987, %v1063
        %v1085 = vmul.f32 %v989, %v1068
        %v1086 = vmul.f32 %v1002, %v1073
        %v1087 = vld [vmem:[#allocation7] sm:$0xff]
        %v1088 = vld [vmem:[#allocation7 + $0x8] sm:$0xff]
        %v1089 = vld [vmem:[#allocation7 + $0x10] sm:$0xff]
        %v1090 = vld [vmem:[#allocation7 + $0x18] sm:$0xff]
        %v1091 = vld [vmem:[#allocation7 + $0x20] sm:$0xff]
        %v1092 = vld [vmem:[#allocation7 + $0x28] sm:$0xff]
        %v1093 = vld [vmem:[#allocation7 + $0x30] sm:$0xff]
        %v1094 = vld [vmem:[#allocation7 + $0x38] sm:$0xff]
        %v1095 = vld [vmem:[#allocation7 + $0x40] sm:$0xff]
        %v1096 = vld [vmem:[#allocation7 + $0x48] sm:$0xff]
        %v1097 = vld [vmem:[#allocation7 + $0x50] sm:$0xff]
        %v1098 = vld [vmem:[#allocation7 + $0x58] sm:$0xff]
        %v1099 = vld [vmem:[#allocation7 + $0x60] sm:$0xff]
        %v1100 = vld [vmem:[#allocation7 + $0x68] sm:$0xff]
        %v1101 = vld [vmem:[#allocation7 + $0x70] sm:$0xff]
        %v1102 = vld [vmem:[#allocation7 + $0x78] sm:$0xff]
        %s1103 = scalar_lea.vmem [#allocation7], 128
        %v1104 = vld [vmem:[%s1103] sm:$0xff]
        %v1105 = vld [vmem:[%s1103 + $0x8] sm:$0xff]
        %v1106 = vld [vmem:[%s1103 + $0x10] sm:$0xff]
        %v1107 = vld [vmem:[%s1103 + $0x18] sm:$0xff]
        %v1108 = vld [vmem:[%s1103 + $0x20] sm:$0xff]
        %v1109 = vld [vmem:[%s1103 + $0x28] sm:$0xff]
        %v1110 = vld [vmem:[%s1103 + $0x30] sm:$0xff]
        %v1111 = vld [vmem:[%s1103 + $0x38] sm:$0xff]
        %v1112 = vld [vmem:[%s1103 + $0x40] sm:$0xff]
        %v1113 = vld [vmem:[%s1103 + $0x48] sm:$0xff]
        %v1114 = vld [vmem:[%s1103 + $0x50] sm:$0xff]
        %v1115 = vld [vmem:[%s1103 + $0x58] sm:$0xff]
        %v1116 = vld [vmem:[%s1103 + $0x60] sm:$0xff]
        %v1117 = vld [vmem:[%s1103 + $0x68] sm:$0xff]
        %v1118 = vld [vmem:[%s1103 + $0x70] sm:$0xff]
        %v1119 = vld [vmem:[%s1103 + $0x78] sm:$0xff]
        %1120 = vmatprep.subr.mxu0 0.0
        %1121 = vmatpush1.msra.mxu0 %v1119
        %1122 = vmatprep.subr.mxu0 0.0
        %1123 = vmatpush1.msra.mxu0 %v1118
        %1124 = vmatprep.subr.mxu0 0.0
        %1125 = vmatpush1.msra.mxu0 %v1117
        %1126 = vmatprep.subr.mxu0 0.0
        %1127 = vmatpush1.msra.mxu0 %v1116
        %1128 = vmatprep.subr.mxu0 0.0
        %1129 = vmatpush1.msra.mxu0 %v1115
        %1130 = vmatprep.subr.mxu0 0.0
        %1131 = vmatpush1.msra.mxu0 %v1114
        %1132 = vmatprep.subr.mxu0 0.0
        %1133 = vmatpush1.msra.mxu0 %v1113
        %1134 = vmatprep.subr.mxu0 0.0
        %1135 = vmatpush1.msra.mxu0 %v1112
        %1136 = vmatprep.subr.mxu0 0.0
        %1137 = vmatpush1.msra.mxu0 %v1111
        %1138 = vmatprep.subr.mxu0 0.0
        %1139 = vmatpush1.msra.mxu0 %v1110
        %1140 = vmatprep.subr.mxu0 0.0
        %1141 = vmatpush1.msra.mxu0 %v1109
        %1142 = vmatprep.subr.mxu0 0.0
        %1143 = vmatpush1.msra.mxu0 %v1108
        %1144 = vmatprep.subr.mxu0 0.0
        %1145 = vmatpush1.msra.mxu0 %v1107
        %1146 = vmatprep.subr.mxu0 0.0
        %1147 = vmatpush1.msra.mxu0 %v1106
        %1148 = vmatprep.subr.mxu0 0.0
        %1149 = vmatpush1.msra.mxu0 %v1105
        %1150 = vmatprep.subr.mxu0 0.0
        %1151 = vmatpush1.msra.mxu0 %v1104
        %1152 = vmatprep.subr.mxu0 0.0
        %1153 = vmatpush2.msra.mxu0 0.0
        %1154 = vmatprep.subr.mxu0 0.0
        %1155 = vmatpush2.msra.mxu0 0.0
        %1156 = vmatprep.subr.mxu0 0.0
        %1157 = vmatpush2.msra.mxu0 0.0
        %1158 = vmatprep.subr.mxu0 0.0
        %1159 = vmatpush2.msra.mxu0 0.0
        %1160 = vmatprep.subr.mxu0 0.0
        %1161 = vmatpush2.msra.mxu0 0.0
        %1162 = vmatprep.subr.mxu0 0.0
        %1163 = vmatpush2.msra.mxu0 0.0
        %1164 = vmatprep.subr.mxu0 0.0
        %1165 = vmatpush2.msra.mxu0 0.0
        %1166 = vmatprep.subr.mxu0 0.0
        %1167 = vmatpush2.msra.mxu0 0.0
        %1168 = vmatprep.subr.mxu0 0.0
        %1169 = vmatpush2.msra.mxu0 0.0
        %1170 = vmatprep.subr.mxu0 0.0
        %1171 = vmatpush2.msra.mxu0 0.0
        %1172 = vmatprep.subr.mxu0 0.0
        %1173 = vmatpush2.msra.mxu0 0.0
        %1174 = vmatprep.subr.mxu0 0.0
        %1175 = vmatpush2.msra.mxu0 0.0
        %1176 = vmatprep.subr.mxu0 0.0
        %1177 = vmatpush2.msra.mxu0 0.0
        %1178 = vmatprep.subr.mxu0 0.0
        %1179 = vmatpush2.msra.mxu0 0.0
        %1180 = vmatprep.subr.mxu0 0.0
        %1181 = vmatpush2.msra.mxu0 0.0
        %1182 = vmatprep.subr.mxu0 0.0
        %1183 = vmatpush2.msra.mxu0 0.0
        %1184 = vmatprep.mubr.f32.mxu0 0.0
        %1185 = vmatmul.mubr.f32.gmra.mxu0 %v825
        %v1186 = vpop.f32.mrf.mxu0
        %v1187 = vadd.f32 0.0, %v1186
        %v1188 = vpop.f32.mrf.mxu0
        %1189 = vmatprep.mubr.f32.mxu0 0.0
        %1190 = vmatmul.mubr.f32.gmra.mxu0 %v826
        %v1191 = vpop.f32.mrf.mxu0
        %v1192 = vadd.f32 0.0, %v1191
        %v1193 = vpop.f32.mrf.mxu0
        %1194 = vmatprep.mubr.f32.mxu0 0.0
        %1195 = vmatmul.mubr.f32.gmra.mxu0 %v716
        %v1196 = vpop.f32.mrf.mxu0
        %v1197 = vadd.f32 0.0, %v1196
        %v1198 = vpop.f32.mrf.mxu0
        %1199 = vmatprep.mubr.f32.mxu0 0.0
        %1200 = vmatmul.mubr.f32.gmra.mxu0 %v717
        %v1201 = vpop.f32.mrf.mxu0
        %v1202 = vadd.f32 0.0, %v1201
        %v1203 = vpop.f32.mrf.mxu0
        %1204 = vmatprep.mubr.f32.mxu0 0.0
        %1205 = vmatmul.mubr.f32.gmra.mxu0 %v718
        %v1206 = vpop.f32.mrf.mxu0
        %v1207 = vadd.f32 0.0, %v1206
        %v1208 = vpop.f32.mrf.mxu0
        %1209 = vmatprep.mubr.f32.mxu0 0.0
        %1210 = vmatmul.mubr.f32.gmra.mxu0 %v719
        %v1211 = vpop.f32.mrf.mxu0
        %v1212 = vadd.f32 0.0, %v1211
        %v1213 = vpop.f32.mrf.mxu0
        %1214 = vmatprep.mubr.f32.mxu0 0.0
        %1215 = vmatmul.mubr.f32.gmra.mxu0 %v720
        %v1216 = vpop.f32.mrf.mxu0
        %v1217 = vadd.f32 0.0, %v1216
        %v1218 = vpop.f32.mrf.mxu0
        %1219 = vmatprep.mubr.f32.mxu0 0.0
        %1220 = vmatmul.mubr.f32.gmra.mxu0 %v721
        %v1221 = vpop.f32.mrf.mxu0
        %v1222 = vadd.f32 0.0, %v1221
        %v1223 = vpop.f32.mrf.mxu0
        %1224 = vdwg.mxu0
        %1225 = vmatprep.subr.mxu0 0.0
        %1226 = vmatpush1.msra.mxu0 %v1102
        %1227 = vmatprep.subr.mxu0 0.0
        %1228 = vmatpush1.msra.mxu0 %v1101
        %1229 = vmatprep.subr.mxu0 0.0
        %1230 = vmatpush1.msra.mxu0 %v1100
        %1231 = vmatprep.subr.mxu0 0.0
        %1232 = vmatpush1.msra.mxu0 %v1099
        %1233 = vmatprep.subr.mxu0 0.0
        %1234 = vmatpush1.msra.mxu0 %v1098
        %1235 = vmatprep.subr.mxu0 0.0
        %1236 = vmatpush1.msra.mxu0 %v1097
        %1237 = vmatprep.subr.mxu0 0.0
        %1238 = vmatpush1.msra.mxu0 %v1096
        %1239 = vmatprep.subr.mxu0 0.0
        %1240 = vmatpush1.msra.mxu0 %v1095
        %1241 = vmatprep.subr.mxu0 0.0
        %1242 = vmatpush1.msra.mxu0 %v1094
        %1243 = vmatprep.subr.mxu0 0.0
        %1244 = vmatpush1.msra.mxu0 %v1093
        %1245 = vmatprep.subr.mxu0 0.0
        %1246 = vmatpush1.msra.mxu0 %v1092
        %1247 = vmatprep.subr.mxu0 0.0
        %1248 = vmatpush1.msra.mxu0 %v1091
        %1249 = vmatprep.subr.mxu0 0.0
        %1250 = vmatpush1.msra.mxu0 %v1090
        %1251 = vmatprep.subr.mxu0 0.0
        %1252 = vmatpush1.msra.mxu0 %v1089
        %1253 = vmatprep.subr.mxu0 0.0
        %1254 = vmatpush1.msra.mxu0 %v1088
        %1255 = vmatprep.subr.mxu0 0.0
        %1256 = vmatpush1.msra.mxu0 %v1087
        %1257 = vmatprep.subr.mxu0 0.0
        %1258 = vmatpush2.msra.mxu0 0.0
        %1259 = vmatprep.subr.mxu0 0.0
        %1260 = vmatpush2.msra.mxu0 0.0
        %1261 = vmatprep.subr.mxu0 0.0
        %1262 = vmatpush2.msra.mxu0 0.0
        %1263 = vmatprep.subr.mxu0 0.0
        %1264 = vmatpush2.msra.mxu0 0.0
        %1265 = vmatprep.subr.mxu0 0.0
        %1266 = vmatpush2.msra.mxu0 0.0
        %1267 = vmatprep.subr.mxu0 0.0
        %1268 = vmatpush2.msra.mxu0 0.0
        %1269 = vmatprep.subr.mxu0 0.0
        %1270 = vmatpush2.msra.mxu0 0.0
        %1271 = vmatprep.subr.mxu0 0.0
        %1272 = vmatpush2.msra.mxu0 0.0
        %1273 = vmatprep.subr.mxu0 0.0
        %1274 = vmatpush2.msra.mxu0 0.0
        %1275 = vmatprep.subr.mxu0 0.0
        %1276 = vmatpush2.msra.mxu0 0.0
        %1277 = vmatprep.subr.mxu0 0.0
        %1278 = vmatpush2.msra.mxu0 0.0
        %1279 = vmatprep.subr.mxu0 0.0
        %1280 = vmatpush2.msra.mxu0 0.0
        %1281 = vmatprep.subr.mxu0 0.0
        %1282 = vmatpush2.msra.mxu0 0.0
        %1283 = vmatprep.subr.mxu0 0.0
        %1284 = vmatpush2.msra.mxu0 0.0
        %1285 = vmatprep.subr.mxu0 0.0
        %1286 = vmatpush2.msra.mxu0 0.0
        %1287 = vmatprep.subr.mxu0 0.0
        %1288 = vmatpush2.msra.mxu0 0.0
        %1289 = vmatprep.mubr.f32.mxu0 0.0
        %1290 = vmatmul.mubr.f32.gmra.mxu0 %v954
        %v1291 = vpop.f32.mrf.mxu0
        %v1292 = vadd.f32 %v1187, %v1291
        %v1293 = vpop.f32.mrf.mxu0
        %1294 = vmatprep.mubr.f32.mxu0 0.0
        %1295 = vmatmul.mubr.f32.gmra.mxu0 %v955
        %v1296 = vpop.f32.mrf.mxu0
        %v1297 = vadd.f32 %v1192, %v1296
        %v1298 = vpop.f32.mrf.mxu0
        %1299 = vmatprep.mubr.f32.mxu0 0.0
        %1300 = vmatmul.mubr.f32.gmra.mxu0 %v956
        %v1301 = vpop.f32.mrf.mxu0
        %v1302 = vadd.f32 %v1197, %v1301
        %v1303 = vpop.f32.mrf.mxu0
        %1304 = vmatprep.mubr.f32.mxu0 0.0
        %1305 = vmatmul.mubr.f32.gmra.mxu0 %v957
        %v1306 = vpop.f32.mrf.mxu0
        %v1307 = vadd.f32 %v1202, %v1306
        %v1308 = vpop.f32.mrf.mxu0
        %1309 = vmatprep.mubr.f32.mxu0 0.0
        %1310 = vmatmul.mubr.f32.gmra.mxu0 %v958
        %v1311 = vpop.f32.mrf.mxu0
        %v1312 = vadd.f32 %v1207, %v1311
        %v1313 = vpop.f32.mrf.mxu0
        %1314 = vmatprep.mubr.f32.mxu0 0.0
        %1315 = vmatmul.mubr.f32.gmra.mxu0 %v959
        %v1316 = vpop.f32.mrf.mxu0
        %v1317 = vadd.f32 %v1212, %v1316
        %v1318 = vpop.f32.mrf.mxu0
        %1319 = vmatprep.mubr.f32.mxu0 0.0
        %1320 = vmatmul.mubr.f32.gmra.mxu0 %v960
        %v1321 = vpop.f32.mrf.mxu0
        %v1322 = vadd.f32 %v1217, %v1321
        %v1323 = vpop.f32.mrf.mxu0
        %1324 = vmatprep.mubr.f32.mxu0 0.0
        %1325 = vmatmul.mubr.f32.gmra.mxu0 %v961
        %v1326 = vpop.f32.mrf.mxu0
        %v1327 = vadd.f32 %v1222, %v1326
        %v1328 = vpop.f32.mrf.mxu0
        %1329 = vdwg.mxu0
        %s1330 = scalar_lea.vmem [#allocation7], 256
        %v1331 = vld [vmem:[%s1330] sm:$0xff]
        %v1332 = vld [vmem:[%s1330 + $0x8] sm:$0xff]
        %v1333 = vld [vmem:[%s1330 + $0x10] sm:$0xff]
        %v1334 = vld [vmem:[%s1330 + $0x18] sm:$0xff]
        %v1335 = vld [vmem:[%s1330 + $0x20] sm:$0xff]
        %v1336 = vld [vmem:[%s1330 + $0x28] sm:$0xff]
        %v1337 = vld [vmem:[%s1330 + $0x30] sm:$0xff]
        %v1338 = vld [vmem:[%s1330 + $0x38] sm:$0xff]
        %v1339 = vld [vmem:[%s1330 + $0x40] sm:$0xff]
        %v1340 = vld [vmem:[%s1330 + $0x48] sm:$0xff]
        %v1341 = vld [vmem:[%s1330 + $0x50] sm:$0xff]
        %v1342 = vld [vmem:[%s1330 + $0x58] sm:$0xff]
        %v1343 = vld [vmem:[%s1330 + $0x60] sm:$0xff]
        %v1344 = vld [vmem:[%s1330 + $0x68] sm:$0xff]
        %v1345 = vld [vmem:[%s1330 + $0x70] sm:$0xff]
        %v1346 = vld [vmem:[%s1330 + $0x78] sm:$0xff]
        %1347 = vmatprep.subr.mxu0 0.0
        %1348 = vmatpush1.msra.mxu0 %v1346
        %1349 = vmatprep.subr.mxu0 0.0
        %1350 = vmatpush1.msra.mxu0 %v1345
        %1351 = vmatprep.subr.mxu0 0.0
        %1352 = vmatpush1.msra.mxu0 %v1344
        %1353 = vmatprep.subr.mxu0 0.0
        %1354 = vmatpush1.msra.mxu0 %v1343
        %1355 = vmatprep.subr.mxu0 0.0
        %1356 = vmatpush1.msra.mxu0 %v1342
        %1357 = vmatprep.subr.mxu0 0.0
        %1358 = vmatpush1.msra.mxu0 %v1341
        %1359 = vmatprep.subr.mxu0 0.0
        %1360 = vmatpush1.msra.mxu0 %v1340
        %1361 = vmatprep.subr.mxu0 0.0
        %1362 = vmatpush1.msra.mxu0 %v1339
        %1363 = vmatprep.subr.mxu0 0.0
        %1364 = vmatpush1.msra.mxu0 %v1338
        %1365 = vmatprep.subr.mxu0 0.0
        %1366 = vmatpush1.msra.mxu0 %v1337
        %1367 = vmatprep.subr.mxu0 0.0
        %1368 = vmatpush1.msra.mxu0 %v1336
        %1369 = vmatprep.subr.mxu0 0.0
        %1370 = vmatpush1.msra.mxu0 %v1335
        %1371 = vmatprep.subr.mxu0 0.0
        %1372 = vmatpush1.msra.mxu0 %v1334
        %1373 = vmatprep.subr.mxu0 0.0
        %1374 = vmatpush1.msra.mxu0 %v1333
        %1375 = vmatprep.subr.mxu0 0.0
        %1376 = vmatpush1.msra.mxu0 %v1332
        %1377 = vmatprep.subr.mxu0 0.0
        %1378 = vmatpush1.msra.mxu0 %v1331
        %1379 = vmatprep.subr.mxu0 0.0
        %1380 = vmatpush2.msra.mxu0 0.0
        %1381 = vmatprep.subr.mxu0 0.0
        %1382 = vmatpush2.msra.mxu0 0.0
        %1383 = vmatprep.subr.mxu0 0.0
        %1384 = vmatpush2.msra.mxu0 0.0
        %1385 = vmatprep.subr.mxu0 0.0
        %1386 = vmatpush2.msra.mxu0 0.0
        %1387 = vmatprep.subr.mxu0 0.0
        %1388 = vmatpush2.msra.mxu0 0.0
        %1389 = vmatprep.subr.mxu0 0.0
        %1390 = vmatpush2.msra.mxu0 0.0
        %1391 = vmatprep.subr.mxu0 0.0
        %1392 = vmatpush2.msra.mxu0 0.0
        %1393 = vmatprep.subr.mxu0 0.0
        %1394 = vmatpush2.msra.mxu0 0.0
        %1395 = vmatprep.subr.mxu0 0.0
        %1396 = vmatpush2.msra.mxu0 0.0
        %1397 = vmatprep.subr.mxu0 0.0
        %1398 = vmatpush2.msra.mxu0 0.0
        %1399 = vmatprep.subr.mxu0 0.0
        %1400 = vmatpush2.msra.mxu0 0.0
        %1401 = vmatprep.subr.mxu0 0.0
        %1402 = vmatpush2.msra.mxu0 0.0
        %1403 = vmatprep.subr.mxu0 0.0
        %1404 = vmatpush2.msra.mxu0 0.0
        %1405 = vmatprep.subr.mxu0 0.0
        %1406 = vmatpush2.msra.mxu0 0.0
        %1407 = vmatprep.subr.mxu0 0.0
        %1408 = vmatpush2.msra.mxu0 0.0
        %1409 = vmatprep.subr.mxu0 0.0
        %1410 = vmatpush2.msra.mxu0 0.0
        %1411 = vmatprep.mubr.f32.mxu0 0.0
        %1412 = vmatmul.mubr.f32.gmra.mxu0 %v1075
        %v1413 = vpop.f32.mrf.mxu0
        %v1414 = vadd.f32 0.0, %v1413
        %v1415 = vpop.f32.mrf.mxu0
        %1416 = vmatprep.mubr.f32.mxu0 0.0
        %1417 = vmatmul.mubr.f32.gmra.mxu0 %v1076
        %v1418 = vpop.f32.mrf.mxu0
        %v1419 = vadd.f32 0.0, %v1418
        %v1420 = vpop.f32.mrf.mxu0
        %1421 = vmatprep.mubr.f32.mxu0 0.0
        %1422 = vmatmul.mubr.f32.gmra.mxu0 %v1077
        %v1423 = vpop.f32.mrf.mxu0
        %v1424 = vadd.f32 0.0, %v1423
        %v1425 = vpop.f32.mrf.mxu0
        %1426 = vmatprep.mubr.f32.mxu0 0.0
        %1427 = vmatmul.mubr.f32.gmra.mxu0 %v1078
        %v1428 = vpop.f32.mrf.mxu0
        %v1429 = vadd.f32 0.0, %v1428
        %v1430 = vpop.f32.mrf.mxu0
        %1431 = vmatprep.mubr.f32.mxu0 0.0
        %1432 = vmatmul.mubr.f32.gmra.mxu0 %v1079
        %v1433 = vpop.f32.mrf.mxu0
        %v1434 = vadd.f32 0.0, %v1433
        %v1435 = vpop.f32.mrf.mxu0
        %1436 = vmatprep.mubr.f32.mxu0 0.0
        %1437 = vmatmul.mubr.f32.gmra.mxu0 %v1080
        %v1438 = vpop.f32.mrf.mxu0
        %v1439 = vadd.f32 0.0, %v1438
        %v1440 = vpop.f32.mrf.mxu0
        %1441 = vmatprep.mubr.f32.mxu0 0.0
        %1442 = vmatmul.mubr.f32.gmra.mxu0 %v1081
        %v1443 = vpop.f32.mrf.mxu0
        %v1444 = vadd.f32 0.0, %v1443
        %v1445 = vpop.f32.mrf.mxu0
        %1446 = vmatprep.mubr.f32.mxu0 0.0
        %1447 = vmatmul.mubr.f32.gmra.mxu0 %v1082
        %v1448 = vpop.f32.mrf.mxu0
        %v1449 = vadd.f32 0.0, %v1448
        %v1450 = vpop.f32.mrf.mxu0
        %1451 = vdwg.mxu0
        %v1452 = vadd.f32 %v1292, %v1414
        %v1453 = vadd.f32 %v1297, %v1419
        %v1454 = vadd.f32 %v1302, %v1424
        %v1455 = vadd.f32 %v1307, %v1429
        %v1456 = vadd.f32 %v1312, %v1434
        %v1457 = vadd.f32 %v1317, %v1439
        %v1458 = vadd.f32 %v1322, %v1444
        %v1459 = vadd.f32 %v1327, %v1449
        %s1460 = scalar_lea.vmem [#allocation7], 384
        %v1461 = vld [vmem:[%s1460] sm:$0xff]
        %v1462 = vld [vmem:[%s1460 + $0x8] sm:$0xff]
        %v1463 = vld [vmem:[%s1460 + $0x10] sm:$0xff]
        %v1464 = vld [vmem:[%s1460 + $0x18] sm:$0xff]
        %v1465 = vld [vmem:[%s1460 + $0x20] sm:$0xff]
        %v1466 = vld [vmem:[%s1460 + $0x28] sm:$0xff]
        %v1467 = vld [vmem:[%s1460 + $0x30] sm:$0xff]
        %v1468 = vld [vmem:[%s1460 + $0x38] sm:$0xff]
        %v1469 = vld [vmem:[%s1460 + $0x40] sm:$0xff]
        %v1470 = vld [vmem:[%s1460 + $0x48] sm:$0xff]
        %v1471 = vld [vmem:[%s1460 + $0x50] sm:$0xff]
        %v1472 = vld [vmem:[%s1460 + $0x58] sm:$0xff]
        %v1473 = vld [vmem:[%s1460 + $0x60] sm:$0xff]
        %v1474 = vld [vmem:[%s1460 + $0x68] sm:$0xff]
        %v1475 = vld [vmem:[%s1460 + $0x70] sm:$0xff]
        %v1476 = vld [vmem:[%s1460 + $0x78] sm:$0xff]
        %1477 = vmatprep.subr.mxu0 0.0
        %1478 = vmatpush1.msra.mxu0 %v1476
        %1479 = vmatprep.subr.mxu0 0.0
        %1480 = vmatpush1.msra.mxu0 %v1475
        %1481 = vmatprep.subr.mxu0 0.0
        %1482 = vmatpush1.msra.mxu0 %v1474
        %1483 = vmatprep.subr.mxu0 0.0
        %1484 = vmatpush1.msra.mxu0 %v1473
        %1485 = vmatprep.subr.mxu0 0.0
        %1486 = vmatpush1.msra.mxu0 %v1472
        %1487 = vmatprep.subr.mxu0 0.0
        %1488 = vmatpush1.msra.mxu0 %v1471
        %1489 = vmatprep.subr.mxu0 0.0
        %1490 = vmatpush1.msra.mxu0 %v1470
        %1491 = vmatprep.subr.mxu0 0.0
        %1492 = vmatpush1.msra.mxu0 %v1469
        %1493 = vmatprep.subr.mxu0 0.0
        %1494 = vmatpush1.msra.mxu0 %v1468
        %1495 = vmatprep.subr.mxu0 0.0
        %1496 = vmatpush1.msra.mxu0 %v1467
        %1497 = vmatprep.subr.mxu0 0.0
        %1498 = vmatpush1.msra.mxu0 %v1466
        %1499 = vmatprep.subr.mxu0 0.0
        %1500 = vmatpush1.msra.mxu0 %v1465
        %1501 = vmatprep.subr.mxu0 0.0
        %1502 = vmatpush1.msra.mxu0 %v1464
        %1503 = vmatprep.subr.mxu0 0.0
        %1504 = vmatpush1.msra.mxu0 %v1463
        %1505 = vmatprep.subr.mxu0 0.0
        %1506 = vmatpush1.msra.mxu0 %v1462
        %1507 = vmatprep.subr.mxu0 0.0
        %1508 = vmatpush1.msra.mxu0 %v1461
        %1509 = vmatprep.subr.mxu0 0.0
        %1510 = vmatpush2.msra.mxu0 0.0
        %1511 = vmatprep.subr.mxu0 0.0
        %1512 = vmatpush2.msra.mxu0 0.0
        %1513 = vmatprep.subr.mxu0 0.0
        %1514 = vmatpush2.msra.mxu0 0.0
        %1515 = vmatprep.subr.mxu0 0.0
        %1516 = vmatpush2.msra.mxu0 0.0
        %1517 = vmatprep.subr.mxu0 0.0
        %1518 = vmatpush2.msra.mxu0 0.0
        %1519 = vmatprep.subr.mxu0 0.0
        %1520 = vmatpush2.msra.mxu0 0.0
        %1521 = vmatprep.subr.mxu0 0.0
        %1522 = vmatpush2.msra.mxu0 0.0
        %1523 = vmatprep.subr.mxu0 0.0
        %1524 = vmatpush2.msra.mxu0 0.0
        %1525 = vmatprep.subr.mxu0 0.0
        %1526 = vmatpush2.msra.mxu0 0.0
        %1527 = vmatprep.subr.mxu0 0.0
        %1528 = vmatpush2.msra.mxu0 0.0
        %1529 = vmatprep.subr.mxu0 0.0
        %1530 = vmatpush2.msra.mxu0 0.0
        %1531 = vmatprep.subr.mxu0 0.0
        %1532 = vmatpush2.msra.mxu0 0.0
        %1533 = vmatprep.subr.mxu0 0.0
        %1534 = vmatpush2.msra.mxu0 0.0
        %1535 = vmatprep.subr.mxu0 0.0
        %1536 = vmatpush2.msra.mxu0 0.0
        %1537 = vmatprep.subr.mxu0 0.0
        %1538 = vmatpush2.msra.mxu0 0.0
        %1539 = vmatprep.subr.mxu0 0.0
        %1540 = vmatpush2.msra.mxu0 0.0
        %1541 = vmatprep.mubr.f32.mxu0 0.0
        %1542 = vmatmul.mubr.f32.gmra.mxu0 %v956
        %v1543 = vpop.f32.mrf.mxu0
        %v1544 = vadd.f32 0.0, %v1543
        %v1545 = vpop.f32.mrf.mxu0
        %1546 = vmatprep.mubr.f32.mxu0 0.0
        %1547 = vmatmul.mubr.f32.gmra.mxu0 %v957
        %v1548 = vpop.f32.mrf.mxu0
        %v1549 = vadd.f32 0.0, %v1548
        %v1550 = vpop.f32.mrf.mxu0
        %1551 = vmatprep.mubr.f32.mxu0 0.0
        %1552 = vmatmul.mubr.f32.gmra.mxu0 %v958
        %v1553 = vpop.f32.mrf.mxu0
        %v1554 = vadd.f32 0.0, %v1553
        %v1555 = vpop.f32.mrf.mxu0
        %1556 = vmatprep.mubr.f32.mxu0 0.0
        %1557 = vmatmul.mubr.f32.gmra.mxu0 %v959
        %v1558 = vpop.f32.mrf.mxu0
        %v1559 = vadd.f32 0.0, %v1558
        %v1560 = vpop.f32.mrf.mxu0
        %1561 = vmatprep.mubr.f32.mxu0 0.0
        %1562 = vmatmul.mubr.f32.gmra.mxu0 %v960
        %v1563 = vpop.f32.mrf.mxu0
        %v1564 = vadd.f32 0.0, %v1563
        %v1565 = vpop.f32.mrf.mxu0
        %1566 = vmatprep.mubr.f32.mxu0 0.0
        %1567 = vmatmul.mubr.f32.gmra.mxu0 %v961
        %v1568 = vpop.f32.mrf.mxu0
        %v1569 = vadd.f32 0.0, %v1568
        %v1570 = vpop.f32.mrf.mxu0
        %1571 = vmatprep.mubr.f32.mxu0 0.0
        %1572 = vmatmul.mubr.f32.gmra.mxu0 %v962
        %v1573 = vpop.f32.mrf.mxu0
        %v1574 = vadd.f32 0.0, %v1573
        %v1575 = vpop.f32.mrf.mxu0
        %1576 = vmatprep.mubr.f32.mxu0 0.0
        %1577 = vmatmul.mubr.f32.gmra.mxu0 %v963
        %v1578 = vpop.f32.mrf.mxu0
        %v1579 = vadd.f32 0.0, %v1578
        %v1580 = vpop.f32.mrf.mxu0
        %1581 = vdwg.mxu0
        %v1582 = vadd.f32 %v1452, %v1544
        %v1583 = vadd.f32 %v1453, %v1549
        %v1584 = vadd.f32 %v1454, %v1554
        %v1585 = vadd.f32 %v1455, %v1559
        %v1586 = vadd.f32 %v1456, %v1564
        %v1587 = vadd.f32 %v1457, %v1569
        %v1588 = vadd.f32 %v1458, %v1574
        %v1589 = vadd.f32 %v1459, %v1579
        %s1590 = scalar_lea.vmem [#allocation7], 512
        %v1591 = vld [vmem:[%s1590] sm:$0xff]
        %v1592 = vld [vmem:[%s1590 + $0x8] sm:$0xff]
        %v1593 = vld [vmem:[%s1590 + $0x10] sm:$0xff]
        %v1594 = vld [vmem:[%s1590 + $0x18] sm:$0xff]
        %v1595 = vld [vmem:[%s1590 + $0x20] sm:$0xff]
        %v1596 = vld [vmem:[%s1590 + $0x28] sm:$0xff]
        %v1597 = vld [vmem:[%s1590 + $0x30] sm:$0xff]
        %v1598 = vld [vmem:[%s1590 + $0x38] sm:$0xff]
        %v1599 = vld [vmem:[%s1590 + $0x40] sm:$0xff]
        %v1600 = vld [vmem:[%s1590 + $0x48] sm:$0xff]
        %v1601 = vld [vmem:[%s1590 + $0x50] sm:$0xff]
        %v1602 = vld [vmem:[%s1590 + $0x58] sm:$0xff]
        %v1603 = vld [vmem:[%s1590 + $0x60] sm:$0xff]
        %v1604 = vld [vmem:[%s1590 + $0x68] sm:$0xff]
        %v1605 = vld [vmem:[%s1590 + $0x70] sm:$0xff]
        %v1606 = vld [vmem:[%s1590 + $0x78] sm:$0xff]
        %1607 = vmatprep.subr.mxu0 0.0
        %1608 = vmatpush1.msra.mxu0 %v1606
        %1609 = vmatprep.subr.mxu0 0.0
        %1610 = vmatpush1.msra.mxu0 %v1605
        %1611 = vmatprep.subr.mxu0 0.0
        %1612 = vmatpush1.msra.mxu0 %v1604
        %1613 = vmatprep.subr.mxu0 0.0
        %1614 = vmatpush1.msra.mxu0 %v1603
        %1615 = vmatprep.subr.mxu0 0.0
        %1616 = vmatpush1.msra.mxu0 %v1602
        %1617 = vmatprep.subr.mxu0 0.0
        %1618 = vmatpush1.msra.mxu0 %v1601
        %1619 = vmatprep.subr.mxu0 0.0
        %1620 = vmatpush1.msra.mxu0 %v1600
        %1621 = vmatprep.subr.mxu0 0.0
        %1622 = vmatpush1.msra.mxu0 %v1599
        %1623 = vmatprep.subr.mxu0 0.0
        %1624 = vmatpush1.msra.mxu0 %v1598
        %1625 = vmatprep.subr.mxu0 0.0
        %1626 = vmatpush1.msra.mxu0 %v1597
        %1627 = vmatprep.subr.mxu0 0.0
        %1628 = vmatpush1.msra.mxu0 %v1596
        %1629 = vmatprep.subr.mxu0 0.0
        %1630 = vmatpush1.msra.mxu0 %v1595
        %1631 = vmatprep.subr.mxu0 0.0
        %1632 = vmatpush1.msra.mxu0 %v1594
        %1633 = vmatprep.subr.mxu0 0.0
        %1634 = vmatpush1.msra.mxu0 %v1593
        %1635 = vmatprep.subr.mxu0 0.0
        %1636 = vmatpush1.msra.mxu0 %v1592
        %1637 = vmatprep.subr.mxu0 0.0
        %1638 = vmatpush1.msra.mxu0 %v1591
        %1639 = vmatprep.subr.mxu0 0.0
        %1640 = vmatpush2.msra.mxu0 0.0
        %1641 = vmatprep.subr.mxu0 0.0
        %1642 = vmatpush2.msra.mxu0 0.0
        %1643 = vmatprep.subr.mxu0 0.0
        %1644 = vmatpush2.msra.mxu0 0.0
        %1645 = vmatprep.subr.mxu0 0.0
        %1646 = vmatpush2.msra.mxu0 0.0
        %1647 = vmatprep.subr.mxu0 0.0
        %1648 = vmatpush2.msra.mxu0 0.0
        %1649 = vmatprep.subr.mxu0 0.0
        %1650 = vmatpush2.msra.mxu0 0.0
        %1651 = vmatprep.subr.mxu0 0.0
        %1652 = vmatpush2.msra.mxu0 0.0
        %1653 = vmatprep.subr.mxu0 0.0
        %1654 = vmatpush2.msra.mxu0 0.0
        %1655 = vmatprep.subr.mxu0 0.0
        %1656 = vmatpush2.msra.mxu0 0.0
        %1657 = vmatprep.subr.mxu0 0.0
        %1658 = vmatpush2.msra.mxu0 0.0
        %1659 = vmatprep.subr.mxu0 0.0
        %1660 = vmatpush2.msra.mxu0 0.0
        %1661 = vmatprep.subr.mxu0 0.0
        %1662 = vmatpush2.msra.mxu0 0.0
        %1663 = vmatprep.subr.mxu0 0.0
        %1664 = vmatpush2.msra.mxu0 0.0
        %1665 = vmatprep.subr.mxu0 0.0
        %1666 = vmatpush2.msra.mxu0 0.0
        %1667 = vmatprep.subr.mxu0 0.0
        %1668 = vmatpush2.msra.mxu0 0.0
        %1669 = vmatprep.subr.mxu0 0.0
        %1670 = vmatpush2.msra.mxu0 0.0
        %1671 = vmatprep.mubr.f32.mxu0 0.0
        %1672 = vmatmul.mubr.f32.gmra.mxu0 %v716
        %v1673 = vpop.f32.mrf.mxu0
        %v1674 = vadd.f32 0.0, %v1673
        %v1675 = vpop.f32.mrf.mxu0
        %1676 = vmatprep.mubr.f32.mxu0 0.0
        %1677 = vmatmul.mubr.f32.gmra.mxu0 %v717
        %v1678 = vpop.f32.mrf.mxu0
        %v1679 = vadd.f32 0.0, %v1678
        %v1680 = vpop.f32.mrf.mxu0
        %1681 = vmatprep.mubr.f32.mxu0 0.0
        %1682 = vmatmul.mubr.f32.gmra.mxu0 %v718
        %v1683 = vpop.f32.mrf.mxu0
        %v1684 = vadd.f32 0.0, %v1683
        %v1685 = vpop.f32.mrf.mxu0
        %1686 = vmatprep.mubr.f32.mxu0 0.0
        %1687 = vmatmul.mubr.f32.gmra.mxu0 %v719
        %v1688 = vpop.f32.mrf.mxu0
        %v1689 = vadd.f32 0.0, %v1688
        %v1690 = vpop.f32.mrf.mxu0
        %1691 = vmatprep.mubr.f32.mxu0 0.0
        %1692 = vmatmul.mubr.f32.gmra.mxu0 %v720
        %v1693 = vpop.f32.mrf.mxu0
        %v1694 = vadd.f32 0.0, %v1693
        %v1695 = vpop.f32.mrf.mxu0
        %1696 = vmatprep.mubr.f32.mxu0 0.0
        %1697 = vmatmul.mubr.f32.gmra.mxu0 %v721
        %v1698 = vpop.f32.mrf.mxu0
        %v1699 = vadd.f32 0.0, %v1698
        %v1700 = vpop.f32.mrf.mxu0
        %1701 = vmatprep.mubr.f32.mxu0 0.0
        %1702 = vmatmul.mubr.f32.gmra.mxu0 %v722
        %v1703 = vpop.f32.mrf.mxu0
        %v1704 = vadd.f32 0.0, %v1703
        %v1705 = vpop.f32.mrf.mxu0
        %1706 = vmatprep.mubr.f32.mxu0 0.0
        %1707 = vmatmul.mubr.f32.gmra.mxu0 %v723
        %v1708 = vpop.f32.mrf.mxu0
        %v1709 = vadd.f32 0.0, %v1708
        %v1710 = vpop.f32.mrf.mxu0
        %1711 = vdwg.mxu0
        %v1712 = vadd.f32 %v1582, %v1674
        %v1713 = vadd.f32 %v1583, %v1679
        %v1714 = vadd.f32 %v1584, %v1684
        %v1715 = vadd.f32 %v1585, %v1689
        %v1716 = vadd.f32 %v1586, %v1694
        %v1717 = vadd.f32 %v1587, %v1699
        %v1718 = vadd.f32 %v1588, %v1704
        %v1719 = vadd.f32 %v1589, %v1709
        %s1720 = scalar_lea.vmem [#allocation7], 640
        %v1721 = vld [vmem:[%s1720] sm:$0xff]
        %v1722 = vld [vmem:[%s1720 + $0x8] sm:$0xff]
        %v1723 = vld [vmem:[%s1720 + $0x10] sm:$0xff]
        %v1724 = vld [vmem:[%s1720 + $0x18] sm:$0xff]
        %v1725 = vld [vmem:[%s1720 + $0x20] sm:$0xff]
        %v1726 = vld [vmem:[%s1720 + $0x28] sm:$0xff]
        %v1727 = vld [vmem:[%s1720 + $0x30] sm:$0xff]
        %v1728 = vld [vmem:[%s1720 + $0x38] sm:$0xff]
        %v1729 = vld [vmem:[%s1720 + $0x40] sm:$0xff]
        %v1730 = vld [vmem:[%s1720 + $0x48] sm:$0xff]
        %v1731 = vld [vmem:[%s1720 + $0x50] sm:$0xff]
        %v1732 = vld [vmem:[%s1720 + $0x58] sm:$0xff]
        %v1733 = vld [vmem:[%s1720 + $0x60] sm:$0xff]
        %v1734 = vld [vmem:[%s1720 + $0x68] sm:$0xff]
        %v1735 = vld [vmem:[%s1720 + $0x70] sm:$0xff]
        %v1736 = vld [vmem:[%s1720 + $0x78] sm:$0xff]
        %1737 = vmatprep.subr.mxu0 0.0
        %1738 = vmatpush1.msra.mxu0 %v1736
        %1739 = vmatprep.subr.mxu0 0.0
        %1740 = vmatpush1.msra.mxu0 %v1735
        %1741 = vmatprep.subr.mxu0 0.0
        %1742 = vmatpush1.msra.mxu0 %v1734
        %1743 = vmatprep.subr.mxu0 0.0
        %1744 = vmatpush1.msra.mxu0 %v1733
        %1745 = vmatprep.subr.mxu0 0.0
        %1746 = vmatpush1.msra.mxu0 %v1732
        %1747 = vmatprep.subr.mxu0 0.0
        %1748 = vmatpush1.msra.mxu0 %v1731
        %1749 = vmatprep.subr.mxu0 0.0
        %1750 = vmatpush1.msra.mxu0 %v1730
        %1751 = vmatprep.subr.mxu0 0.0
        %1752 = vmatpush1.msra.mxu0 %v1729
        %1753 = vmatprep.subr.mxu0 0.0
        %1754 = vmatpush1.msra.mxu0 %v1728
        %1755 = vmatprep.subr.mxu0 0.0
        %1756 = vmatpush1.msra.mxu0 %v1727
        %1757 = vmatprep.subr.mxu0 0.0
        %1758 = vmatpush1.msra.mxu0 %v1726
        %1759 = vmatprep.subr.mxu0 0.0
        %1760 = vmatpush1.msra.mxu0 %v1725
        %1761 = vmatprep.subr.mxu0 0.0
        %1762 = vmatpush1.msra.mxu0 %v1724
        %1763 = vmatprep.subr.mxu0 0.0
        %1764 = vmatpush1.msra.mxu0 %v1723
        %1765 = vmatprep.subr.mxu0 0.0
        %1766 = vmatpush1.msra.mxu0 %v1722
        %1767 = vmatprep.subr.mxu0 0.0
        %1768 = vmatpush1.msra.mxu0 %v1721
        %1769 = vmatprep.subr.mxu0 0.0
        %1770 = vmatpush2.msra.mxu0 0.0
        %1771 = vmatprep.subr.mxu0 0.0
        %1772 = vmatpush2.msra.mxu0 0.0
        %1773 = vmatprep.subr.mxu0 0.0
        %1774 = vmatpush2.msra.mxu0 0.0
        %1775 = vmatprep.subr.mxu0 0.0
        %1776 = vmatpush2.msra.mxu0 0.0
        %1777 = vmatprep.subr.mxu0 0.0
        %1778 = vmatpush2.msra.mxu0 0.0
        %1779 = vmatprep.subr.mxu0 0.0
        %1780 = vmatpush2.msra.mxu0 0.0
        %1781 = vmatprep.subr.mxu0 0.0
        %1782 = vmatpush2.msra.mxu0 0.0
        %1783 = vmatprep.subr.mxu0 0.0
        %1784 = vmatpush2.msra.mxu0 0.0
        %1785 = vmatprep.subr.mxu0 0.0
        %1786 = vmatpush2.msra.mxu0 0.0
        %1787 = vmatprep.subr.mxu0 0.0
        %1788 = vmatpush2.msra.mxu0 0.0
        %1789 = vmatprep.subr.mxu0 0.0
        %1790 = vmatpush2.msra.mxu0 0.0
        %1791 = vmatprep.subr.mxu0 0.0
        %1792 = vmatpush2.msra.mxu0 0.0
        %1793 = vmatprep.subr.mxu0 0.0
        %1794 = vmatpush2.msra.mxu0 0.0
        %1795 = vmatprep.subr.mxu0 0.0
        %1796 = vmatpush2.msra.mxu0 0.0
        %1797 = vmatprep.subr.mxu0 0.0
        %1798 = vmatpush2.msra.mxu0 0.0
        %1799 = vmatprep.subr.mxu0 0.0
        %1800 = vmatpush2.msra.mxu0 0.0
        %1801 = vmatprep.mubr.f32.mxu0 0.0
        %1802 = vmatmul.mubr.f32.gmra.mxu0 %v1077
        %v1803 = vpop.f32.mrf.mxu0
        %v1804 = vadd.f32 0.0, %v1803
        %v1805 = vpop.f32.mrf.mxu0
        %1806 = vmatprep.mubr.f32.mxu0 0.0
        %1807 = vmatmul.mubr.f32.gmra.mxu0 %v1078
        %v1808 = vpop.f32.mrf.mxu0
        %v1809 = vadd.f32 0.0, %v1808
        %v1810 = vpop.f32.mrf.mxu0
        %1811 = vmatprep.mubr.f32.mxu0 0.0
        %1812 = vmatmul.mubr.f32.gmra.mxu0 %v1079
        %v1813 = vpop.f32.mrf.mxu0
        %v1814 = vadd.f32 0.0, %v1813
        %v1815 = vpop.f32.mrf.mxu0
        %1816 = vmatprep.mubr.f32.mxu0 0.0
        %1817 = vmatmul.mubr.f32.gmra.mxu0 %v1080
        %v1818 = vpop.f32.mrf.mxu0
        %v1819 = vadd.f32 0.0, %v1818
        %v1820 = vpop.f32.mrf.mxu0
        %1821 = vmatprep.mubr.f32.mxu0 0.0
        %1822 = vmatmul.mubr.f32.gmra.mxu0 %v1081
        %v1823 = vpop.f32.mrf.mxu0
        %v1824 = vadd.f32 0.0, %v1823
        %v1825 = vpop.f32.mrf.mxu0
        %1826 = vmatprep.mubr.f32.mxu0 0.0
        %1827 = vmatmul.mubr.f32.gmra.mxu0 %v1082
        %v1828 = vpop.f32.mrf.mxu0
        %v1829 = vadd.f32 0.0, %v1828
        %v1830 = vpop.f32.mrf.mxu0
        %1831 = vmatprep.mubr.f32.mxu0 0.0
        %1832 = vmatmul.mubr.f32.gmra.mxu0 %v1083
        %v1833 = vpop.f32.mrf.mxu0
        %v1834 = vadd.f32 0.0, %v1833
        %v1835 = vpop.f32.mrf.mxu0
        %1836 = vmatprep.mubr.f32.mxu0 0.0
        %1837 = vmatmul.mubr.f32.gmra.mxu0 %v1084
        %v1838 = vpop.f32.mrf.mxu0
        %v1839 = vadd.f32 0.0, %v1838
        %v1840 = vpop.f32.mrf.mxu0
        %1841 = vdwg.mxu0
        %v1842 = vadd.f32 %v1712, %v1804
        %v1843 = vadd.f32 %v1713, %v1809
        %v1844 = vadd.f32 %v1714, %v1814
        %v1845 = vadd.f32 %v1715, %v1819
        %v1846 = vadd.f32 %v1716, %v1824
        %v1847 = vadd.f32 %v1717, %v1829
        %v1848 = vadd.f32 %v1718, %v1834
        %v1849 = vadd.f32 %v1719, %v1839
        %s1850 = scalar_lea.vmem [#allocation7], 768
        %v1851 = vld [vmem:[%s1850] sm:$0xff]
        %v1852 = vld [vmem:[%s1850 + $0x8] sm:$0xff]
        %v1853 = vld [vmem:[%s1850 + $0x10] sm:$0xff]
        %v1854 = vld [vmem:[%s1850 + $0x18] sm:$0xff]
        %v1855 = vld [vmem:[%s1850 + $0x20] sm:$0xff]
        %v1856 = vld [vmem:[%s1850 + $0x28] sm:$0xff]
        %v1857 = vld [vmem:[%s1850 + $0x30] sm:$0xff]
        %v1858 = vld [vmem:[%s1850 + $0x38] sm:$0xff]
        %v1859 = vld [vmem:[%s1850 + $0x40] sm:$0xff]
        %v1860 = vld [vmem:[%s1850 + $0x48] sm:$0xff]
        %v1861 = vld [vmem:[%s1850 + $0x50] sm:$0xff]
        %v1862 = vld [vmem:[%s1850 + $0x58] sm:$0xff]
        %v1863 = vld [vmem:[%s1850 + $0x60] sm:$0xff]
        %v1864 = vld [vmem:[%s1850 + $0x68] sm:$0xff]
        %v1865 = vld [vmem:[%s1850 + $0x70] sm:$0xff]
        %v1866 = vld [vmem:[%s1850 + $0x78] sm:$0xff]
        %1867 = vmatprep.subr.mxu0 0.0
        %1868 = vmatpush1.msra.mxu0 %v1866
        %1869 = vmatprep.subr.mxu0 0.0
        %1870 = vmatpush1.msra.mxu0 %v1865
        %1871 = vmatprep.subr.mxu0 0.0
        %1872 = vmatpush1.msra.mxu0 %v1864
        %1873 = vmatprep.subr.mxu0 0.0
        %1874 = vmatpush1.msra.mxu0 %v1863
        %1875 = vmatprep.subr.mxu0 0.0
        %1876 = vmatpush1.msra.mxu0 %v1862
        %1877 = vmatprep.subr.mxu0 0.0
        %1878 = vmatpush1.msra.mxu0 %v1861
        %1879 = vmatprep.subr.mxu0 0.0
        %1880 = vmatpush1.msra.mxu0 %v1860
        %1881 = vmatprep.subr.mxu0 0.0
        %1882 = vmatpush1.msra.mxu0 %v1859
        %1883 = vmatprep.subr.mxu0 0.0
        %1884 = vmatpush1.msra.mxu0 %v1858
        %1885 = vmatprep.subr.mxu0 0.0
        %1886 = vmatpush1.msra.mxu0 %v1857
        %1887 = vmatprep.subr.mxu0 0.0
        %1888 = vmatpush1.msra.mxu0 %v1856
        %1889 = vmatprep.subr.mxu0 0.0
        %1890 = vmatpush1.msra.mxu0 %v1855
        %1891 = vmatprep.subr.mxu0 0.0
        %1892 = vmatpush1.msra.mxu0 %v1854
        %1893 = vmatprep.subr.mxu0 0.0
        %1894 = vmatpush1.msra.mxu0 %v1853
        %1895 = vmatprep.subr.mxu0 0.0
        %1896 = vmatpush1.msra.mxu0 %v1852
        %1897 = vmatprep.subr.mxu0 0.0
        %1898 = vmatpush1.msra.mxu0 %v1851
        %1899 = vmatprep.subr.mxu0 0.0
        %1900 = vmatpush2.msra.mxu0 0.0
        %1901 = vmatprep.subr.mxu0 0.0
        %1902 = vmatpush2.msra.mxu0 0.0
        %1903 = vmatprep.subr.mxu0 0.0
        %1904 = vmatpush2.msra.mxu0 0.0
        %1905 = vmatprep.subr.mxu0 0.0
        %1906 = vmatpush2.msra.mxu0 0.0
        %1907 = vmatprep.subr.mxu0 0.0
        %1908 = vmatpush2.msra.mxu0 0.0
        %1909 = vmatprep.subr.mxu0 0.0
        %1910 = vmatpush2.msra.mxu0 0.0
        %1911 = vmatprep.subr.mxu0 0.0
        %1912 = vmatpush2.msra.mxu0 0.0
        %1913 = vmatprep.subr.mxu0 0.0
        %1914 = vmatpush2.msra.mxu0 0.0
        %1915 = vmatprep.subr.mxu0 0.0
        %1916 = vmatpush2.msra.mxu0 0.0
        %1917 = vmatprep.subr.mxu0 0.0
        %1918 = vmatpush2.msra.mxu0 0.0
        %1919 = vmatprep.subr.mxu0 0.0
        %1920 = vmatpush2.msra.mxu0 0.0
        %1921 = vmatprep.subr.mxu0 0.0
        %1922 = vmatpush2.msra.mxu0 0.0
        %1923 = vmatprep.subr.mxu0 0.0
        %1924 = vmatpush2.msra.mxu0 0.0
        %1925 = vmatprep.subr.mxu0 0.0
        %1926 = vmatpush2.msra.mxu0 0.0
        %1927 = vmatprep.subr.mxu0 0.0
        %1928 = vmatpush2.msra.mxu0 0.0
        %1929 = vmatprep.subr.mxu0 0.0
        %1930 = vmatpush2.msra.mxu0 0.0
        %1931 = vmatprep.mubr.f32.mxu0 0.0
        %1932 = vmatmul.mubr.f32.gmra.mxu0 %v958
        %v1933 = vpop.f32.mrf.mxu0
        %v1934 = vadd.f32 0.0, %v1933
        %v1935 = vpop.f32.mrf.mxu0
        %1936 = vmatprep.mubr.f32.mxu0 0.0
        %1937 = vmatmul.mubr.f32.gmra.mxu0 %v959
        %v1938 = vpop.f32.mrf.mxu0
        %v1939 = vadd.f32 0.0, %v1938
        %v1940 = vpop.f32.mrf.mxu0
        %1941 = vmatprep.mubr.f32.mxu0 0.0
        %1942 = vmatmul.mubr.f32.gmra.mxu0 %v960
        %v1943 = vpop.f32.mrf.mxu0
        %v1944 = vadd.f32 0.0, %v1943
        %v1945 = vpop.f32.mrf.mxu0
        %1946 = vmatprep.mubr.f32.mxu0 0.0
        %1947 = vmatmul.mubr.f32.gmra.mxu0 %v961
        %v1948 = vpop.f32.mrf.mxu0
        %v1949 = vadd.f32 0.0, %v1948
        %v1950 = vpop.f32.mrf.mxu0
        %1951 = vmatprep.mubr.f32.mxu0 0.0
        %1952 = vmatmul.mubr.f32.gmra.mxu0 %v962
        %v1953 = vpop.f32.mrf.mxu0
        %v1954 = vadd.f32 0.0, %v1953
        %v1955 = vpop.f32.mrf.mxu0
        %1956 = vmatprep.mubr.f32.mxu0 0.0
        %1957 = vmatmul.mubr.f32.gmra.mxu0 %v963
        %v1958 = vpop.f32.mrf.mxu0
        %v1959 = vadd.f32 0.0, %v1958
        %v1960 = vpop.f32.mrf.mxu0
        %1961 = vmatprep.mubr.f32.mxu0 0.0
        %1962 = vmatmul.mubr.f32.gmra.mxu0 %v964
        %v1963 = vpop.f32.mrf.mxu0
        %v1964 = vadd.f32 0.0, %v1963
        %v1965 = vpop.f32.mrf.mxu0
        %1966 = vmatprep.mubr.f32.mxu0 0.0
        %1967 = vmatmul.mubr.f32.gmra.mxu0 %v965
        %v1968 = vpop.f32.mrf.mxu0
        %v1969 = vadd.f32 0.0, %v1968
        %v1970 = vpop.f32.mrf.mxu0
        %1971 = vdwg.mxu0
        %v1972 = vadd.f32 %v1842, %v1934
        %v1973 = vadd.f32 %v1843, %v1939
        %v1974 = vadd.f32 %v1844, %v1944
        %v1975 = vadd.f32 %v1845, %v1949
        %v1976 = vadd.f32 %v1846, %v1954
        %v1977 = vadd.f32 %v1847, %v1959
        %v1978 = vadd.f32 %v1848, %v1964
        %v1979 = vadd.f32 %v1849, %v1969
        %s1980 = scalar_lea.vmem [#allocation7], 896
        %v1981 = vld [vmem:[%s1980] sm:$0xff]
        %v1982 = vld [vmem:[%s1980 + $0x8] sm:$0xff]
        %v1983 = vld [vmem:[%s1980 + $0x10] sm:$0xff]
        %v1984 = vld [vmem:[%s1980 + $0x18] sm:$0xff]
        %v1985 = vld [vmem:[%s1980 + $0x20] sm:$0xff]
        %v1986 = vld [vmem:[%s1980 + $0x28] sm:$0xff]
        %v1987 = vld [vmem:[%s1980 + $0x30] sm:$0xff]
        %v1988 = vld [vmem:[%s1980 + $0x38] sm:$0xff]
        %v1989 = vld [vmem:[%s1980 + $0x40] sm:$0xff]
        %v1990 = vld [vmem:[%s1980 + $0x48] sm:$0xff]
        %v1991 = vld [vmem:[%s1980 + $0x50] sm:$0xff]
        %v1992 = vld [vmem:[%s1980 + $0x58] sm:$0xff]
        %v1993 = vld [vmem:[%s1980 + $0x60] sm:$0xff]
        %v1994 = vld [vmem:[%s1980 + $0x68] sm:$0xff]
        %v1995 = vld [vmem:[%s1980 + $0x70] sm:$0xff]
        %v1996 = vld [vmem:[%s1980 + $0x78] sm:$0xff]
        %1997 = vmatprep.subr.mxu0 0.0
        %1998 = vmatpush1.msra.mxu0 %v1996
        %1999 = vmatprep.subr.mxu0 0.0
        %2000 = vmatpush1.msra.mxu0 %v1995
        %2001 = vmatprep.subr.mxu0 0.0
        %2002 = vmatpush1.msra.mxu0 %v1994
        %2003 = vmatprep.subr.mxu0 0.0
        %2004 = vmatpush1.msra.mxu0 %v1993
        %2005 = vmatprep.subr.mxu0 0.0
        %2006 = vmatpush1.msra.mxu0 %v1992
        %2007 = vmatprep.subr.mxu0 0.0
        %2008 = vmatpush1.msra.mxu0 %v1991
        %2009 = vmatprep.subr.mxu0 0.0
        %2010 = vmatpush1.msra.mxu0 %v1990
        %2011 = vmatprep.subr.mxu0 0.0
        %2012 = vmatpush1.msra.mxu0 %v1989
        %2013 = vmatprep.subr.mxu0 0.0
        %2014 = vmatpush1.msra.mxu0 %v1988
        %2015 = vmatprep.subr.mxu0 0.0
        %2016 = vmatpush1.msra.mxu0 %v1987
        %2017 = vmatprep.subr.mxu0 0.0
        %2018 = vmatpush1.msra.mxu0 %v1986
        %2019 = vmatprep.subr.mxu0 0.0
        %2020 = vmatpush1.msra.mxu0 %v1985
        %2021 = vmatprep.subr.mxu0 0.0
        %2022 = vmatpush1.msra.mxu0 %v1984
        %2023 = vmatprep.subr.mxu0 0.0
        %2024 = vmatpush1.msra.mxu0 %v1983
        %2025 = vmatprep.subr.mxu0 0.0
        %2026 = vmatpush1.msra.mxu0 %v1982
        %2027 = vmatprep.subr.mxu0 0.0
        %2028 = vmatpush1.msra.mxu0 %v1981
        %2029 = vmatprep.subr.mxu0 0.0
        %2030 = vmatpush2.msra.mxu0 0.0
        %2031 = vmatprep.subr.mxu0 0.0
        %2032 = vmatpush2.msra.mxu0 0.0
        %2033 = vmatprep.subr.mxu0 0.0
        %2034 = vmatpush2.msra.mxu0 0.0
        %2035 = vmatprep.subr.mxu0 0.0
        %2036 = vmatpush2.msra.mxu0 0.0
        %2037 = vmatprep.subr.mxu0 0.0
        %2038 = vmatpush2.msra.mxu0 0.0
        %2039 = vmatprep.subr.mxu0 0.0
        %2040 = vmatpush2.msra.mxu0 0.0
        %2041 = vmatprep.subr.mxu0 0.0
        %2042 = vmatpush2.msra.mxu0 0.0
        %2043 = vmatprep.subr.mxu0 0.0
        %2044 = vmatpush2.msra.mxu0 0.0
        %2045 = vmatprep.subr.mxu0 0.0
        %2046 = vmatpush2.msra.mxu0 0.0
        %2047 = vmatprep.subr.mxu0 0.0
        %2048 = vmatpush2.msra.mxu0 0.0
        %2049 = vmatprep.subr.mxu0 0.0
        %2050 = vmatpush2.msra.mxu0 0.0
        %2051 = vmatprep.subr.mxu0 0.0
        %2052 = vmatpush2.msra.mxu0 0.0
        %2053 = vmatprep.subr.mxu0 0.0
        %2054 = vmatpush2.msra.mxu0 0.0
        %2055 = vmatprep.subr.mxu0 0.0
        %2056 = vmatpush2.msra.mxu0 0.0
        %2057 = vmatprep.subr.mxu0 0.0
        %2058 = vmatpush2.msra.mxu0 0.0
        %2059 = vmatprep.subr.mxu0 0.0
        %2060 = vmatpush2.msra.mxu0 0.0
        %2061 = vmatprep.mubr.f32.mxu0 0.0
        %2062 = vmatmul.mubr.f32.gmra.mxu0 %v718
        %v2063 = vpop.f32.mrf.mxu0
        %v2064 = vadd.f32 0.0, %v2063
        %v2065 = vpop.f32.mrf.mxu0
        %2066 = vmatprep.mubr.f32.mxu0 0.0
        %2067 = vmatmul.mubr.f32.gmra.mxu0 %v719
        %v2068 = vpop.f32.mrf.mxu0
        %v2069 = vadd.f32 0.0, %v2068
        %v2070 = vpop.f32.mrf.mxu0
        %2071 = vmatprep.mubr.f32.mxu0 0.0
        %2072 = vmatmul.mubr.f32.gmra.mxu0 %v720
        %v2073 = vpop.f32.mrf.mxu0
        %v2074 = vadd.f32 0.0, %v2073
        %v2075 = vpop.f32.mrf.mxu0
        %2076 = vmatprep.mubr.f32.mxu0 0.0
        %2077 = vmatmul.mubr.f32.gmra.mxu0 %v721
        %v2078 = vpop.f32.mrf.mxu0
        %v2079 = vadd.f32 0.0, %v2078
        %v2080 = vpop.f32.mrf.mxu0
        %2081 = vmatprep.mubr.f32.mxu0 0.0
        %2082 = vmatmul.mubr.f32.gmra.mxu0 %v722
        %v2083 = vpop.f32.mrf.mxu0
        %v2084 = vadd.f32 0.0, %v2083
        %v2085 = vpop.f32.mrf.mxu0
        %2086 = vmatprep.mubr.f32.mxu0 0.0
        %2087 = vmatmul.mubr.f32.gmra.mxu0 %v723
        %v2088 = vpop.f32.mrf.mxu0
        %v2089 = vadd.f32 0.0, %v2088
        %v2090 = vpop.f32.mrf.mxu0
        %2091 = vmatprep.mubr.f32.mxu0 0.0
        %2092 = vmatmul.mubr.f32.gmra.mxu0 %v831
        %v2093 = vpop.f32.mrf.mxu0
        %v2094 = vadd.f32 0.0, %v2093
        %v2095 = vpop.f32.mrf.mxu0
        %2096 = vmatprep.mubr.f32.mxu0 0.0
        %2097 = vmatmul.mubr.f32.gmra.mxu0 %v832
        %v2098 = vpop.f32.mrf.mxu0
        %v2099 = vadd.f32 0.0, %v2098
        %v2100 = vpop.f32.mrf.mxu0
        %2101 = vdwg.mxu0
        %v2102 = vadd.f32 %v1972, %v2064
        %v2103 = vadd.f32 %v1973, %v2069
        %v2104 = vadd.f32 %v1974, %v2074
        %v2105 = vadd.f32 %v1975, %v2079
        %v2106 = vadd.f32 %v1976, %v2084
        %v2107 = vadd.f32 %v1977, %v2089
        %v2108 = vadd.f32 %v1978, %v2094
        %v2109 = vadd.f32 %v1979, %v2099
        %s2110 = scalar_lea.vmem [#allocation7], 1024
        %v2111 = vld [vmem:[%s2110] sm:$0xff]
        %v2112 = vld [vmem:[%s2110 + $0x8] sm:$0xff]
        %v2113 = vld [vmem:[%s2110 + $0x10] sm:$0xff]
        %v2114 = vld [vmem:[%s2110 + $0x18] sm:$0xff]
        %v2115 = vld [vmem:[%s2110 + $0x20] sm:$0xff]
        %v2116 = vld [vmem:[%s2110 + $0x28] sm:$0xff]
        %v2117 = vld [vmem:[%s2110 + $0x30] sm:$0xff]
        %v2118 = vld [vmem:[%s2110 + $0x38] sm:$0xff]
        %v2119 = vld [vmem:[%s2110 + $0x40] sm:$0xff]
        %v2120 = vld [vmem:[%s2110 + $0x48] sm:$0xff]
        %v2121 = vld [vmem:[%s2110 + $0x50] sm:$0xff]
        %v2122 = vld [vmem:[%s2110 + $0x58] sm:$0xff]
        %v2123 = vld [vmem:[%s2110 + $0x60] sm:$0xff]
        %v2124 = vld [vmem:[%s2110 + $0x68] sm:$0xff]
        %v2125 = vld [vmem:[%s2110 + $0x70] sm:$0xff]
        %v2126 = vld [vmem:[%s2110 + $0x78] sm:$0xff]
        %2127 = vmatprep.subr.mxu0 0.0
        %2128 = vmatpush1.msra.mxu0 %v2126
        %2129 = vmatprep.subr.mxu0 0.0
        %2130 = vmatpush1.msra.mxu0 %v2125
        %2131 = vmatprep.subr.mxu0 0.0
        %2132 = vmatpush1.msra.mxu0 %v2124
        %2133 = vmatprep.subr.mxu0 0.0
        %2134 = vmatpush1.msra.mxu0 %v2123
        %2135 = vmatprep.subr.mxu0 0.0
        %2136 = vmatpush1.msra.mxu0 %v2122
        %2137 = vmatprep.subr.mxu0 0.0
        %2138 = vmatpush1.msra.mxu0 %v2121
        %2139 = vmatprep.subr.mxu0 0.0
        %2140 = vmatpush1.msra.mxu0 %v2120
        %2141 = vmatprep.subr.mxu0 0.0
        %2142 = vmatpush1.msra.mxu0 %v2119
        %2143 = vmatprep.subr.mxu0 0.0
        %2144 = vmatpush1.msra.mxu0 %v2118
        %2145 = vmatprep.subr.mxu0 0.0
        %2146 = vmatpush1.msra.mxu0 %v2117
        %2147 = vmatprep.subr.mxu0 0.0
        %2148 = vmatpush1.msra.mxu0 %v2116
        %2149 = vmatprep.subr.mxu0 0.0
        %2150 = vmatpush1.msra.mxu0 %v2115
        %2151 = vmatprep.subr.mxu0 0.0
        %2152 = vmatpush1.msra.mxu0 %v2114
        %2153 = vmatprep.subr.mxu0 0.0
        %2154 = vmatpush1.msra.mxu0 %v2113
        %2155 = vmatprep.subr.mxu0 0.0
        %2156 = vmatpush1.msra.mxu0 %v2112
        %2157 = vmatprep.subr.mxu0 0.0
        %2158 = vmatpush1.msra.mxu0 %v2111
        %2159 = vmatprep.subr.mxu0 0.0
        %2160 = vmatpush2.msra.mxu0 0.0
        %2161 = vmatprep.subr.mxu0 0.0
        %2162 = vmatpush2.msra.mxu0 0.0
        %2163 = vmatprep.subr.mxu0 0.0
        %2164 = vmatpush2.msra.mxu0 0.0
        %2165 = vmatprep.subr.mxu0 0.0
        %2166 = vmatpush2.msra.mxu0 0.0
        %2167 = vmatprep.subr.mxu0 0.0
        %2168 = vmatpush2.msra.mxu0 0.0
        %2169 = vmatprep.subr.mxu0 0.0
        %2170 = vmatpush2.msra.mxu0 0.0
        %2171 = vmatprep.subr.mxu0 0.0
        %2172 = vmatpush2.msra.mxu0 0.0
        %2173 = vmatprep.subr.mxu0 0.0
        %2174 = vmatpush2.msra.mxu0 0.0
        %2175 = vmatprep.subr.mxu0 0.0
        %2176 = vmatpush2.msra.mxu0 0.0
        %2177 = vmatprep.subr.mxu0 0.0
        %2178 = vmatpush2.msra.mxu0 0.0
        %2179 = vmatprep.subr.mxu0 0.0
        %2180 = vmatpush2.msra.mxu0 0.0
        %2181 = vmatprep.subr.mxu0 0.0
        %2182 = vmatpush2.msra.mxu0 0.0
        %2183 = vmatprep.subr.mxu0 0.0
        %2184 = vmatpush2.msra.mxu0 0.0
        %2185 = vmatprep.subr.mxu0 0.0
        %2186 = vmatpush2.msra.mxu0 0.0
        %2187 = vmatprep.subr.mxu0 0.0
        %2188 = vmatpush2.msra.mxu0 0.0
        %2189 = vmatprep.subr.mxu0 0.0
        %2190 = vmatpush2.msra.mxu0 0.0
        %2191 = vmatprep.mubr.f32.mxu0 0.0
        %2192 = vmatmul.mubr.f32.gmra.mxu0 %v1079
        %v2193 = vpop.f32.mrf.mxu0
        %v2194 = vadd.f32 0.0, %v2193
        %v2195 = vpop.f32.mrf.mxu0
        %2196 = vmatprep.mubr.f32.mxu0 0.0
        %2197 = vmatmul.mubr.f32.gmra.mxu0 %v1080
        %v2198 = vpop.f32.mrf.mxu0
        %v2199 = vadd.f32 0.0, %v2198
        %v2200 = vpop.f32.mrf.mxu0
        %2201 = vmatprep.mubr.f32.mxu0 0.0
        %2202 = vmatmul.mubr.f32.gmra.mxu0 %v1081
        %v2203 = vpop.f32.mrf.mxu0
        %v2204 = vadd.f32 0.0, %v2203
        %v2205 = vpop.f32.mrf.mxu0
        %2206 = vmatprep.mubr.f32.mxu0 0.0
        %2207 = vmatmul.mubr.f32.gmra.mxu0 %v1082
        %v2208 = vpop.f32.mrf.mxu0
        %v2209 = vadd.f32 0.0, %v2208
        %v2210 = vpop.f32.mrf.mxu0
        %2211 = vmatprep.mubr.f32.mxu0 0.0
        %2212 = vmatmul.mubr.f32.gmra.mxu0 %v1083
        %v2213 = vpop.f32.mrf.mxu0
        %v2214 = vadd.f32 0.0, %v2213
        %v2215 = vpop.f32.mrf.mxu0
        %2216 = vmatprep.mubr.f32.mxu0 0.0
        %2217 = vmatmul.mubr.f32.gmra.mxu0 %v1084
        %v2218 = vpop.f32.mrf.mxu0
        %v2219 = vadd.f32 0.0, %v2218
        %v2220 = vpop.f32.mrf.mxu0
        %2221 = vmatprep.mubr.f32.mxu0 0.0
        %2222 = vmatmul.mubr.f32.gmra.mxu0 %v1085
        %v2223 = vpop.f32.mrf.mxu0
        %v2224 = vadd.f32 0.0, %v2223
        %v2225 = vpop.f32.mrf.mxu0
        %2226 = vmatprep.mubr.f32.mxu0 0.0
        %2227 = vmatmul.mubr.f32.gmra.mxu0 %v1086
        %v2228 = vpop.f32.mrf.mxu0
        %v2229 = vadd.f32 0.0, %v2228
        %v2230 = vpop.f32.mrf.mxu0
        %2231 = vdwg.mxu0
        %v2232 = vadd.f32 %v2102, %v2194
        %v2233 = vadd.f32 %v2103, %v2199
        %v2234 = vadd.f32 %v2104, %v2204
        %v2235 = vadd.f32 %v2105, %v2209
        %v2236 = vadd.f32 %v2106, %v2214
        %v2237 = vadd.f32 %v2107, %v2219
        %v2238 = vadd.f32 %v2108, %v2224
        %v2239 = vadd.f32 %v2109, %v2229
        %v2240 = vld [vmem:[%s9] sm:$0x1]
        %v2242 = vlaneseq
        %v2243 = vshrl.u32 %v2242, 7
        %v2244 = vsub.s32 0, %v2243
        %v2245 = vrot.slane %v2240, %v2244
        %v2247 = vmul.f32 %v2232, %v2245
        %v2248 = vmul.f32 %v2233, %v2245
        %v2249 = vmul.f32 %v2234, %v2245
        %v2250 = vmul.f32 %v2235, %v2245
        %v2251 = vmul.f32 %v2236, %v2245
        %v2252 = vmul.f32 %v2237, %v2245
        %v2253 = vmul.f32 %v2238, %v2245
        %v2254 = vmul.f32 %v2239, %v2245
        %v2255 = vld [vmem:[%s10] sm:$0x1]
        %v2257 = vlaneseq
        %v2258 = vshrl.u32 %v2257, 7
        %v2259 = vsub.s32 0, %v2258
        %v2260 = vrot.slane %v2255, %v2259
        %v2262 = vadd.f32 %v2247, %v2260
        %v2263 = vadd.f32 %v2248, %v2260
        %v2264 = vadd.f32 %v2249, %v2260
        %v2265 = vadd.f32 %v2250, %v2260
        %v2266 = vadd.f32 %v2251, %v2260
        %v2267 = vadd.f32 %v2252, %v2260
        %v2268 = vadd.f32 %v2253, %v2260
        %v2269 = vadd.f32 %v2254, %v2260
        %v2270 = vmax.f32 %v2262, 0.0
        %v2271 = vmax.f32 %v2263, 0.0
        %v2272 = vmax.f32 %v2264, 0.0
        %v2273 = vmax.f32 %v2265, 0.0
        %v2274 = vmax.f32 %v2266, 0.0
        %v2275 = vmax.f32 %v2267, 0.0
        %v2276 = vmax.f32 %v2268, 0.0
        %v2277 = vmax.f32 %v2269, 0.0
        %v2278 = vld [vmem:[#allocation8] sm:$0xff]
        %v2279 = vld [vmem:[#allocation8 + $0x8] sm:$0xff]
        %v2280 = vld [vmem:[#allocation8 + $0x10] sm:$0xff]
        %v2281 = vld [vmem:[#allocation8 + $0x18] sm:$0xff]
        %v2282 = vld [vmem:[#allocation8 + $0x20] sm:$0xff]
        %v2283 = vld [vmem:[#allocation8 + $0x28] sm:$0xff]
        %v2284 = vld [vmem:[#allocation8 + $0x30] sm:$0xff]
        %v2285 = vld [vmem:[#allocation8 + $0x38] sm:$0xff]
        %v2286 = vld [vmem:[#allocation8 + $0x40] sm:$0xff]
        %v2287 = vld [vmem:[#allocation8 + $0x48] sm:$0xff]
        %v2288 = vld [vmem:[#allocation8 + $0x50] sm:$0xff]
        %v2289 = vld [vmem:[#allocation8 + $0x58] sm:$0xff]
        %v2290 = vld [vmem:[#allocation8 + $0x60] sm:$0xff]
        %v2291 = vld [vmem:[#allocation8 + $0x68] sm:$0xff]
        %v2292 = vld [vmem:[#allocation8 + $0x70] sm:$0xff]
        %v2293 = vld [vmem:[#allocation8 + $0x78] sm:$0xff]
        %2294 = vmatprep.subr.mxu0 0.0
        %2295 = vmatpush1.msra.mxu0 %v2293
        %2296 = vmatprep.subr.mxu0 0.0
        %2297 = vmatpush1.msra.mxu0 %v2292
        %2298 = vmatprep.subr.mxu0 0.0
        %2299 = vmatpush1.msra.mxu0 %v2291
        %2300 = vmatprep.subr.mxu0 0.0
        %2301 = vmatpush1.msra.mxu0 %v2290
        %2302 = vmatprep.subr.mxu0 0.0
        %2303 = vmatpush1.msra.mxu0 %v2289
        %2304 = vmatprep.subr.mxu0 0.0
        %2305 = vmatpush1.msra.mxu0 %v2288
        %2306 = vmatprep.subr.mxu0 0.0
        %2307 = vmatpush1.msra.mxu0 %v2287
        %2308 = vmatprep.subr.mxu0 0.0
        %2309 = vmatpush1.msra.mxu0 %v2286
        %2310 = vmatprep.subr.mxu0 0.0
        %2311 = vmatpush1.msra.mxu0 %v2285
        %2312 = vmatprep.subr.mxu0 0.0
        %2313 = vmatpush1.msra.mxu0 %v2284
        %2314 = vmatprep.subr.mxu0 0.0
        %2315 = vmatpush1.msra.mxu0 %v2283
        %2316 = vmatprep.subr.mxu0 0.0
        %2317 = vmatpush1.msra.mxu0 %v2282
        %2318 = vmatprep.subr.mxu0 0.0
        %2319 = vmatpush1.msra.mxu0 %v2281
        %2320 = vmatprep.subr.mxu0 0.0
        %2321 = vmatpush1.msra.mxu0 %v2280
        %2322 = vmatprep.subr.mxu0 0.0
        %2323 = vmatpush1.msra.mxu0 %v2279
        %2324 = vmatprep.subr.mxu0 0.0
        %2325 = vmatpush1.msra.mxu0 %v2278
        %2326 = vmatprep.subr.mxu0 0.0
        %2327 = vmatpush2.msra.mxu0 0.0
        %2328 = vmatprep.subr.mxu0 0.0
        %2329 = vmatpush2.msra.mxu0 0.0
        %2330 = vmatprep.subr.mxu0 0.0
        %2331 = vmatpush2.msra.mxu0 0.0
        %2332 = vmatprep.subr.mxu0 0.0
        %2333 = vmatpush2.msra.mxu0 0.0
        %2334 = vmatprep.subr.mxu0 0.0
        %2335 = vmatpush2.msra.mxu0 0.0
        %2336 = vmatprep.subr.mxu0 0.0
        %2337 = vmatpush2.msra.mxu0 0.0
        %2338 = vmatprep.subr.mxu0 0.0
        %2339 = vmatpush2.msra.mxu0 0.0
        %2340 = vmatprep.subr.mxu0 0.0
        %2341 = vmatpush2.msra.mxu0 0.0
        %2342 = vmatprep.subr.mxu0 0.0
        %2343 = vmatpush2.msra.mxu0 0.0
        %2344 = vmatprep.subr.mxu0 0.0
        %2345 = vmatpush2.msra.mxu0 0.0
        %2346 = vmatprep.subr.mxu0 0.0
        %2347 = vmatpush2.msra.mxu0 0.0
        %2348 = vmatprep.subr.mxu0 0.0
        %2349 = vmatpush2.msra.mxu0 0.0
        %2350 = vmatprep.subr.mxu0 0.0
        %2351 = vmatpush2.msra.mxu0 0.0
        %2352 = vmatprep.subr.mxu0 0.0
        %2353 = vmatpush2.msra.mxu0 0.0
        %2354 = vmatprep.subr.mxu0 0.0
        %2355 = vmatpush2.msra.mxu0 0.0
        %2356 = vmatprep.subr.mxu0 0.0
        %2357 = vmatpush2.msra.mxu0 0.0
        %2358 = vmatprep.mubr.f32.mxu0 0.0
        %2359 = vmatmul.mubr.f32.gmra.mxu0 %v2270
        %v2360 = vpop.f32.mrf.mxu0
        %v2361 = vadd.f32 0.0, %v2360
        %v2362 = vpop.f32.mrf.mxu0
        %2363 = vmatprep.mubr.f32.mxu0 0.0
        %2364 = vmatmul.mubr.f32.gmra.mxu0 %v2271
        %v2365 = vpop.f32.mrf.mxu0
        %v2366 = vadd.f32 0.0, %v2365
        %v2367 = vpop.f32.mrf.mxu0
        %2368 = vmatprep.mubr.f32.mxu0 0.0
        %2369 = vmatmul.mubr.f32.gmra.mxu0 %v2272
        %v2370 = vpop.f32.mrf.mxu0
        %v2371 = vadd.f32 0.0, %v2370
        %v2372 = vpop.f32.mrf.mxu0
        %2373 = vmatprep.mubr.f32.mxu0 0.0
        %2374 = vmatmul.mubr.f32.gmra.mxu0 %v2273
        %v2375 = vpop.f32.mrf.mxu0
        %v2376 = vadd.f32 0.0, %v2375
        %v2377 = vpop.f32.mrf.mxu0
        %2378 = vmatprep.mubr.f32.mxu0 0.0
        %2379 = vmatmul.mubr.f32.gmra.mxu0 %v2274
        %v2380 = vpop.f32.mrf.mxu0
        %v2381 = vadd.f32 0.0, %v2380
        %v2382 = vpop.f32.mrf.mxu0
        %2383 = vmatprep.mubr.f32.mxu0 0.0
        %2384 = vmatmul.mubr.f32.gmra.mxu0 %v2275
        %v2385 = vpop.f32.mrf.mxu0
        %v2386 = vadd.f32 0.0, %v2385
        %v2387 = vpop.f32.mrf.mxu0
        %2388 = vmatprep.mubr.f32.mxu0 0.0
        %2389 = vmatmul.mubr.f32.gmra.mxu0 %v2276
        %v2390 = vpop.f32.mrf.mxu0
        %v2391 = vadd.f32 0.0, %v2390
        %v2392 = vpop.f32.mrf.mxu0
        %2393 = vmatprep.mubr.f32.mxu0 0.0
        %2394 = vmatmul.mubr.f32.gmra.mxu0 %v2277
        %v2395 = vpop.f32.mrf.mxu0
        %v2396 = vadd.f32 0.0, %v2395
        %v2397 = vpop.f32.mrf.mxu0
        %2398 = vdwg.mxu0
        %v2399 = vld [vmem:[%s11] sm:$0x1]
        %v2401 = vlaneseq
        %v2402 = vshrl.u32 %v2401, 7
        %v2403 = vsub.s32 0, %v2402
        %v2404 = vrot.slane %v2399, %v2403
        %v2406 = vmul.f32 %v2361, %v2404
        %v2407 = vmul.f32 %v2366, %v2404
        %v2408 = vmul.f32 %v2371, %v2404
        %v2409 = vmul.f32 %v2376, %v2404
        %v2410 = vmul.f32 %v2381, %v2404
        %v2411 = vmul.f32 %v2386, %v2404
        %v2412 = vmul.f32 %v2391, %v2404
        %v2413 = vmul.f32 %v2396, %v2404
        %v2414 = vld [vmem:[%s12] sm:$0x1]
        %v2416 = vlaneseq
        %v2417 = vshrl.u32 %v2416, 7
        %v2418 = vsub.s32 0, %v2417
        %v2419 = vrot.slane %v2414, %v2418
        %v2421 = vadd.f32 %v2406, %v2419
        %v2422 = vadd.f32 %v2407, %v2419
        %v2423 = vadd.f32 %v2408, %v2419
        %v2424 = vadd.f32 %v2409, %v2419
        %v2425 = vadd.f32 %v2410, %v2419
        %v2426 = vadd.f32 %v2411, %v2419
        %v2427 = vadd.f32 %v2412, %v2419
        %v2428 = vadd.f32 %v2413, %v2419
        %v2429 = vadd.f32 %v2421, %v553
        %v2430 = vadd.f32 %v2422, %v554
        %v2431 = vadd.f32 %v2423, %v555
        %v2432 = vadd.f32 %v2424, %v556
        %v2433 = vadd.f32 %v2425, %v557
        %v2434 = vadd.f32 %v2426, %v558
        %v2435 = vadd.f32 %v2427, %v559
        %v2436 = vadd.f32 %v2428, %v560
        %v2437 = vmax.f32 %v2429, 0.0
        %v2438 = vmax.f32 %v2430, 0.0
        %v2439 = vmax.f32 %v2431, 0.0
        %v2440 = vmax.f32 %v2432, 0.0
        %v2441 = vmax.f32 %v2433, 0.0
        %v2442 = vmax.f32 %v2434, 0.0
        %v2443 = vmax.f32 %v2435, 0.0
        %v2444 = vmax.f32 %v2436, 0.0
        %2445 = vst [vmem:[%s550] sm:$0xff] %v2437
        %2446 = vst [vmem:[%s550 + $0x8] sm:$0xff] %v2438
        %2447 = vst [vmem:[%s550 + $0x10] sm:$0xff] %v2439
        %2448 = vst [vmem:[%s550 + $0x18] sm:$0xff] %v2440
        %2449 = vst [vmem:[%s550 + $0x20] sm:$0xff] %v2441
        %2450 = vst [vmem:[%s550 + $0x28] sm:$0xff] %v2442
        %2451 = vst [vmem:[%s550 + $0x30] sm:$0xff] %v2443
        %2452 = vst [vmem:[%s550 + $0x38] sm:$0xff] %v2444
        %s2453 = sand.u32 %s343, 1
        %s2454 = scalar_lea.sflag [#allocation4], %s2453
        %s2455 = sand.u32 %s343, 1
        %s2456 = smul.addr %s2455, 64
        %s2457 = scalar_lea.vmem [#allocation10], %s2456
        // Predicated region
        $region89: #{tpu_custom_call.1} parent=71 // pred_check
          %p2458 = pneg %p353
        $region90: #{tpu_custom_call.1} parent=71 // pred_check_branch
          %2460 = sbr.rel (%p2458) target = $region92
        $region91: #{tpu_custom_call.1} parent=71 // pred_region
          %s2461 = smul.u32 4, %s39
          %s2463 = ssub.s32 1024, 1024
          %2464 = vsyncadd %s2454, %s2463
          %s2465 = smul.addr %s2461, 2
          %s2466 = smul.addr %s38, 32
          %s2467 = sadd.s32 %s2465, %s2466
          %s2468 = smul.addr %s2467, 128
          %s2469 = scalar_lea.hbm %s13, %s2468
          %s2470 = sshll.u32 %s2457, 4
          %s2471 = int_to_ptr.vmem [resolvable:$true] %s2470
          %2476 = dma.vmem_to_hbm [thread:$0]  %s2471, 1024, %s2469, %s2454, 128, 128, 8
        $region92: #{tpu_custom_call.1} parent=71 // pred_fallthru
          _
      $region72: #{tpu_custom_call.1} parent=5 // pred_fallthru
        _
      %p2477 = scmp.le.s32.totalorder 2, %s29
      // Predicated region
      $region93: #{tpu_custom_call.1} parent=5 // pred_check
        %p2478 = pneg %p2477
      $region94: #{tpu_custom_call.1} parent=5 // pred_check_branch
        %2480 = sbr.rel (%p2478) target = $region96
      $region95: #{tpu_custom_call.1} parent=5 // pred_region
        %s2481 = ssub.s32 %s29, 2
        // Predicated region
        $region97: #{tpu_custom_call.1} parent=95 // pred_check
          %p2482 = pneg %p359
        $region98: #{tpu_custom_call.1} parent=95 // pred_check_branch
          %2484 = sbr.rel (%p2482) target = $region100
        $region99: #{tpu_custom_call.1} parent=95 // pred_region
          %s2485 = sand.u32 %s344, 1
          %s2486 = scalar_lea.sflag [#allocation4], %s2485
          %s2487 = sand.u32 %s344, 1
          %s2488 = smul.addr %s2487, 64
          %s2489 = scalar_lea.vmem [#allocation10], %s2488
          %2490 = dma.done %s2486, 1024
        $region100: #{tpu_custom_call.1} parent=95 // pred_fallthru
          _
      $region96: #{tpu_custom_call.1} parent=5 // pred_fallthru
        _
    $region6: #{tpu_custom_call.1} parent=1 // loop_footer
      %s33 = sadd.s32 1, %s29
    $region7: #{tpu_custom_call.1} parent=1 // loop_footer_branch
      %28 = sbr.rel target = $region3
    $region8: #{tpu_custom_call.1} parent=1 // loop_exit
      _
    %2491 = vsyncpa [#allocation3], 1
    %s2492 = scalar_lea.sflag [#allocation3], 1
    %2493 = vsyncpa %s2492, 1
    %2494 = vsyncpa [#allocation6], 1
    %s2495 = scalar_lea.sflag [#allocation6], 1
    %2496 = vsyncpa %s2495, 1
    %2497 = vsyncpa [#allocation9], 1
    %2498 = vsyncpa [#allocation4], 1
    %s2499 = scalar_lea.sflag [#allocation4], 1
    %2500 = vsyncpa %s2499, 1

</llo_original>
